<compile_context>
chip_gen: v7x
topology: tpu7x:2x2x1
jax: 0.10.0
libtpu: 0.0.40
codegen_flags: <defaults>
</compile_context>

<pallas_src>
import math
import functools

import jax
import jax.numpy as jnp
from jax.experimental import pallas as pl
from jax.experimental.pallas import tpu as pltpu


# --------------------------------------------------------------------------
# positional timing signal (host-side constant, matches get_timing_signal)
# --------------------------------------------------------------------------
def get_timing_signal_jax(length, channels, min_timescale=1.0, max_timescale=10000.0):
    position = jnp.arange(length, dtype=jnp.float32)
    num_timescales = channels // 2
    log_timescale_increment = (
        math.log(float(max_timescale) / float(min_timescale)) / (float(num_timescales) - 1)
    )
    inv_timescales = min_timescale * jnp.exp(
        jnp.arange(num_timescales, dtype=jnp.float32) * -log_timescale_increment
    )
    scaled_time = position[:, None] * inv_timescales[None, :]
    signal = jnp.concatenate([jnp.sin(scaled_time), jnp.cos(scaled_time)], axis=1)
    if channels % 2 == 1:
        signal = jnp.pad(signal, ((0, 0), (0, 1)))
    return signal  # (length, channels)


def _layernorm(x, g, b, eps=1e-5):
    mu = jnp.mean(x, axis=-1, keepdims=True)
    xc = x - mu
    var = jnp.mean(xc * xc, axis=-1, keepdims=True)
    return xc * jax.lax.rsqrt(var + eps) * g + b


# --------------------------------------------------------------------------
# Pallas kernel: one batch row per grid step
# --------------------------------------------------------------------------
def _encoder_block_kernel(conv_num, k, h,
                          x_ref, mask_ref, pos_ref,
                          ln_c_g_ref, ln_c_b_ref, w_dw_ref, w_pw_ref, b_pw_ref,
                          ln1_g_ref, ln1_b_ref,
                          w_qkv_ref, b_qkv_ref, w_out_ref, b_out_ref,
                          ln2_g_ref, ln2_b_ref,
                          w_f1_ref, b_f1_ref, w_f2_ref, b_f2_ref,
                          out_ref,
                          conv_buf, att_buf):
    f32 = jnp.float32
    bf16 = jnp.bfloat16
    L, C = x_ref.shape[1], x_ref.shape[2]
    d_k = C // h
    pad = k // 2

    # PosEncoder: x + timing signal (layout stays (L, C), lane-dense on C).
    out = x_ref[0] + pos_ref[...]                                    # (L, C) f32

    # zero the conv halo rows of the persistent scratch (once per grid step)
    if pad > 0:
        zhalo = jnp.zeros((pad, C), f32)
        conv_buf[0:pad, :] = zhalo
        conv_buf[pad + L:pad + L + pad, :] = zhalo

    # ---- conv blocks: LN -> depthwise conv -> pointwise conv + relu -> +res
    for i in range(conv_num):
        res = out
        o = _layernorm(out, ln_c_g_ref[i], ln_c_b_ref[i])            # f32
        conv_buf[pad:pad + L, :] = o                                 # write once
        w_dw_i = w_dw_ref[i]                                         # (k, C) f32
        acc = jnp.zeros((L, C), f32)
        for j in range(k):
            acc = acc + conv_buf[j:j + L, :] * w_dw_i[j:j + 1, :]    # VPU taps
        o = jnp.maximum(
            jnp.dot(acc.astype(bf16), w_pw_ref[i], preferred_element_type=f32)
            + b_pw_ref[i], 0.0)
        out = o + res

    # ---- self-attention block (fused QKV projection, scale folded into W_q)
    res = out
    o = _layernorm(out, ln1_g_ref[...], ln1_b_ref[...])
    qkv = jnp.dot(o.astype(bf16), w_qkv_ref[...],
                  preferred_element_type=f32) + b_qkv_ref[...]       # (L, 3C)
    q = qkv[:, :C]
    kk = qkv[:, C:2 * C]
    v = qkv[:, 2 * C:]

    # key mask bias computed once (hoisted out of the head loop)
    mask_bias = jnp.where(mask_ref[0] != 0.0, 0.0, -1e9)             # (1, L)

    # per-head attention; each head's context written into att_buf lane slice.
    # (static Python loop; per-head temporaries die at the scratch store)
    for hi in range(h):
        lo = hi * d_k
        qh = q[:, lo:lo + d_k].astype(bf16)
        kh = kk[:, lo:lo + d_k].astype(bf16)
        vh = v[:, lo:lo + d_k].astype(bf16)
        s = jax.lax.dot_general(qh, kh, (((1,), (1,)), ((), ())),
                                preferred_element_type=f32)          # (L, L)
        s = s + mask_bias
        s = s - jnp.max(s, axis=-1, keepdims=True)
        p = jnp.exp(s)
        p = p * pl.reciprocal(jnp.sum(p, axis=-1, keepdims=True), approx=True)
        att_buf[:, lo:lo + d_k] = jnp.dot(p.astype(bf16), vh,
                                          preferred_element_type=f32)

    # single full-C output projection (good MXU fill vs per-head d_k dots)
    att = jnp.dot(att_buf[...].astype(bf16), w_out_ref[...],
                  preferred_element_type=f32) + b_out_ref[...]
    out = att + res

    # ---- feed-forward block
    res = out
    o = _layernorm(out, ln2_g_ref[...], ln2_b_ref[...])
    o = jnp.maximum(
        jnp.dot(o.astype(bf16), w_f1_ref[...], preferred_element_type=f32)
        + b_f1_ref[...], 0.0)
    o = jnp.dot(o.astype(bf16), w_f2_ref[...], preferred_element_type=f32) + b_f2_ref[...]
    out_ref[0] = o + res


# --------------------------------------------------------------------------
# one-time parameter packing (hoisted out of the per-call path)
# --------------------------------------------------------------------------
def pack_encoder_block_params(params, *, conv_num, k, h, length, channels):
    f32, bf16 = jnp.float32, jnp.bfloat16
    C = channels
    d_k = C // h
    scale = 1.0 / math.sqrt(d_k)
    hp = jax.lax.Precision.HIGHEST

    pos = get_timing_signal_jax(length, C).astype(f32)               # (L, C)

    ln_c_g = jnp.stack([params[f"norm_C_{i}_gamma"] for i in range(conv_num)]).astype(f32)[:, None, :]
    ln_c_b = jnp.stack([params[f"norm_C_{i}_beta"] for i in range(conv_num)]).astype(f32)[:, None, :]
    w_dw = jnp.stack([params[f"dw_{i}_weight"][:, 0, :].T for i in range(conv_num)]).astype(f32)   # (n,k,C)
    w_pw = jnp.stack([params[f"pw_{i}_weight"][:, :, 0].T for i in range(conv_num)]).astype(bf16)  # (n,C,C)
    b_pw = jnp.stack([params[f"pw_{i}_bias"] for i in range(conv_num)]).astype(f32)[:, None, :]

    ln1_g = params["norm_1_gamma"].astype(f32)[None, :]
    ln1_b = params["norm_1_beta"].astype(f32)[None, :]

    # fuse mem_conv/query_conv with the per-stream linears (exact linear
    # composition, eval mode) and fold 1/sqrt(d_k) into the Q weight/bias.
    w_mem = params["mem_conv_weight"][:, :, 0].T.astype(f32)          # (C, 2C)
    w_qry = params["query_conv_weight"][:, :, 0].T.astype(f32)        # (C, C)
    w_l = [params[f"linear_{j}_weight"].T.astype(f32) for j in range(4)]
    b_l = [params[f"linear_{j}_bias"].astype(f32) for j in range(4)]
    w_q = jnp.dot(w_qry, w_l[0], precision=hp) * scale
    b_q = b_l[0] * scale
    w_k = jnp.dot(w_mem[:, :C], w_l[1], precision=hp)
    w_v = jnp.dot(w_mem[:, C:], w_l[2], precision=hp)
    w_qkv = jnp.concatenate([w_q, w_k, w_v], axis=1).astype(bf16)     # (C, 3C)
    b_qkv = jnp.concatenate([b_q, b_l[1], b_l[2]])[None, :].astype(f32)
    w_out = w_l[3].astype(bf16)                                       # (C, C)
    b_out = b_l[3][None, :].astype(f32)

    ln2_g = params["norm_2_gamma"].astype(f32)[None, :]
    ln2_b = params["norm_2_beta"].astype(f32)[None, :]
    w_f1 = params["ffn1_weight"][:, :, 0].T.astype(bf16)
    b_f1 = params["ffn1_bias"].astype(f32)[None, :]
    w_f2 = params["ffn2_weight"][:, :, 0].T.astype(bf16)
    b_f2 = params["ffn2_bias"].astype(f32)[None, :]

    return (pos, ln_c_g, ln_c_b, w_dw, w_pw, b_pw,
            ln1_g, ln1_b, w_qkv, b_qkv, w_out, b_out,
            ln2_g, ln2_b, w_f1, b_f1, w_f2, b_f2)


# --------------------------------------------------------------------------
# wrapper: pallas_call with batch-parallel grid
# --------------------------------------------------------------------------
def encoder_block_pallas(x, mask, packed, *, conv_num, k, h):
    """x: (B, L, C), mask: (B, L) -> (B, L, C). Eval-mode EncoderBlock forward."""
    assert k % 2 == 1, "kernel size must be odd (QANet uses k=7)"
    B, L, C = x.shape
    f32 = jnp.float32
    pad = k // 2

    mask_f = mask.astype(f32)[:, None, :]                             # (B, 1, L)
    args = (x.astype(f32), mask_f) + tuple(packed)

    def batch_spec(shape):
        nd = len(shape)
        return pl.BlockSpec((1,) + tuple(shape[1:]),
                            lambda b, _nd=nd: (b,) + (0,) * (_nd - 1))

    def full_spec(shape):
        nd = len(shape)
        return pl.BlockSpec(tuple(shape), lambda b, _nd=nd: (0,) * _nd)

    in_specs = ([batch_spec(x.shape), batch_spec(mask_f.shape)]
                + [full_spec(a.shape) for a in packed])

    kernel = functools.partial(_encoder_block_kernel, conv_num, k, h)

    return pl.pallas_call(
        kernel,
        out_shape=jax.ShapeDtypeStruct((B, L, C), f32),
        grid=(B,),
        in_specs=in_specs,
        out_specs=pl.BlockSpec((1, L, C), lambda b: (b, 0, 0)),
        scratch_shapes=[pltpu.VMEM((L + 2 * pad, C), jnp.float32),   # conv halo buf
                        pltpu.VMEM((L, C), jnp.float32)],            # att head buf
        compiler_params=pltpu.CompilerParams(
            dimension_semantics=("parallel",),
            vmem_limit_bytes=32 * 1024 * 1024),
    )(*args)


# --------------------------------------------------------------------------
# pure-JAX reference (eval-mode EncoderBlock semantics, f32 / unfused)
# --------------------------------------------------------------------------
def encoder_block_reference(x, mask, params, *, conv_num, k, h):
    B, L, C = x.shape
    d_k = C // h
    f32 = jnp.float32
    x = x.astype(f32)
    out = x + get_timing_signal_jax(L, C)[None]

    def ln(v, g, b):
        mu = jnp.mean(v, -1, keepdims=True)
        var = jnp.mean((v - mu) ** 2, -1, keepdims=True)
        return (v - mu) / jnp.sqrt(var + 1e-5) * g + b

    pad = k // 2
    for i in range(conv_num):
        res = out
        o = ln(out, params[f"norm_C_{i}_gamma"], params[f"norm_C_{i}_beta"])
        dw = params[f"dw_{i}_weight"][:, 0, :]                        # (C, k)
        op = jnp.pad(o, ((0, 0), (pad, pad), (0, 0)))
        conv = jnp.zeros_like(o)
        for j in range(k):
            conv = conv + op[:, j:j + L, :] * dw[:, j][None, None, :]
        pw = params[f"pw_{i}_weight"][:, :, 0]
        o = jax.nn.relu(conv @ pw.T + params[f"pw_{i}_bias"])
        out = o + res

    res = out
    o = ln(out, params["norm_1_gamma"], params["norm_1_beta"])
    mem = o @ params["mem_conv_weight"][:, :, 0].T
    qry = o @ params["query_conv_weight"][:, :, 0].T
    key_in, val_in = mem[..., :C], mem[..., C:]
    q = qry @ params["linear_0_weight"].T + params["linear_0_bias"]
    kk = key_in @ params["linear_1_weight"].T + params["linear_1_bias"]
    v = val_in @ params["linear_2_weight"].T + params["linear_2_bias"]

    def split_heads(t):
        return t.reshape(B, L, h, d_k).transpose(0, 2, 1, 3)

    q4, k4, v4 = split_heads(q), split_heads(kk), split_heads(v)
    scores = jnp.einsum("bhld,bhmd->bhlm", q4, k4) / math.sqrt(d_k)
    m = mask.astype(f32)[:, None, None, :]
    scores = jnp.where(m != 0.0, scores, -1e9)
    p = jax.nn.softmax(scores, axis=-1)
    att = jnp.einsum("bhlm,bhmd->bhld", p, v4)
    att = att.transpose(0, 2, 1, 3).reshape(B, L, C)
    att = att @ params["linear_3_weight"].T + params["linear_3_bias"]
    out = att + res

    res = out
    o = ln(out, params["norm_2_gamma"], params["norm_2_beta"])
    o = jax.nn.relu(o @ params["ffn1_weight"][:, :, 0].T + params["ffn1_bias"])
    o = o @ params["ffn2_weight"][:, :, 0].T + params["ffn2_bias"]
    return o + res


# --------------------------------------------------------------------------
if __name__ == "__main__":
    B, L, C = 2, 16, 32          # batch, seq, channels (d_model % heads == 0)
    conv_num, k, h = 2, 7, 8

    key = jax.random.PRNGKey(0)
    ks = iter(jax.random.split(key, 64))

    def init(shape, scale=0.1):
        return (scale * jax.random.normal(next(ks), shape)).astype(jnp.float32)

    params = {}
    for i in range(conv_num):
        params[f"norm_C_{i}_gamma"] = init((C,))
        params[f"norm_C_{i}_beta"] = init((C,))
        params[f"dw_{i}_weight"] = init((C, 1, k))          # depthwise Conv1d weight
        params[f"pw_{i}_weight"] = init((C, C, 1))          # pointwise Conv1d weight
        params[f"pw_{i}_bias"] = init((C,))
    params["norm_1_gamma"] = init((C,))
    params["norm_1_beta"] = init((C,))
    params["mem_conv_weight"] = init((2 * C, C, 1))
    params["query_conv_weight"] = init((C, C, 1))
    for j in range(4):
        params[f"linear_{j}_weight"] = init((C, C))
        params[f"linear_{j}_bias"] = init((C,))
    params["norm_2_gamma"] = init((C,))
    params["norm_2_beta"] = init((C,))
    params["ffn1_weight"] = init((C, C, 1))
    params["ffn1_bias"] = init((C,))
    params["ffn2_weight"] = init((C, C, 1))
    params["ffn2_bias"] = init((C,))

    x = jax.random.normal(next(ks), (B, L, C), jnp.float32)
    lengths = jnp.array([L, 11], jnp.int32)
    mask = jnp.arange(L)[None, :] < lengths[:, None]        # (B, L) bool

    packed = pack_encoder_block_params(params, conv_num=conv_num, k=k, h=h,
                                       length=L, channels=C)

    out = encoder_block_pallas(x, mask, packed, conv_num=conv_num, k=k, h=h)
    jax.block_until_ready(out)

    ref = encoder_block_reference(x, mask, params, conv_num=conv_num, k=k, h=h)
    assert out.shape == (B, L, C)
    # bf16 MXU inputs -> slightly looser tolerance than a pure-f32 path
    assert jnp.allclose(out, ref, atol=2e-2, rtol=2e-2), (
        "mismatch, max abs diff = %e" % float(jnp.max(jnp.abs(out - ref))))

    print("KERNEL_OK")
</pallas_src>

<mosaic_0001>
module attributes {stable_mosaic.version = 11 : i64} {
  func.func @_encoder_block_kernel(%arg0: i32, %arg1: memref<1x16x32xf32, #tpu.memory_space<vmem>>, %arg2: memref<1x1x16xf32, #tpu.memory_space<vmem>>, %arg3: memref<16x32xf32, #tpu.memory_space<vmem>>, %arg4: memref<2x1x32xf32, #tpu.memory_space<vmem>>, %arg5: memref<2x1x32xf32, #tpu.memory_space<vmem>>, %arg6: memref<2x7x32xf32, #tpu.memory_space<vmem>>, %arg7: memref<2x32x32xbf16, #tpu.memory_space<vmem>>, %arg8: memref<2x1x32xf32, #tpu.memory_space<vmem>>, %arg9: memref<1x32xf32, #tpu.memory_space<vmem>>, %arg10: memref<1x32xf32, #tpu.memory_space<vmem>>, %arg11: memref<32x96xbf16, #tpu.memory_space<vmem>>, %arg12: memref<1x96xf32, #tpu.memory_space<vmem>>, %arg13: memref<32x32xbf16, #tpu.memory_space<vmem>>, %arg14: memref<1x32xf32, #tpu.memory_space<vmem>>, %arg15: memref<1x32xf32, #tpu.memory_space<vmem>>, %arg16: memref<1x32xf32, #tpu.memory_space<vmem>>, %arg17: memref<32x32xbf16, #tpu.memory_space<vmem>>, %arg18: memref<1x32xf32, #tpu.memory_space<vmem>>, %arg19: memref<32x32xbf16, #tpu.memory_space<vmem>>, %arg20: memref<1x32xf32, #tpu.memory_space<vmem>>, %arg21: memref<1x16x32xf32, #tpu.memory_space<vmem>>, %arg22: memref<22x32xf32, #tpu.memory_space<vmem>>, %arg23: memref<16x32xf32, #tpu.memory_space<vmem>>) attributes {dimension_semantics = [#tpu.dimension_semantics<parallel>], iteration_bounds = array<i64: 2>, scalar_prefetch = 0 : i64, scratch_operands = 2 : i64, tpu.core_type = #tpu.core_type<tc>, window_params = [{transform_indices = @transform_0, window_bounds = array<i64: 1, 16, 32>}, {transform_indices = @transform_1, window_bounds = array<i64: 1, 1, 16>}, {pipeline_mode = #tpu.pipeline_mode<synchronous>, transform_indices = @transform_2, window_bounds = array<i64: 16, 32>}, {pipeline_mode = #tpu.pipeline_mode<synchronous>, transform_indices = @transform_3, window_bounds = array<i64: 2, 1, 32>}, {pipeline_mode = #tpu.pipeline_mode<synchronous>, transform_indices = @transform_4, window_bounds = array<i64: 2, 1, 32>}, {pipeline_mode = #tpu.pipeline_mode<synchronous>, transform_indices = @transform_5, window_bounds = array<i64: 2, 7, 32>}, {pipeline_mode = #tpu.pipeline_mode<synchronous>, transform_indices = @transform_6, window_bounds = array<i64: 2, 32, 32>}, {pipeline_mode = #tpu.pipeline_mode<synchronous>, transform_indices = @transform_7, window_bounds = array<i64: 2, 1, 32>}, {pipeline_mode = #tpu.pipeline_mode<synchronous>, transform_indices = @transform_8, window_bounds = array<i64: 1, 32>}, {pipeline_mode = #tpu.pipeline_mode<synchronous>, transform_indices = @transform_9, window_bounds = array<i64: 1, 32>}, {pipeline_mode = #tpu.pipeline_mode<synchronous>, transform_indices = @transform_10, window_bounds = array<i64: 32, 96>}, {pipeline_mode = #tpu.pipeline_mode<synchronous>, transform_indices = @transform_11, window_bounds = array<i64: 1, 96>}, {pipeline_mode = #tpu.pipeline_mode<synchronous>, transform_indices = @transform_12, window_bounds = array<i64: 32, 32>}, {pipeline_mode = #tpu.pipeline_mode<synchronous>, transform_indices = @transform_13, window_bounds = array<i64: 1, 32>}, {pipeline_mode = #tpu.pipeline_mode<synchronous>, transform_indices = @transform_14, window_bounds = array<i64: 1, 32>}, {pipeline_mode = #tpu.pipeline_mode<synchronous>, transform_indices = @transform_15, window_bounds = array<i64: 1, 32>}, {pipeline_mode = #tpu.pipeline_mode<synchronous>, transform_indices = @transform_16, window_bounds = array<i64: 32, 32>}, {pipeline_mode = #tpu.pipeline_mode<synchronous>, transform_indices = @transform_17, window_bounds = array<i64: 1, 32>}, {pipeline_mode = #tpu.pipeline_mode<synchronous>, transform_indices = @transform_18, window_bounds = array<i64: 32, 32>}, {pipeline_mode = #tpu.pipeline_mode<synchronous>, transform_indices = @transform_19, window_bounds = array<i64: 1, 32>}, {transform_indices = @transform_20, window_bounds = array<i64: 1, 16, 32>}]} {
    %c0 = arith.constant 0 : index
    %c0_0 = arith.constant 0 : index
    %c0_1 = arith.constant 0 : index
    %0 = vector.load %arg1[%c0, %c0_0, %c0_1] : memref<1x16x32xf32, #tpu.memory_space<vmem>>, vector<1x16x32xf32>
    %1 = vector.shape_cast %0 : vector<1x16x32xf32> to vector<16x32xf32>
    %c0_2 = arith.constant 0 : index
    %c0_3 = arith.constant 0 : index
    %2 = vector.load %arg3[%c0_2, %c0_3] : memref<16x32xf32, #tpu.memory_space<vmem>>, vector<16x32xf32>
    %3 = arith.addf %1, %2 : vector<16x32xf32>
    %cst = arith.constant 0.000000e+00 : f32
    %4 = vector.broadcast %cst : f32 to vector<3x32xf32>
    %c0_4 = arith.constant 0 : index
    %c0_5 = arith.constant 0 : index
    %5 = vector.load %arg22[%c0_4, %c0_5] : memref<22x32xf32, #tpu.memory_space<vmem>>, vector<3x32xf32>
    tpu.vector_store %arg22[%c0_4, %c0_5], %4 {strides = array<i32>} : memref<22x32xf32, #tpu.memory_space<vmem>>, vector<3x32xf32>,
    %c19 = arith.constant 19 : index
    %c0_6 = arith.constant 0 : index
    %6 = vector.load %arg22[%c19, %c0_6] : memref<22x32xf32, #tpu.memory_space<vmem>>, vector<3x32xf32>
    tpu.vector_store %arg22[%c19, %c0_6], %4 {strides = array<i32>} : memref<22x32xf32, #tpu.memory_space<vmem>>, vector<3x32xf32>,
    %c0_7 = arith.constant 0 : index
    %c0_8 = arith.constant 0 : index
    %c0_9 = arith.constant 0 : index
    %7 = vector.load %arg4[%c0_7, %c0_8, %c0_9] : memref<2x1x32xf32, #tpu.memory_space<vmem>>, vector<1x1x32xf32>
    %8 = vector.shape_cast %7 : vector<1x1x32xf32> to vector<1x32xf32>
    %c0_10 = arith.constant 0 : index
    %c0_11 = arith.constant 0 : index
    %c0_12 = arith.constant 0 : index
    %9 = vector.load %arg5[%c0_10, %c0_11, %c0_12] : memref<2x1x32xf32, #tpu.memory_space<vmem>>, vector<1x1x32xf32>
    %10 = vector.shape_cast %9 : vector<1x1x32xf32> to vector<1x32xf32>
    %cst_13 = arith.constant dense<0.000000e+00> : vector<16xf32>
    %11 = vector.multi_reduction <add>, %3, %cst_13 [1] : vector<16x32xf32> to vector<16xf32>
    %12 = vector.shape_cast %11 : vector<16xf32> to vector<16x1xf32>
    %cst_14 = arith.constant 3.200000e+01 : f32
    %13 = vector.broadcast %cst_14 : f32 to vector<16x1xf32>
    %14 = arith.divf %12, %13 : vector<16x1xf32>
    %15 = vector.broadcast %14 : vector<16x1xf32> to vector<16x32xf32>
    %16 = arith.subf %3, %15 : vector<16x32xf32>
    %17 = arith.mulf %16, %16 : vector<16x32xf32>
    %cst_15 = arith.constant dense<0.000000e+00> : vector<16xf32>
    %18 = vector.multi_reduction <add>, %17, %cst_15 [1] : vector<16x32xf32> to vector<16xf32>
    %19 = vector.shape_cast %18 : vector<16xf32> to vector<16x1xf32>
    %cst_16 = arith.constant 3.200000e+01 : f32
    %20 = vector.broadcast %cst_16 : f32 to vector<16x1xf32>
    %21 = arith.divf %19, %20 : vector<16x1xf32>
    %cst_17 = arith.constant 9.99999974E-6 : f32
    %22 = vector.broadcast %cst_17 : f32 to vector<16x1xf32>
    %23 = arith.addf %21, %22 : vector<16x1xf32>
    %24 = math.rsqrt %23 : vector<16x1xf32>
    %25 = vector.broadcast %24 : vector<16x1xf32> to vector<16x32xf32>
    %26 = arith.mulf %16, %25 : vector<16x32xf32>
    %27 = vector.broadcast %8 : vector<1x32xf32> to vector<16x32xf32>
    %28 = arith.mulf %26, %27 : vector<16x32xf32>
    %29 = vector.broadcast %10 : vector<1x32xf32> to vector<16x32xf32>
    %30 = arith.addf %28, %29 : vector<16x32xf32>
    %c3 = arith.constant 3 : index
    %c0_18 = arith.constant 0 : index
    %31 = vector.load %arg22[%c3, %c0_18] : memref<22x32xf32, #tpu.memory_space<vmem>>, vector<16x32xf32>
    tpu.vector_store %arg22[%c3, %c0_18], %30 {strides = array<i32>} : memref<22x32xf32, #tpu.memory_space<vmem>>, vector<16x32xf32>,
    %c0_19 = arith.constant 0 : index
    %c0_20 = arith.constant 0 : index
    %c0_21 = arith.constant 0 : index
    %32 = vector.load %arg6[%c0_19, %c0_20, %c0_21] : memref<2x7x32xf32, #tpu.memory_space<vmem>>, vector<1x7x32xf32>
    %33 = vector.shape_cast %32 : vector<1x7x32xf32> to vector<7x32xf32>
    %cst_22 = arith.constant 0.000000e+00 : f32
    %34 = vector.broadcast %cst_22 : f32 to vector<16x32xf32>
    %c0_23 = arith.constant 0 : index
    %c0_24 = arith.constant 0 : index
    %35 = vector.load %arg22[%c0_23, %c0_24] : memref<22x32xf32, #tpu.memory_space<vmem>>, vector<16x32xf32>
    %36 = vector.extract_strided_slice %33 {offsets = [0, 0], sizes = [1, 32], strides = [1, 1]} : vector<7x32xf32> to vector<1x32xf32>
    %37 = vector.broadcast %36 : vector<1x32xf32> to vector<16x32xf32>
    %38 = arith.mulf %35, %37 : vector<16x32xf32>
    %39 = arith.addf %34, %38 : vector<16x32xf32>
    %c1 = arith.constant 1 : index
    %c0_25 = arith.constant 0 : index
    %40 = vector.load %arg22[%c1, %c0_25] : memref<22x32xf32, #tpu.memory_space<vmem>>, vector<16x32xf32>
    %41 = vector.extract_strided_slice %33 {offsets = [1, 0], sizes = [1, 32], strides = [1, 1]} : vector<7x32xf32> to vector<1x32xf32>
    %42 = vector.broadcast %41 : vector<1x32xf32> to vector<16x32xf32>
    %43 = arith.mulf %40, %42 : vector<16x32xf32>
    %44 = arith.addf %39, %43 : vector<16x32xf32>
    %c2 = arith.constant 2 : index
    %c0_26 = arith.constant 0 : index
    %45 = vector.load %arg22[%c2, %c0_26] : memref<22x32xf32, #tpu.memory_space<vmem>>, vector<16x32xf32>
    %46 = vector.extract_strided_slice %33 {offsets = [2, 0], sizes = [1, 32], strides = [1, 1]} : vector<7x32xf32> to vector<1x32xf32>
    %47 = vector.broadcast %46 : vector<1x32xf32> to vector<16x32xf32>
    %48 = arith.mulf %45, %47 : vector<16x32xf32>
    %49 = arith.addf %44, %48 : vector<16x32xf32>
    %c3_27 = arith.constant 3 : index
    %c0_28 = arith.constant 0 : index
    %50 = vector.load %arg22[%c3_27, %c0_28] : memref<22x32xf32, #tpu.memory_space<vmem>>, vector<16x32xf32>
    %51 = vector.extract_strided_slice %33 {offsets = [3, 0], sizes = [1, 32], strides = [1, 1]} : vector<7x32xf32> to vector<1x32xf32>
    %52 = vector.broadcast %51 : vector<1x32xf32> to vector<16x32xf32>
    %53 = arith.mulf %50, %52 : vector<16x32xf32>
    %54 = arith.addf %49, %53 : vector<16x32xf32>
    %c4 = arith.constant 4 : index
    %c0_29 = arith.constant 0 : index
    %55 = vector.load %arg22[%c4, %c0_29] : memref<22x32xf32, #tpu.memory_space<vmem>>, vector<16x32xf32>
    %56 = vector.extract_strided_slice %33 {offsets = [4, 0], sizes = [1, 32], strides = [1, 1]} : vector<7x32xf32> to vector<1x32xf32>
    %57 = vector.broadcast %56 : vector<1x32xf32> to vector<16x32xf32>
    %58 = arith.mulf %55, %57 : vector<16x32xf32>
    %59 = arith.addf %54, %58 : vector<16x32xf32>
    %c5 = arith.constant 5 : index
    %c0_30 = arith.constant 0 : index
    %60 = vector.load %arg22[%c5, %c0_30] : memref<22x32xf32, #tpu.memory_space<vmem>>, vector<16x32xf32>
    %61 = vector.extract_strided_slice %33 {offsets = [5, 0], sizes = [1, 32], strides = [1, 1]} : vector<7x32xf32> to vector<1x32xf32>
    %62 = vector.broadcast %61 : vector<1x32xf32> to vector<16x32xf32>
    %63 = arith.mulf %60, %62 : vector<16x32xf32>
    %64 = arith.addf %59, %63 : vector<16x32xf32>
    %c6 = arith.constant 6 : index
    %c0_31 = arith.constant 0 : index
    %65 = vector.load %arg22[%c6, %c0_31] : memref<22x32xf32, #tpu.memory_space<vmem>>, vector<16x32xf32>
    %66 = vector.extract_strided_slice %33 {offsets = [6, 0], sizes = [1, 32], strides = [1, 1]} : vector<7x32xf32> to vector<1x32xf32>
    %67 = vector.broadcast %66 : vector<1x32xf32> to vector<16x32xf32>
    %68 = arith.mulf %65, %67 : vector<16x32xf32>
    %69 = arith.addf %64, %68 : vector<16x32xf32>
    %70 = arith.truncf %69 : vector<16x32xf32> to vector<16x32xbf16>
    %c0_32 = arith.constant 0 : index
    %c0_33 = arith.constant 0 : index
    %c0_34 = arith.constant 0 : index
    %71 = vector.load %arg7[%c0_32, %c0_33, %c0_34] : memref<2x32x32xbf16, #tpu.memory_space<vmem>>, vector<1x32x32xbf16>
    %72 = vector.shape_cast %71 : vector<1x32x32xbf16> to vector<32x32xbf16>
    %cst_35 = arith.constant dense<0.000000e+00> : vector<16x32xf32>
    %73 = tpu.matmul %70, %72, %cst_35 {dimension_numbers = #tpu.dot_dimension_numbers<[1], [0], [0], [1], [0, 0, 1, 1], [], []>} : vector<16x32xbf16>, vector<32x32xbf16>, vector<16x32xf32> -> vector<16x32xf32>
    %c0_36 = arith.constant 0 : index
    %c0_37 = arith.constant 0 : index
    %c0_38 = arith.constant 0 : index
    %74 = vector.load %arg8[%c0_36, %c0_37, %c0_38] : memref<2x1x32xf32, #tpu.memory_space<vmem>>, vector<1x1x32xf32>
    %75 = vector.shape_cast %74 : vector<1x1x32xf32> to vector<1x32xf32>
    %76 = vector.broadcast %75 : vector<1x32xf32> to vector<16x32xf32>
    %77 = arith.addf %73, %76 : vector<16x32xf32>
    %cst_39 = arith.constant 0.000000e+00 : f32
    %78 = vector.broadcast %cst_39 : f32 to vector<16x32xf32>
    %79 = arith.maximumf %77, %78 : vector<16x32xf32>
    %80 = arith.addf %79, %3 : vector<16x32xf32>
    %c1_40 = arith.constant 1 : index
    %c0_41 = arith.constant 0 : index
    %c0_42 = arith.constant 0 : index
    %81 = vector.load %arg4[%c1_40, %c0_41, %c0_42] : memref<2x1x32xf32, #tpu.memory_space<vmem>>, vector<1x1x32xf32>
    %82 = vector.shape_cast %81 : vector<1x1x32xf32> to vector<1x32xf32>
    %c1_43 = arith.constant 1 : index
    %c0_44 = arith.constant 0 : index
    %c0_45 = arith.constant 0 : index
    %83 = vector.load %arg5[%c1_43, %c0_44, %c0_45] : memref<2x1x32xf32, #tpu.memory_space<vmem>>, vector<1x1x32xf32>
    %84 = vector.shape_cast %83 : vector<1x1x32xf32> to vector<1x32xf32>
    %cst_46 = arith.constant dense<0.000000e+00> : vector<16xf32>
    %85 = vector.multi_reduction <add>, %80, %cst_46 [1] : vector<16x32xf32> to vector<16xf32>
    %86 = vector.shape_cast %85 : vector<16xf32> to vector<16x1xf32>
    %cst_47 = arith.constant 3.200000e+01 : f32
    %87 = vector.broadcast %cst_47 : f32 to vector<16x1xf32>
    %88 = arith.divf %86, %87 : vector<16x1xf32>
    %89 = vector.broadcast %88 : vector<16x1xf32> to vector<16x32xf32>
    %90 = arith.subf %80, %89 : vector<16x32xf32>
    %91 = arith.mulf %90, %90 : vector<16x32xf32>
    %cst_48 = arith.constant dense<0.000000e+00> : vector<16xf32>
    %92 = vector.multi_reduction <add>, %91, %cst_48 [1] : vector<16x32xf32> to vector<16xf32>
    %93 = vector.shape_cast %92 : vector<16xf32> to vector<16x1xf32>
    %cst_49 = arith.constant 3.200000e+01 : f32
    %94 = vector.broadcast %cst_49 : f32 to vector<16x1xf32>
    %95 = arith.divf %93, %94 : vector<16x1xf32>
    %cst_50 = arith.constant 9.99999974E-6 : f32
    %96 = vector.broadcast %cst_50 : f32 to vector<16x1xf32>
    %97 = arith.addf %95, %96 : vector<16x1xf32>
    %98 = math.rsqrt %97 : vector<16x1xf32>
    %99 = vector.broadcast %98 : vector<16x1xf32> to vector<16x32xf32>
    %100 = arith.mulf %90, %99 : vector<16x32xf32>
    %101 = vector.broadcast %82 : vector<1x32xf32> to vector<16x32xf32>
    %102 = arith.mulf %100, %101 : vector<16x32xf32>
    %103 = vector.broadcast %84 : vector<1x32xf32> to vector<16x32xf32>
    %104 = arith.addf %102, %103 : vector<16x32xf32>
    %c3_51 = arith.constant 3 : index
    %c0_52 = arith.constant 0 : index
    %105 = vector.load %arg22[%c3_51, %c0_52] : memref<22x32xf32, #tpu.memory_space<vmem>>, vector<16x32xf32>
    tpu.vector_store %arg22[%c3_51, %c0_52], %104 {strides = array<i32>} : memref<22x32xf32, #tpu.memory_space<vmem>>, vector<16x32xf32>,
    %c1_53 = arith.constant 1 : index
    %c0_54 = arith.constant 0 : index
    %c0_55 = arith.constant 0 : index
    %106 = vector.load %arg6[%c1_53, %c0_54, %c0_55] : memref<2x7x32xf32, #tpu.memory_space<vmem>>, vector<1x7x32xf32>
    %107 = vector.shape_cast %106 : vector<1x7x32xf32> to vector<7x32xf32>
    %cst_56 = arith.constant 0.000000e+00 : f32
    %108 = vector.broadcast %cst_56 : f32 to vector<16x32xf32>
    %c0_57 = arith.constant 0 : index
    %c0_58 = arith.constant 0 : index
    %109 = vector.load %arg22[%c0_57, %c0_58] : memref<22x32xf32, #tpu.memory_space<vmem>>, vector<16x32xf32>
    %110 = vector.extract_strided_slice %107 {offsets = [0, 0], sizes = [1, 32], strides = [1, 1]} : vector<7x32xf32> to vector<1x32xf32>
    %111 = vector.broadcast %110 : vector<1x32xf32> to vector<16x32xf32>
    %112 = arith.mulf %109, %111 : vector<16x32xf32>
    %113 = arith.addf %108, %112 : vector<16x32xf32>
    %c1_59 = arith.constant 1 : index
    %c0_60 = arith.constant 0 : index
    %114 = vector.load %arg22[%c1_59, %c0_60] : memref<22x32xf32, #tpu.memory_space<vmem>>, vector<16x32xf32>
    %115 = vector.extract_strided_slice %107 {offsets = [1, 0], sizes = [1, 32], strides = [1, 1]} : vector<7x32xf32> to vector<1x32xf32>
    %116 = vector.broadcast %115 : vector<1x32xf32> to vector<16x32xf32>
    %117 = arith.mulf %114, %116 : vector<16x32xf32>
    %118 = arith.addf %113, %117 : vector<16x32xf32>
    %c2_61 = arith.constant 2 : index
    %c0_62 = arith.constant 0 : index
    %119 = vector.load %arg22[%c2_61, %c0_62] : memref<22x32xf32, #tpu.memory_space<vmem>>, vector<16x32xf32>
    %120 = vector.extract_strided_slice %107 {offsets = [2, 0], sizes = [1, 32], strides = [1, 1]} : vector<7x32xf32> to vector<1x32xf32>
    %121 = vector.broadcast %120 : vector<1x32xf32> to vector<16x32xf32>
    %122 = arith.mulf %119, %121 : vector<16x32xf32>
    %123 = arith.addf %118, %122 : vector<16x32xf32>
    %c3_63 = arith.constant 3 : index
    %c0_64 = arith.constant 0 : index
    %124 = vector.load %arg22[%c3_63, %c0_64] : memref<22x32xf32, #tpu.memory_space<vmem>>, vector<16x32xf32>
    %125 = vector.extract_strided_slice %107 {offsets = [3, 0], sizes = [1, 32], strides = [1, 1]} : vector<7x32xf32> to vector<1x32xf32>
    %126 = vector.broadcast %125 : vector<1x32xf32> to vector<16x32xf32>
    %127 = arith.mulf %124, %126 : vector<16x32xf32>
    %128 = arith.addf %123, %127 : vector<16x32xf32>
    %c4_65 = arith.constant 4 : index
    %c0_66 = arith.constant 0 : index
    %129 = vector.load %arg22[%c4_65, %c0_66] : memref<22x32xf32, #tpu.memory_space<vmem>>, vector<16x32xf32>
    %130 = vector.extract_strided_slice %107 {offsets = [4, 0], sizes = [1, 32], strides = [1, 1]} : vector<7x32xf32> to vector<1x32xf32>
    %131 = vector.broadcast %130 : vector<1x32xf32> to vector<16x32xf32>
    %132 = arith.mulf %129, %131 : vector<16x32xf32>
    %133 = arith.addf %128, %132 : vector<16x32xf32>
    %c5_67 = arith.constant 5 : index
    %c0_68 = arith.constant 0 : index
    %134 = vector.load %arg22[%c5_67, %c0_68] : memref<22x32xf32, #tpu.memory_space<vmem>>, vector<16x32xf32>
    %135 = vector.extract_strided_slice %107 {offsets = [5, 0], sizes = [1, 32], strides = [1, 1]} : vector<7x32xf32> to vector<1x32xf32>
    %136 = vector.broadcast %135 : vector<1x32xf32> to vector<16x32xf32>
    %137 = arith.mulf %134, %136 : vector<16x32xf32>
    %138 = arith.addf %133, %137 : vector<16x32xf32>
    %c6_69 = arith.constant 6 : index
    %c0_70 = arith.constant 0 : index
    %139 = vector.load %arg22[%c6_69, %c0_70] : memref<22x32xf32, #tpu.memory_space<vmem>>, vector<16x32xf32>
    %140 = vector.extract_strided_slice %107 {offsets = [6, 0], sizes = [1, 32], strides = [1, 1]} : vector<7x32xf32> to vector<1x32xf32>
    %141 = vector.broadcast %140 : vector<1x32xf32> to vector<16x32xf32>
    %142 = arith.mulf %139, %141 : vector<16x32xf32>
    %143 = arith.addf %138, %142 : vector<16x32xf32>
    %144 = arith.truncf %143 : vector<16x32xf32> to vector<16x32xbf16>
    %c1_71 = arith.constant 1 : index
    %c0_72 = arith.constant 0 : index
    %c0_73 = arith.constant 0 : index
    %145 = vector.load %arg7[%c1_71, %c0_72, %c0_73] : memref<2x32x32xbf16, #tpu.memory_space<vmem>>, vector<1x32x32xbf16>
    %146 = vector.shape_cast %145 : vector<1x32x32xbf16> to vector<32x32xbf16>
    %cst_74 = arith.constant dense<0.000000e+00> : vector<16x32xf32>
    %147 = tpu.matmul %144, %146, %cst_74 {dimension_numbers = #tpu.dot_dimension_numbers<[1], [0], [0], [1], [0, 0, 1, 1], [], []>} : vector<16x32xbf16>, vector<32x32xbf16>, vector<16x32xf32> -> vector<16x32xf32>
    %c1_75 = arith.constant 1 : index
    %c0_76 = arith.constant 0 : index
    %c0_77 = arith.constant 0 : index
    %148 = vector.load %arg8[%c1_75, %c0_76, %c0_77] : memref<2x1x32xf32, #tpu.memory_space<vmem>>, vector<1x1x32xf32>
    %149 = vector.shape_cast %148 : vector<1x1x32xf32> to vector<1x32xf32>
    %150 = vector.broadcast %149 : vector<1x32xf32> to vector<16x32xf32>
    %151 = arith.addf %147, %150 : vector<16x32xf32>
    %cst_78 = arith.constant 0.000000e+00 : f32
    %152 = vector.broadcast %cst_78 : f32 to vector<16x32xf32>
    %153 = arith.maximumf %151, %152 : vector<16x32xf32>
    %154 = arith.addf %153, %80 : vector<16x32xf32>
    %c0_79 = arith.constant 0 : index
    %c0_80 = arith.constant 0 : index
    %155 = vector.load %arg9[%c0_79, %c0_80] : memref<1x32xf32, #tpu.memory_space<vmem>>, vector<1x32xf32>
    %c0_81 = arith.constant 0 : index
    %c0_82 = arith.constant 0 : index
    %156 = vector.load %arg10[%c0_81, %c0_82] : memref<1x32xf32, #tpu.memory_space<vmem>>, vector<1x32xf32>
    %cst_83 = arith.constant dense<0.000000e+00> : vector<16xf32>
    %157 = vector.multi_reduction <add>, %154, %cst_83 [1] : vector<16x32xf32> to vector<16xf32>
    %158 = vector.shape_cast %157 : vector<16xf32> to vector<16x1xf32>
    %cst_84 = arith.constant 3.200000e+01 : f32
    %159 = vector.broadcast %cst_84 : f32 to vector<16x1xf32>
    %160 = arith.divf %158, %159 : vector<16x1xf32>
    %161 = vector.broadcast %160 : vector<16x1xf32> to vector<16x32xf32>
    %162 = arith.subf %154, %161 : vector<16x32xf32>
    %163 = arith.mulf %162, %162 : vector<16x32xf32>
    %cst_85 = arith.constant dense<0.000000e+00> : vector<16xf32>
    %164 = vector.multi_reduction <add>, %163, %cst_85 [1] : vector<16x32xf32> to vector<16xf32>
    %165 = vector.shape_cast %164 : vector<16xf32> to vector<16x1xf32>
    %cst_86 = arith.constant 3.200000e+01 : f32
    %166 = vector.broadcast %cst_86 : f32 to vector<16x1xf32>
    %167 = arith.divf %165, %166 : vector<16x1xf32>
    %cst_87 = arith.constant 9.99999974E-6 : f32
    %168 = vector.broadcast %cst_87 : f32 to vector<16x1xf32>
    %169 = arith.addf %167, %168 : vector<16x1xf32>
    %170 = math.rsqrt %169 : vector<16x1xf32>
    %171 = vector.broadcast %170 : vector<16x1xf32> to vector<16x32xf32>
    %172 = arith.mulf %162, %171 : vector<16x32xf32>
    %173 = vector.broadcast %155 : vector<1x32xf32> to vector<16x32xf32>
    %174 = arith.mulf %172, %173 : vector<16x32xf32>
    %175 = vector.broadcast %156 : vector<1x32xf32> to vector<16x32xf32>
    %176 = arith.addf %174, %175 : vector<16x32xf32>
    %177 = arith.truncf %176 : vector<16x32xf32> to vector<16x32xbf16>
    %c0_88 = arith.constant 0 : index
    %c0_89 = arith.constant 0 : index
    %178 = vector.load %arg11[%c0_88, %c0_89] : memref<32x96xbf16, #tpu.memory_space<vmem>>, vector<32x96xbf16>
    %cst_90 = arith.constant dense<0.000000e+00> : vector<16x96xf32>
    %179 = tpu.matmul %177, %178, %cst_90 {dimension_numbers = #tpu.dot_dimension_numbers<[1], [0], [0], [1], [0, 0, 1, 1], [], []>} : vector<16x32xbf16>, vector<32x96xbf16>, vector<16x96xf32> -> vector<16x96xf32>
    %c0_91 = arith.constant 0 : index
    %c0_92 = arith.constant 0 : index
    %180 = vector.load %arg12[%c0_91, %c0_92] : memref<1x96xf32, #tpu.memory_space<vmem>>, vector<1x96xf32>
    %181 = vector.broadcast %180 : vector<1x96xf32> to vector<16x96xf32>
    %182 = arith.addf %179, %181 : vector<16x96xf32>
    %183 = vector.extract_strided_slice %182 {offsets = [0, 0], sizes = [16, 32], strides = [1, 1]} : vector<16x96xf32> to vector<16x32xf32>
    %184 = vector.extract_strided_slice %182 {offsets = [0, 32], sizes = [16, 32], strides = [1, 1]} : vector<16x96xf32> to vector<16x32xf32>
    %185 = vector.extract_strided_slice %182 {offsets = [0, 64], sizes = [16, 32], strides = [1, 1]} : vector<16x96xf32> to vector<16x32xf32>
    %c0_93 = arith.constant 0 : index
    %c0_94 = arith.constant 0 : index
    %c0_95 = arith.constant 0 : index
    %186 = vector.load %arg2[%c0_93, %c0_94, %c0_95] : memref<1x1x16xf32, #tpu.memory_space<vmem>>, vector<1x1x16xf32>
    %187 = vector.shape_cast %186 : vector<1x1x16xf32> to vector<1x16xf32>
    %cst_96 = arith.constant 0.000000e+00 : f32
    %188 = vector.broadcast %cst_96 : f32 to vector<1x16xf32>
    %189 = arith.cmpf one, %187, %188 : vector<1x16xf32>
    %cst_97 = arith.constant 0.000000e+00 : f32
    %cst_98 = arith.constant -1.000000e+09 : f32
    %190 = vector.broadcast %cst_97 : f32 to vector<1x16xf32>
    %191 = vector.broadcast %cst_98 : f32 to vector<1x16xf32>
    %192 = arith.select %189, %190, %191 : vector<1x16xi1>, vector<1x16xf32>
    %193 = vector.extract_strided_slice %183 {offsets = [0, 0], sizes = [16, 4], strides = [1, 1]} : vector<16x32xf32> to vector<16x4xf32>
    %194 = arith.truncf %193 : vector<16x4xf32> to vector<16x4xbf16>
    %195 = vector.extract_strided_slice %184 {offsets = [0, 0], sizes = [16, 4], strides = [1, 1]} : vector<16x32xf32> to vector<16x4xf32>
    %196 = arith.truncf %195 : vector<16x4xf32> to vector<16x4xbf16>
    %197 = vector.extract_strided_slice %185 {offsets = [0, 0], sizes = [16, 4], strides = [1, 1]} : vector<16x32xf32> to vector<16x4xf32>
    %198 = arith.truncf %197 : vector<16x4xf32> to vector<16x4xbf16>
    %cst_99 = arith.constant dense<0.000000e+00> : vector<16x16xf32>
    %199 = tpu.matmul %194, %196, %cst_99 {dimension_numbers = #tpu.dot_dimension_numbers<[1], [1], [0], [0], [0, 0, 1, 0], [], []>} : vector<16x4xbf16>, vector<16x4xbf16>, vector<16x16xf32> -> vector<16x16xf32>
    %200 = vector.broadcast %192 : vector<1x16xf32> to vector<16x16xf32>
    %201 = arith.addf %199, %200 : vector<16x16xf32>
    %cst_100 = arith.constant dense<0xFF800000> : vector<16xf32>
    %202 = vector.multi_reduction <maximumf>, %201, %cst_100 [1] : vector<16x16xf32> to vector<16xf32>
    %203 = vector.shape_cast %202 : vector<16xf32> to vector<16x1xf32>
    %204 = vector.broadcast %203 : vector<16x1xf32> to vector<16x16xf32>
    %205 = arith.subf %201, %204 : vector<16x16xf32>
    %206 = math.exp %205 : vector<16x16xf32>
    %cst_101 = arith.constant dense<0.000000e+00> : vector<16xf32>
    %207 = vector.multi_reduction <add>, %206, %cst_101 [1] : vector<16x16xf32> to vector<16xf32>
    %208 = vector.shape_cast %207 : vector<16xf32> to vector<16x1xf32>
    %209 = tpu.reciprocal %208 {approx = true} : vector<16x1xf32> -> vector<16x1xf32>
    %210 = vector.broadcast %209 : vector<16x1xf32> to vector<16x16xf32>
    %211 = arith.mulf %206, %210 : vector<16x16xf32>
    %212 = arith.truncf %211 : vector<16x16xf32> to vector<16x16xbf16>
    %cst_102 = arith.constant dense<0.000000e+00> : vector<16x4xf32>
    %213 = tpu.matmul %212, %198, %cst_102 {dimension_numbers = #tpu.dot_dimension_numbers<[1], [0], [0], [1], [0, 0, 1, 1], [], []>} : vector<16x16xbf16>, vector<16x4xbf16>, vector<16x4xf32> -> vector<16x4xf32>
    %c0_103 = arith.constant 0 : index
    %c0_104 = arith.constant 0 : index
    %214 = vector.load %arg23[%c0_103, %c0_104] : memref<16x32xf32, #tpu.memory_space<vmem>>, vector<16x4xf32>
    tpu.vector_store %arg23[%c0_103, %c0_104], %213 {strides = array<i32>} : memref<16x32xf32, #tpu.memory_space<vmem>>, vector<16x4xf32>,
    %215 = vector.extract_strided_slice %183 {offsets = [0, 4], sizes = [16, 4], strides = [1, 1]} : vector<16x32xf32> to vector<16x4xf32>
    %216 = arith.truncf %215 : vector<16x4xf32> to vector<16x4xbf16>
    %217 = vector.extract_strided_slice %184 {offsets = [0, 4], sizes = [16, 4], strides = [1, 1]} : vector<16x32xf32> to vector<16x4xf32>
    %218 = arith.truncf %217 : vector<16x4xf32> to vector<16x4xbf16>
    %219 = vector.extract_strided_slice %185 {offsets = [0, 4], sizes = [16, 4], strides = [1, 1]} : vector<16x32xf32> to vector<16x4xf32>
    %220 = arith.truncf %219 : vector<16x4xf32> to vector<16x4xbf16>
    %cst_105 = arith.constant dense<0.000000e+00> : vector<16x16xf32>
    %221 = tpu.matmul %216, %218, %cst_105 {dimension_numbers = #tpu.dot_dimension_numbers<[1], [1], [0], [0], [0, 0, 1, 0], [], []>} : vector<16x4xbf16>, vector<16x4xbf16>, vector<16x16xf32> -> vector<16x16xf32>
    %222 = vector.broadcast %192 : vector<1x16xf32> to vector<16x16xf32>
    %223 = arith.addf %221, %222 : vector<16x16xf32>
    %cst_106 = arith.constant dense<0xFF800000> : vector<16xf32>
    %224 = vector.multi_reduction <maximumf>, %223, %cst_106 [1] : vector<16x16xf32> to vector<16xf32>
    %225 = vector.shape_cast %224 : vector<16xf32> to vector<16x1xf32>
    %226 = vector.broadcast %225 : vector<16x1xf32> to vector<16x16xf32>
    %227 = arith.subf %223, %226 : vector<16x16xf32>
    %228 = math.exp %227 : vector<16x16xf32>
    %cst_107 = arith.constant dense<0.000000e+00> : vector<16xf32>
    %229 = vector.multi_reduction <add>, %228, %cst_107 [1] : vector<16x16xf32> to vector<16xf32>
    %230 = vector.shape_cast %229 : vector<16xf32> to vector<16x1xf32>
    %231 = tpu.reciprocal %230 {approx = true} : vector<16x1xf32> -> vector<16x1xf32>
    %232 = vector.broadcast %231 : vector<16x1xf32> to vector<16x16xf32>
    %233 = arith.mulf %228, %232 : vector<16x16xf32>
    %234 = arith.truncf %233 : vector<16x16xf32> to vector<16x16xbf16>
    %cst_108 = arith.constant dense<0.000000e+00> : vector<16x4xf32>
    %235 = tpu.matmul %234, %220, %cst_108 {dimension_numbers = #tpu.dot_dimension_numbers<[1], [0], [0], [1], [0, 0, 1, 1], [], []>} : vector<16x16xbf16>, vector<16x4xbf16>, vector<16x4xf32> -> vector<16x4xf32>
    %c0_109 = arith.constant 0 : index
    %c4_110 = arith.constant 4 : index
    %236 = vector.load %arg23[%c0_109, %c4_110] : memref<16x32xf32, #tpu.memory_space<vmem>>, vector<16x4xf32>
    tpu.vector_store %arg23[%c0_109, %c4_110], %235 {strides = array<i32>} : memref<16x32xf32, #tpu.memory_space<vmem>>, vector<16x4xf32>,
    %237 = vector.extract_strided_slice %183 {offsets = [0, 8], sizes = [16, 4], strides = [1, 1]} : vector<16x32xf32> to vector<16x4xf32>
    %238 = arith.truncf %237 : vector<16x4xf32> to vector<16x4xbf16>
    %239 = vector.extract_strided_slice %184 {offsets = [0, 8], sizes = [16, 4], strides = [1, 1]} : vector<16x32xf32> to vector<16x4xf32>
    %240 = arith.truncf %239 : vector<16x4xf32> to vector<16x4xbf16>
    %241 = vector.extract_strided_slice %185 {offsets = [0, 8], sizes = [16, 4], strides = [1, 1]} : vector<16x32xf32> to vector<16x4xf32>
    %242 = arith.truncf %241 : vector<16x4xf32> to vector<16x4xbf16>
    %cst_111 = arith.constant dense<0.000000e+00> : vector<16x16xf32>
    %243 = tpu.matmul %238, %240, %cst_111 {dimension_numbers = #tpu.dot_dimension_numbers<[1], [1], [0], [0], [0, 0, 1, 0], [], []>} : vector<16x4xbf16>, vector<16x4xbf16>, vector<16x16xf32> -> vector<16x16xf32>
    %244 = vector.broadcast %192 : vector<1x16xf32> to vector<16x16xf32>
    %245 = arith.addf %243, %244 : vector<16x16xf32>
    %cst_112 = arith.constant dense<0xFF800000> : vector<16xf32>
    %246 = vector.multi_reduction <maximumf>, %245, %cst_112 [1] : vector<16x16xf32> to vector<16xf32>
    %247 = vector.shape_cast %246 : vector<16xf32> to vector<16x1xf32>
    %248 = vector.broadcast %247 : vector<16x1xf32> to vector<16x16xf32>
    %249 = arith.subf %245, %248 : vector<16x16xf32>
    %250 = math.exp %249 : vector<16x16xf32>
    %cst_113 = arith.constant dense<0.000000e+00> : vector<16xf32>
    %251 = vector.multi_reduction <add>, %250, %cst_113 [1] : vector<16x16xf32> to vector<16xf32>
    %252 = vector.shape_cast %251 : vector<16xf32> to vector<16x1xf32>
    %253 = tpu.reciprocal %252 {approx = true} : vector<16x1xf32> -> vector<16x1xf32>
    %254 = vector.broadcast %253 : vector<16x1xf32> to vector<16x16xf32>
    %255 = arith.mulf %250, %254 : vector<16x16xf32>
    %256 = arith.truncf %255 : vector<16x16xf32> to vector<16x16xbf16>
    %cst_114 = arith.constant dense<0.000000e+00> : vector<16x4xf32>
    %257 = tpu.matmul %256, %242, %cst_114 {dimension_numbers = #tpu.dot_dimension_numbers<[1], [0], [0], [1], [0, 0, 1, 1], [], []>} : vector<16x16xbf16>, vector<16x4xbf16>, vector<16x4xf32> -> vector<16x4xf32>
    %c0_115 = arith.constant 0 : index
    %c8 = arith.constant 8 : index
    %258 = vector.load %arg23[%c0_115, %c8] : memref<16x32xf32, #tpu.memory_space<vmem>>, vector<16x4xf32>
    tpu.vector_store %arg23[%c0_115, %c8], %257 {strides = array<i32>} : memref<16x32xf32, #tpu.memory_space<vmem>>, vector<16x4xf32>,
    %259 = vector.extract_strided_slice %183 {offsets = [0, 12], sizes = [16, 4], strides = [1, 1]} : vector<16x32xf32> to vector<16x4xf32>
    %260 = arith.truncf %259 : vector<16x4xf32> to vector<16x4xbf16>
    %261 = vector.extract_strided_slice %184 {offsets = [0, 12], sizes = [16, 4], strides = [1, 1]} : vector<16x32xf32> to vector<16x4xf32>
    %262 = arith.truncf %261 : vector<16x4xf32> to vector<16x4xbf16>
    %263 = vector.extract_strided_slice %185 {offsets = [0, 12], sizes = [16, 4], strides = [1, 1]} : vector<16x32xf32> to vector<16x4xf32>
    %264 = arith.truncf %263 : vector<16x4xf32> to vector<16x4xbf16>
    %cst_116 = arith.constant dense<0.000000e+00> : vector<16x16xf32>
    %265 = tpu.matmul %260, %262, %cst_116 {dimension_numbers = #tpu.dot_dimension_numbers<[1], [1], [0], [0], [0, 0, 1, 0], [], []>} : vector<16x4xbf16>, vector<16x4xbf16>, vector<16x16xf32> -> vector<16x16xf32>
    %266 = vector.broadcast %192 : vector<1x16xf32> to vector<16x16xf32>
    %267 = arith.addf %265, %266 : vector<16x16xf32>
    %cst_117 = arith.constant dense<0xFF800000> : vector<16xf32>
    %268 = vector.multi_reduction <maximumf>, %267, %cst_117 [1] : vector<16x16xf32> to vector<16xf32>
    %269 = vector.shape_cast %268 : vector<16xf32> to vector<16x1xf32>
    %270 = vector.broadcast %269 : vector<16x1xf32> to vector<16x16xf32>
    %271 = arith.subf %267, %270 : vector<16x16xf32>
    %272 = math.exp %271 : vector<16x16xf32>
    %cst_118 = arith.constant dense<0.000000e+00> : vector<16xf32>
    %273 = vector.multi_reduction <add>, %272, %cst_118 [1] : vector<16x16xf32> to vector<16xf32>
    %274 = vector.shape_cast %273 : vector<16xf32> to vector<16x1xf32>
    %275 = tpu.reciprocal %274 {approx = true} : vector<16x1xf32> -> vector<16x1xf32>
    %276 = vector.broadcast %275 : vector<16x1xf32> to vector<16x16xf32>
    %277 = arith.mulf %272, %276 : vector<16x16xf32>
    %278 = arith.truncf %277 : vector<16x16xf32> to vector<16x16xbf16>
    %cst_119 = arith.constant dense<0.000000e+00> : vector<16x4xf32>
    %279 = tpu.matmul %278, %264, %cst_119 {dimension_numbers = #tpu.dot_dimension_numbers<[1], [0], [0], [1], [0, 0, 1, 1], [], []>} : vector<16x16xbf16>, vector<16x4xbf16>, vector<16x4xf32> -> vector<16x4xf32>
    %c0_120 = arith.constant 0 : index
    %c12 = arith.constant 12 : index
    %280 = vector.load %arg23[%c0_120, %c12] : memref<16x32xf32, #tpu.memory_space<vmem>>, vector<16x4xf32>
    tpu.vector_store %arg23[%c0_120, %c12], %279 {strides = array<i32>} : memref<16x32xf32, #tpu.memory_space<vmem>>, vector<16x4xf32>,
    %281 = vector.extract_strided_slice %183 {offsets = [0, 16], sizes = [16, 4], strides = [1, 1]} : vector<16x32xf32> to vector<16x4xf32>
    %282 = arith.truncf %281 : vector<16x4xf32> to vector<16x4xbf16>
    %283 = vector.extract_strided_slice %184 {offsets = [0, 16], sizes = [16, 4], strides = [1, 1]} : vector<16x32xf32> to vector<16x4xf32>
    %284 = arith.truncf %283 : vector<16x4xf32> to vector<16x4xbf16>
    %285 = vector.extract_strided_slice %185 {offsets = [0, 16], sizes = [16, 4], strides = [1, 1]} : vector<16x32xf32> to vector<16x4xf32>
    %286 = arith.truncf %285 : vector<16x4xf32> to vector<16x4xbf16>
    %cst_121 = arith.constant dense<0.000000e+00> : vector<16x16xf32>
    %287 = tpu.matmul %282, %284, %cst_121 {dimension_numbers = #tpu.dot_dimension_numbers<[1], [1], [0], [0], [0, 0, 1, 0], [], []>} : vector<16x4xbf16>, vector<16x4xbf16>, vector<16x16xf32> -> vector<16x16xf32>
    %288 = vector.broadcast %192 : vector<1x16xf32> to vector<16x16xf32>
    %289 = arith.addf %287, %288 : vector<16x16xf32>
    %cst_122 = arith.constant dense<0xFF800000> : vector<16xf32>
    %290 = vector.multi_reduction <maximumf>, %289, %cst_122 [1] : vector<16x16xf32> to vector<16xf32>
    %291 = vector.shape_cast %290 : vector<16xf32> to vector<16x1xf32>
    %292 = vector.broadcast %291 : vector<16x1xf32> to vector<16x16xf32>
    %293 = arith.subf %289, %292 : vector<16x16xf32>
    %294 = math.exp %293 : vector<16x16xf32>
    %cst_123 = arith.constant dense<0.000000e+00> : vector<16xf32>
    %295 = vector.multi_reduction <add>, %294, %cst_123 [1] : vector<16x16xf32> to vector<16xf32>
    %296 = vector.shape_cast %295 : vector<16xf32> to vector<16x1xf32>
    %297 = tpu.reciprocal %296 {approx = true} : vector<16x1xf32> -> vector<16x1xf32>
    %298 = vector.broadcast %297 : vector<16x1xf32> to vector<16x16xf32>
    %299 = arith.mulf %294, %298 : vector<16x16xf32>
    %300 = arith.truncf %299 : vector<16x16xf32> to vector<16x16xbf16>
    %cst_124 = arith.constant dense<0.000000e+00> : vector<16x4xf32>
    %301 = tpu.matmul %300, %286, %cst_124 {dimension_numbers = #tpu.dot_dimension_numbers<[1], [0], [0], [1], [0, 0, 1, 1], [], []>} : vector<16x16xbf16>, vector<16x4xbf16>, vector<16x4xf32> -> vector<16x4xf32>
    %c0_125 = arith.constant 0 : index
    %c16 = arith.constant 16 : index
    %302 = vector.load %arg23[%c0_125, %c16] : memref<16x32xf32, #tpu.memory_space<vmem>>, vector<16x4xf32>
    tpu.vector_store %arg23[%c0_125, %c16], %301 {strides = array<i32>} : memref<16x32xf32, #tpu.memory_space<vmem>>, vector<16x4xf32>,
    %303 = vector.extract_strided_slice %183 {offsets = [0, 20], sizes = [16, 4], strides = [1, 1]} : vector<16x32xf32> to vector<16x4xf32>
    %304 = arith.truncf %303 : vector<16x4xf32> to vector<16x4xbf16>
    %305 = vector.extract_strided_slice %184 {offsets = [0, 20], sizes = [16, 4], strides = [1, 1]} : vector<16x32xf32> to vector<16x4xf32>
    %306 = arith.truncf %305 : vector<16x4xf32> to vector<16x4xbf16>
    %307 = vector.extract_strided_slice %185 {offsets = [0, 20], sizes = [16, 4], strides = [1, 1]} : vector<16x32xf32> to vector<16x4xf32>
    %308 = arith.truncf %307 : vector<16x4xf32> to vector<16x4xbf16>
    %cst_126 = arith.constant dense<0.000000e+00> : vector<16x16xf32>
    %309 = tpu.matmul %304, %306, %cst_126 {dimension_numbers = #tpu.dot_dimension_numbers<[1], [1], [0], [0], [0, 0, 1, 0], [], []>} : vector<16x4xbf16>, vector<16x4xbf16>, vector<16x16xf32> -> vector<16x16xf32>
    %310 = vector.broadcast %192 : vector<1x16xf32> to vector<16x16xf32>
    %311 = arith.addf %309, %310 : vector<16x16xf32>
    %cst_127 = arith.constant dense<0xFF800000> : vector<16xf32>
    %312 = vector.multi_reduction <maximumf>, %311, %cst_127 [1] : vector<16x16xf32> to vector<16xf32>
    %313 = vector.shape_cast %312 : vector<16xf32> to vector<16x1xf32>
    %314 = vector.broadcast %313 : vector<16x1xf32> to vector<16x16xf32>
    %315 = arith.subf %311, %314 : vector<16x16xf32>
    %316 = math.exp %315 : vector<16x16xf32>
    %cst_128 = arith.constant dense<0.000000e+00> : vector<16xf32>
    %317 = vector.multi_reduction <add>, %316, %cst_128 [1] : vector<16x16xf32> to vector<16xf32>
    %318 = vector.shape_cast %317 : vector<16xf32> to vector<16x1xf32>
    %319 = tpu.reciprocal %318 {approx = true} : vector<16x1xf32> -> vector<16x1xf32>
    %320 = vector.broadcast %319 : vector<16x1xf32> to vector<16x16xf32>
    %321 = arith.mulf %316, %320 : vector<16x16xf32>
    %322 = arith.truncf %321 : vector<16x16xf32> to vector<16x16xbf16>
    %cst_129 = arith.constant dense<0.000000e+00> : vector<16x4xf32>
    %323 = tpu.matmul %322, %308, %cst_129 {dimension_numbers = #tpu.dot_dimension_numbers<[1], [0], [0], [1], [0, 0, 1, 1], [], []>} : vector<16x16xbf16>, vector<16x4xbf16>, vector<16x4xf32> -> vector<16x4xf32>
    %c0_130 = arith.constant 0 : index
    %c20 = arith.constant 20 : index
    %324 = vector.load %arg23[%c0_130, %c20] : memref<16x32xf32, #tpu.memory_space<vmem>>, vector<16x4xf32>
    tpu.vector_store %arg23[%c0_130, %c20], %323 {strides = array<i32>} : memref<16x32xf32, #tpu.memory_space<vmem>>, vector<16x4xf32>,
    %325 = vector.extract_strided_slice %183 {offsets = [0, 24], sizes = [16, 4], strides = [1, 1]} : vector<16x32xf32> to vector<16x4xf32>
    %326 = arith.truncf %325 : vector<16x4xf32> to vector<16x4xbf16>
    %327 = vector.extract_strided_slice %184 {offsets = [0, 24], sizes = [16, 4], strides = [1, 1]} : vector<16x32xf32> to vector<16x4xf32>
    %328 = arith.truncf %327 : vector<16x4xf32> to vector<16x4xbf16>
    %329 = vector.extract_strided_slice %185 {offsets = [0, 24], sizes = [16, 4], strides = [1, 1]} : vector<16x32xf32> to vector<16x4xf32>
    %330 = arith.truncf %329 : vector<16x4xf32> to vector<16x4xbf16>
    %cst_131 = arith.constant dense<0.000000e+00> : vector<16x16xf32>
    %331 = tpu.matmul %326, %328, %cst_131 {dimension_numbers = #tpu.dot_dimension_numbers<[1], [1], [0], [0], [0, 0, 1, 0], [], []>} : vector<16x4xbf16>, vector<16x4xbf16>, vector<16x16xf32> -> vector<16x16xf32>
    %332 = vector.broadcast %192 : vector<1x16xf32> to vector<16x16xf32>
    %333 = arith.addf %331, %332 : vector<16x16xf32>
    %cst_132 = arith.constant dense<0xFF800000> : vector<16xf32>
    %334 = vector.multi_reduction <maximumf>, %333, %cst_132 [1] : vector<16x16xf32> to vector<16xf32>
    %335 = vector.shape_cast %334 : vector<16xf32> to vector<16x1xf32>
    %336 = vector.broadcast %335 : vector<16x1xf32> to vector<16x16xf32>
    %337 = arith.subf %333, %336 : vector<16x16xf32>
    %338 = math.exp %337 : vector<16x16xf32>
    %cst_133 = arith.constant dense<0.000000e+00> : vector<16xf32>
    %339 = vector.multi_reduction <add>, %338, %cst_133 [1] : vector<16x16xf32> to vector<16xf32>
    %340 = vector.shape_cast %339 : vector<16xf32> to vector<16x1xf32>
    %341 = tpu.reciprocal %340 {approx = true} : vector<16x1xf32> -> vector<16x1xf32>
    %342 = vector.broadcast %341 : vector<16x1xf32> to vector<16x16xf32>
    %343 = arith.mulf %338, %342 : vector<16x16xf32>
    %344 = arith.truncf %343 : vector<16x16xf32> to vector<16x16xbf16>
    %cst_134 = arith.constant dense<0.000000e+00> : vector<16x4xf32>
    %345 = tpu.matmul %344, %330, %cst_134 {dimension_numbers = #tpu.dot_dimension_numbers<[1], [0], [0], [1], [0, 0, 1, 1], [], []>} : vector<16x16xbf16>, vector<16x4xbf16>, vector<16x4xf32> -> vector<16x4xf32>
    %c0_135 = arith.constant 0 : index
    %c24 = arith.constant 24 : index
    %346 = vector.load %arg23[%c0_135, %c24] : memref<16x32xf32, #tpu.memory_space<vmem>>, vector<16x4xf32>
    tpu.vector_store %arg23[%c0_135, %c24], %345 {strides = array<i32>} : memref<16x32xf32, #tpu.memory_space<vmem>>, vector<16x4xf32>,
    %347 = vector.extract_strided_slice %183 {offsets = [0, 28], sizes = [16, 4], strides = [1, 1]} : vector<16x32xf32> to vector<16x4xf32>
    %348 = arith.truncf %347 : vector<16x4xf32> to vector<16x4xbf16>
    %349 = vector.extract_strided_slice %184 {offsets = [0, 28], sizes = [16, 4], strides = [1, 1]} : vector<16x32xf32> to vector<16x4xf32>
    %350 = arith.truncf %349 : vector<16x4xf32> to vector<16x4xbf16>
    %351 = vector.extract_strided_slice %185 {offsets = [0, 28], sizes = [16, 4], strides = [1, 1]} : vector<16x32xf32> to vector<16x4xf32>
    %352 = arith.truncf %351 : vector<16x4xf32> to vector<16x4xbf16>
    %cst_136 = arith.constant dense<0.000000e+00> : vector<16x16xf32>
    %353 = tpu.matmul %348, %350, %cst_136 {dimension_numbers = #tpu.dot_dimension_numbers<[1], [1], [0], [0], [0, 0, 1, 0], [], []>} : vector<16x4xbf16>, vector<16x4xbf16>, vector<16x16xf32> -> vector<16x16xf32>
    %354 = vector.broadcast %192 : vector<1x16xf32> to vector<16x16xf32>
    %355 = arith.addf %353, %354 : vector<16x16xf32>
    %cst_137 = arith.constant dense<0xFF800000> : vector<16xf32>
    %356 = vector.multi_reduction <maximumf>, %355, %cst_137 [1] : vector<16x16xf32> to vector<16xf32>
    %357 = vector.shape_cast %356 : vector<16xf32> to vector<16x1xf32>
    %358 = vector.broadcast %357 : vector<16x1xf32> to vector<16x16xf32>
    %359 = arith.subf %355, %358 : vector<16x16xf32>
    %360 = math.exp %359 : vector<16x16xf32>
    %cst_138 = arith.constant dense<0.000000e+00> : vector<16xf32>
    %361 = vector.multi_reduction <add>, %360, %cst_138 [1] : vector<16x16xf32> to vector<16xf32>
    %362 = vector.shape_cast %361 : vector<16xf32> to vector<16x1xf32>
    %363 = tpu.reciprocal %362 {approx = true} : vector<16x1xf32> -> vector<16x1xf32>
    %364 = vector.broadcast %363 : vector<16x1xf32> to vector<16x16xf32>
    %365 = arith.mulf %360, %364 : vector<16x16xf32>
    %366 = arith.truncf %365 : vector<16x16xf32> to vector<16x16xbf16>
    %cst_139 = arith.constant dense<0.000000e+00> : vector<16x4xf32>
    %367 = tpu.matmul %366, %352, %cst_139 {dimension_numbers = #tpu.dot_dimension_numbers<[1], [0], [0], [1], [0, 0, 1, 1], [], []>} : vector<16x16xbf16>, vector<16x4xbf16>, vector<16x4xf32> -> vector<16x4xf32>
    %c0_140 = arith.constant 0 : index
    %c28 = arith.constant 28 : index
    %368 = vector.load %arg23[%c0_140, %c28] : memref<16x32xf32, #tpu.memory_space<vmem>>, vector<16x4xf32>
    tpu.vector_store %arg23[%c0_140, %c28], %367 {strides = array<i32>} : memref<16x32xf32, #tpu.memory_space<vmem>>, vector<16x4xf32>,
    %c0_141 = arith.constant 0 : index
    %c0_142 = arith.constant 0 : index
    %369 = vector.load %arg23[%c0_141, %c0_142] : memref<16x32xf32, #tpu.memory_space<vmem>>, vector<16x32xf32>
    %370 = arith.truncf %369 : vector<16x32xf32> to vector<16x32xbf16>
    %c0_143 = arith.constant 0 : index
    %c0_144 = arith.constant 0 : index
    %371 = vector.load %arg13[%c0_143, %c0_144] : memref<32x32xbf16, #tpu.memory_space<vmem>>, vector<32x32xbf16>
    %cst_145 = arith.constant dense<0.000000e+00> : vector<16x32xf32>
    %372 = tpu.matmul %370, %371, %cst_145 {dimension_numbers = #tpu.dot_dimension_numbers<[1], [0], [0], [1], [0, 0, 1, 1], [], []>} : vector<16x32xbf16>, vector<32x32xbf16>, vector<16x32xf32> -> vector<16x32xf32>
    %c0_146 = arith.constant 0 : index
    %c0_147 = arith.constant 0 : index
    %373 = vector.load %arg14[%c0_146, %c0_147] : memref<1x32xf32, #tpu.memory_space<vmem>>, vector<1x32xf32>
    %374 = vector.broadcast %373 : vector<1x32xf32> to vector<16x32xf32>
    %375 = arith.addf %372, %374 : vector<16x32xf32>
    %376 = arith.addf %375, %154 : vector<16x32xf32>
    %c0_148 = arith.constant 0 : index
    %c0_149 = arith.constant 0 : index
    %377 = vector.load %arg15[%c0_148, %c0_149] : memref<1x32xf32, #tpu.memory_space<vmem>>, vector<1x32xf32>
    %c0_150 = arith.constant 0 : index
    %c0_151 = arith.constant 0 : index
    %378 = vector.load %arg16[%c0_150, %c0_151] : memref<1x32xf32, #tpu.memory_space<vmem>>, vector<1x32xf32>
    %cst_152 = arith.constant dense<0.000000e+00> : vector<16xf32>
    %379 = vector.multi_reduction <add>, %376, %cst_152 [1] : vector<16x32xf32> to vector<16xf32>
    %380 = vector.shape_cast %379 : vector<16xf32> to vector<16x1xf32>
    %cst_153 = arith.constant 3.200000e+01 : f32
    %381 = vector.broadcast %cst_153 : f32 to vector<16x1xf32>
    %382 = arith.divf %380, %381 : vector<16x1xf32>
    %383 = vector.broadcast %382 : vector<16x1xf32> to vector<16x32xf32>
    %384 = arith.subf %376, %383 : vector<16x32xf32>
    %385 = arith.mulf %384, %384 : vector<16x32xf32>
    %cst_154 = arith.constant dense<0.000000e+00> : vector<16xf32>
    %386 = vector.multi_reduction <add>, %385, %cst_154 [1] : vector<16x32xf32> to vector<16xf32>
    %387 = vector.shape_cast %386 : vector<16xf32> to vector<16x1xf32>
    %cst_155 = arith.constant 3.200000e+01 : f32
    %388 = vector.broadcast %cst_155 : f32 to vector<16x1xf32>
    %389 = arith.divf %387, %388 : vector<16x1xf32>
    %cst_156 = arith.constant 9.99999974E-6 : f32
    %390 = vector.broadcast %cst_156 : f32 to vector<16x1xf32>
    %391 = arith.addf %389, %390 : vector<16x1xf32>
    %392 = math.rsqrt %391 : vector<16x1xf32>
    %393 = vector.broadcast %392 : vector<16x1xf32> to vector<16x32xf32>
    %394 = arith.mulf %384, %393 : vector<16x32xf32>
    %395 = vector.broadcast %377 : vector<1x32xf32> to vector<16x32xf32>
    %396 = arith.mulf %394, %395 : vector<16x32xf32>
    %397 = vector.broadcast %378 : vector<1x32xf32> to vector<16x32xf32>
    %398 = arith.addf %396, %397 : vector<16x32xf32>
    %399 = arith.truncf %398 : vector<16x32xf32> to vector<16x32xbf16>
    %c0_157 = arith.constant 0 : index
    %c0_158 = arith.constant 0 : index
    %400 = vector.load %arg17[%c0_157, %c0_158] : memref<32x32xbf16, #tpu.memory_space<vmem>>, vector<32x32xbf16>
    %cst_159 = arith.constant dense<0.000000e+00> : vector<16x32xf32>
    %401 = tpu.matmul %399, %400, %cst_159 {dimension_numbers = #tpu.dot_dimension_numbers<[1], [0], [0], [1], [0, 0, 1, 1], [], []>} : vector<16x32xbf16>, vector<32x32xbf16>, vector<16x32xf32> -> vector<16x32xf32>
    %c0_160 = arith.constant 0 : index
    %c0_161 = arith.constant 0 : index
    %402 = vector.load %arg18[%c0_160, %c0_161] : memref<1x32xf32, #tpu.memory_space<vmem>>, vector<1x32xf32>
    %403 = vector.broadcast %402 : vector<1x32xf32> to vector<16x32xf32>
    %404 = arith.addf %401, %403 : vector<16x32xf32>
    %cst_162 = arith.constant 0.000000e+00 : f32
    %405 = vector.broadcast %cst_162 : f32 to vector<16x32xf32>
    %406 = arith.maximumf %404, %405 : vector<16x32xf32>
    %407 = arith.truncf %406 : vector<16x32xf32> to vector<16x32xbf16>
    %c0_163 = arith.constant 0 : index
    %c0_164 = arith.constant 0 : index
    %408 = vector.load %arg19[%c0_163, %c0_164] : memref<32x32xbf16, #tpu.memory_space<vmem>>, vector<32x32xbf16>
    %cst_165 = arith.constant dense<0.000000e+00> : vector<16x32xf32>
    %409 = tpu.matmul %407, %408, %cst_165 {dimension_numbers = #tpu.dot_dimension_numbers<[1], [0], [0], [1], [0, 0, 1, 1], [], []>} : vector<16x32xbf16>, vector<32x32xbf16>, vector<16x32xf32> -> vector<16x32xf32>
    %c0_166 = arith.constant 0 : index
    %c0_167 = arith.constant 0 : index
    %410 = vector.load %arg20[%c0_166, %c0_167] : memref<1x32xf32, #tpu.memory_space<vmem>>, vector<1x32xf32>
    %411 = vector.broadcast %410 : vector<1x32xf32> to vector<16x32xf32>
    %412 = arith.addf %409, %411 : vector<16x32xf32>
    %413 = arith.addf %412, %376 : vector<16x32xf32>
    %c0_168 = arith.constant 0 : index
    %c0_169 = arith.constant 0 : index
    %c0_170 = arith.constant 0 : index
    %414 = vector.load %arg21[%c0_168, %c0_169, %c0_170] : memref<1x16x32xf32, #tpu.memory_space<vmem>>, vector<1x16x32xf32>
    %415 = vector.shape_cast %414 : vector<1x16x32xf32> to vector<16x32xf32>
    %416 = vector.shape_cast %413 : vector<16x32xf32> to vector<1x16x32xf32>
    tpu.vector_store %arg21[%c0_168, %c0_169, %c0_170], %416 {strides = array<i32>} : memref<1x16x32xf32, #tpu.memory_space<vmem>>, vector<1x16x32xf32>,
    return
  }
  func.func @transform_0(%arg0: i32) -> (i32, i32, i32) {
    %c0_i32 = arith.constant 0 : i32
    %c0_i32_0 = arith.constant 0 : i32
    %c0_i32_1 = arith.constant 0 : i32
    return %arg0, %c0_i32, %c0_i32_0 : i32, i32, i32
  }
  func.func @transform_1(%arg0: i32) -> (i32, i32, i32) {
    %c0_i32 = arith.constant 0 : i32
    %c0_i32_0 = arith.constant 0 : i32
    %c0_i32_1 = arith.constant 0 : i32
    return %arg0, %c0_i32, %c0_i32_0 : i32, i32, i32
  }
  func.func @transform_2(%arg0: i32) -> (i32, i32) {
    %c0_i32 = arith.constant 0 : i32
    %c0_i32_0 = arith.constant 0 : i32
    %c0_i32_1 = arith.constant 0 : i32
    return %c0_i32, %c0_i32_0 : i32, i32
  }
  func.func @transform_3(%arg0: i32) -> (i32, i32, i32) {
    %c0_i32 = arith.constant 0 : i32
    %c0_i32_0 = arith.constant 0 : i32
    %c0_i32_1 = arith.constant 0 : i32
    %c0_i32_2 = arith.constant 0 : i32
    return %c0_i32, %c0_i32_0, %c0_i32_1 : i32, i32, i32
  }
  func.func @transform_4(%arg0: i32) -> (i32, i32, i32) {
    %c0_i32 = arith.constant 0 : i32
    %c0_i32_0 = arith.constant 0 : i32
    %c0_i32_1 = arith.constant 0 : i32
    %c0_i32_2 = arith.constant 0 : i32
    return %c0_i32, %c0_i32_0, %c0_i32_1 : i32, i32, i32
  }
  func.func @transform_5(%arg0: i32) -> (i32, i32, i32) {
    %c0_i32 = arith.constant 0 : i32
    %c0_i32_0 = arith.constant 0 : i32
    %c0_i32_1 = arith.constant 0 : i32
    %c0_i32_2 = arith.constant 0 : i32
    return %c0_i32, %c0_i32_0, %c0_i32_1 : i32, i32, i32
  }
  func.func @transform_6(%arg0: i32) -> (i32, i32, i32) {
    %c0_i32 = arith.constant 0 : i32
    %c0_i32_0 = arith.constant 0 : i32
    %c0_i32_1 = arith.constant 0 : i32
    %c0_i32_2 = arith.constant 0 : i32
    return %c0_i32, %c0_i32_0, %c0_i32_1 : i32, i32, i32
  }
  func.func @transform_7(%arg0: i32) -> (i32, i32, i32) {
    %c0_i32 = arith.constant 0 : i32
    %c0_i32_0 = arith.constant 0 : i32
    %c0_i32_1 = arith.constant 0 : i32
    %c0_i32_2 = arith.constant 0 : i32
    return %c0_i32, %c0_i32_0, %c0_i32_1 : i32, i32, i32
  }
  func.func @transform_8(%arg0: i32) -> (i32, i32) {
    %c0_i32 = arith.constant 0 : i32
    %c0_i32_0 = arith.constant 0 : i32
    %c0_i32_1 = arith.constant 0 : i32
    return %c0_i32, %c0_i32_0 : i32, i32
  }
  func.func @transform_9(%arg0: i32) -> (i32, i32) {
    %c0_i32 = arith.constant 0 : i32
    %c0_i32_0 = arith.constant 0 : i32
    %c0_i32_1 = arith.constant 0 : i32
    return %c0_i32, %c0_i32_0 : i32, i32
  }
  func.func @transform_10(%arg0: i32) -> (i32, i32) {
    %c0_i32 = arith.constant 0 : i32
    %c0_i32_0 = arith.constant 0 : i32
    %c0_i32_1 = arith.constant 0 : i32
    return %c0_i32, %c0_i32_0 : i32, i32
  }
  func.func @transform_11(%arg0: i32) -> (i32, i32) {
    %c0_i32 = arith.constant 0 : i32
    %c0_i32_0 = arith.constant 0 : i32
    %c0_i32_1 = arith.constant 0 : i32
    return %c0_i32, %c0_i32_0 : i32, i32
  }
  func.func @transform_12(%arg0: i32) -> (i32, i32) {
    %c0_i32 = arith.constant 0 : i32
    %c0_i32_0 = arith.constant 0 : i32
    %c0_i32_1 = arith.constant 0 : i32
    return %c0_i32, %c0_i32_0 : i32, i32
  }
  func.func @transform_13(%arg0: i32) -> (i32, i32) {
    %c0_i32 = arith.constant 0 : i32
    %c0_i32_0 = arith.constant 0 : i32
    %c0_i32_1 = arith.constant 0 : i32
    return %c0_i32, %c0_i32_0 : i32, i32
  }
  func.func @transform_14(%arg0: i32) -> (i32, i32) {
    %c0_i32 = arith.constant 0 : i32
    %c0_i32_0 = arith.constant 0 : i32
    %c0_i32_1 = arith.constant 0 : i32
    return %c0_i32, %c0_i32_0 : i32, i32
  }
  func.func @transform_15(%arg0: i32) -> (i32, i32) {
    %c0_i32 = arith.constant 0 : i32
    %c0_i32_0 = arith.constant 0 : i32
    %c0_i32_1 = arith.constant 0 : i32
    return %c0_i32, %c0_i32_0 : i32, i32
  }
  func.func @transform_16(%arg0: i32) -> (i32, i32) {
    %c0_i32 = arith.constant 0 : i32
    %c0_i32_0 = arith.constant 0 : i32
    %c0_i32_1 = arith.constant 0 : i32
    return %c0_i32, %c0_i32_0 : i32, i32
  }
  func.func @transform_17(%arg0: i32) -> (i32, i32) {
    %c0_i32 = arith.constant 0 : i32
    %c0_i32_0 = arith.constant 0 : i32
    %c0_i32_1 = arith.constant 0 : i32
    return %c0_i32, %c0_i32_0 : i32, i32
  }
  func.func @transform_18(%arg0: i32) -> (i32, i32) {
    %c0_i32 = arith.constant 0 : i32
    %c0_i32_0 = arith.constant 0 : i32
    %c0_i32_1 = arith.constant 0 : i32
    return %c0_i32, %c0_i32_0 : i32, i32
  }
  func.func @transform_19(%arg0: i32) -> (i32, i32) {
    %c0_i32 = arith.constant 0 : i32
    %c0_i32_0 = arith.constant 0 : i32
    %c0_i32_1 = arith.constant 0 : i32
    return %c0_i32, %c0_i32_0 : i32, i32
  }
  func.func @transform_20(%arg0: i32) -> (i32, i32, i32) {
    %c0_i32 = arith.constant 0 : i32
    %c0_i32_0 = arith.constant 0 : i32
    %c0_i32_1 = arith.constant 0 : i32
    return %arg0, %c0_i32, %c0_i32_0 : i32, i32, i32
  }
}

</mosaic_0001>

<llo_original>
// kernel: tpu_custom_call.1
$region0: #{tpu_custom_call.1}
  #allocation0 [shape = 'u32[]', space=smem, size = 0x4, offset = 0x4, fixed_abs, tag = 'smem constant byte address 0x4 - core index']
  #allocation1 [shape = 'u32[144,128]{1,0:T(1,128)}', space=vmem, size = 0x12000, scoped, tag = 'internal scratch']
  #allocation2 [shape = 'f32[22,32]{1,0:T(8,128)}', space=vmem, size = 0x3000, scoped, tag = 'scratch operand']
  #allocation3 [shape = 'f32[16,32]{1,0:T(8,128)}', space=vmem, size = 0x2000, scoped, tag = 'scratch operand']
  %s0 = inlined_call_operand.hbm [shape: f32[2,16,32], index: 0, kind: input, shape index: {}]
  %s1 = inlined_call_operand.hbm [shape: f32[2,1,16], index: 1, kind: input, shape index: {}]
  %s2 = inlined_call_operand.vmem [shape: f32[16,32], index: 2, kind: input, shape index: {}]
  %s3 = inlined_call_operand.hbm [shape: f32[2,1,32], index: 3, kind: input, shape index: {}]
  %s4 = inlined_call_operand.hbm [shape: f32[2,1,32], index: 4, kind: input, shape index: {}]
  %s5 = inlined_call_operand.vmem [shape: f32[2,7,32], index: 5, kind: input, shape index: {}]
  %s6 = inlined_call_operand.vmem [shape: bf16[2,32,32], index: 6, kind: input, shape index: {}]
  %s7 = inlined_call_operand.hbm [shape: f32[2,1,32], index: 7, kind: input, shape index: {}]
  %s8 = inlined_call_operand.hbm [shape: f32[1,32], index: 8, kind: input, shape index: {}]
  %s9 = inlined_call_operand.hbm [shape: f32[1,32], index: 9, kind: input, shape index: {}]
  %s10 = inlined_call_operand.vmem [shape: bf16[32,96], index: 10, kind: input, shape index: {}]
  %s11 = inlined_call_operand.vmem [shape: f32[1,96], index: 11, kind: input, shape index: {}]
  %s12 = inlined_call_operand.hbm [shape: bf16[32,32], index: 12, kind: input, shape index: {}]
  %s13 = inlined_call_operand.vmem [shape: f32[1,32], index: 13, kind: input, shape index: {}]
  %s14 = inlined_call_operand.hbm [shape: f32[1,32], index: 14, kind: input, shape index: {}]
  %s15 = inlined_call_operand.hbm [shape: f32[1,32], index: 15, kind: input, shape index: {}]
  %s16 = inlined_call_operand.vmem [shape: bf16[32,32], index: 16, kind: input, shape index: {}]
  %s17 = inlined_call_operand.hbm [shape: f32[1,32], index: 17, kind: input, shape index: {}]
  %s18 = inlined_call_operand.vmem [shape: bf16[32,32], index: 18, kind: input, shape index: {}]
  %s19 = inlined_call_operand.vmem [shape: f32[1,32], index: 19, kind: input, shape index: {}]
  %s20 = inlined_call_operand.hbm [shape: f32[2,16,32], index: 20, kind: output, shape index: {}]
  %s21 = sld [smem:[#allocation0]]
  $region157: #{tpu_custom_call.1} parent=0
    _
  %s23 = ssub.s32 1, %s21
  %s24 = scalar_select 0, %s23, %s21
  $region1: #{tpu_custom_call.1} parent=0
    #allocation4 [shape = 'u8[16384]{0}', space=vmem, size = 0x4000, scoped, tag = 'input window, operand 0']
    #allocation5 [shape = 's32[2]{0}', space=sflag, size = 0x8, scoped, tag = 'scoped memory for tpu_custom_call.1']
    #allocation6 [shape = 's32[2]{0}', space=sflag, size = 0x8, scoped, tag = 'scoped memory for tpu_custom_call.1']
    #allocation7 [shape = 'u8[1024]{0}', space=vmem, size = 0x400, scoped, tag = 'input window, operand 1']
    #allocation8 [shape = 's32[2]{0}', space=sflag, size = 0x8, scoped, tag = 'scoped memory for tpu_custom_call.1']
    #allocation9 [shape = 'u8[1024]{0}', space=vmem, size = 0x400, scoped, tag = 'input window, operand 3, single buffered']
    #allocation10 [shape = 'u8[1024]{0}', space=vmem, size = 0x400, scoped, tag = 'input window, operand 4, single buffered']
    #allocation11 [shape = 's32[1]{0}', space=sflag, size = 0x4, scoped, tag = 'scoped memory for tpu_custom_call.1']
    #allocation12 [shape = 'u8[1024]{0}', space=vmem, size = 0x400, scoped, tag = 'input window, operand 7, single buffered']
    #allocation13 [shape = 'u8[512]{0}', space=vmem, size = 0x400, scoped, tag = 'input window, operand 8, single buffered']
    #allocation14 [shape = 's32[1]{0}', space=sflag, size = 0x4, scoped, tag = 'scoped memory for tpu_custom_call.1']
    #allocation15 [shape = 'u8[512]{0}', space=vmem, size = 0x400, scoped, tag = 'input window, operand 9, single buffered']
    #allocation16 [shape = 'u8[8192]{0}', space=vmem, size = 0x2000, scoped, tag = 'input window, operand 12, single buffered']
    #allocation17 [shape = 's32[1]{0}', space=sflag, size = 0x4, scoped, tag = 'scoped memory for tpu_custom_call.1']
    #allocation18 [shape = 'u8[512]{0}', space=vmem, size = 0x400, scoped, tag = 'input window, operand 14, single buffered']
    #allocation19 [shape = 'u8[512]{0}', space=vmem, size = 0x400, scoped, tag = 'input window, operand 15, single buffered']
    #allocation20 [shape = 's32[1]{0}', space=sflag, size = 0x4, scoped, tag = 'scoped memory for tpu_custom_call.1']
    #allocation21 [shape = 'u8[512]{0}', space=vmem, size = 0x400, scoped, tag = 'input window, operand 17, single buffered']
    #allocation22 [shape = 'u8[16384]{0}', space=vmem, size = 0x4000, scoped, tag = 'output window, operand 0']
    %25 = vsyncpa [#allocation5], 0
    %s26 = scalar_lea.sflag [#allocation5], 1
    %27 = vsyncpa %s26, 0
    %28 = vsyncpa [#allocation8], 0
    %s29 = scalar_lea.sflag [#allocation8], 1
    %30 = vsyncpa %s29, 0
    %31 = vsyncpa [#allocation11], 0
    %32 = vsyncpa [#allocation14], 0
    %33 = vsyncpa [#allocation17], 0
    %34 = vsyncpa [#allocation20], 0
    %35 = vsyncpa [#allocation6], 0
    %s36 = scalar_lea.sflag [#allocation6], 1
    %37 = vsyncpa %s36, 0
    loop: start=0, step=1, limit=4
    $region2: #{tpu_custom_call.1} parent=1 // loop_pre_header
      _
    $region3: #{tpu_custom_call.1} parent=1 // loop_header
      %s39 = sphi 0, %s43
      %p40 = scmp.ge.s32.totalorder %s39, 4
      %s49 = sphi 0, %s51
      %s52 = sphi 0, %s49
      %s53 = sphi 0, %s52
      %s69 = sphi 0, %s53
      %s75 = sphi 0, %s77
      %s78 = sphi 0, %s75
      %s79 = sphi 0, %s78
      %s95 = sphi 0, %s79
      %s99 = sphi 0, %s99
      %s101 = sphi 0, %s99
      %s102 = sphi 0, %s101
      %s116 = sphi 0, %s102
      %s120 = sphi 0, %s120
      %s122 = sphi 0, %s120
      %s123 = sphi 0, %s122
      %s137 = sphi 0, %s123
      %s141 = sphi 0, %s141
      %s143 = sphi 0, %s141
      %s144 = sphi 0, %s143
      %s158 = sphi 0, %s144
      %s162 = sphi 0, %s162
      %s164 = sphi 0, %s162
      %s165 = sphi 0, %s164
      %s179 = sphi 0, %s165
      %s183 = sphi 0, %s183
      %s185 = sphi 0, %s183
      %s186 = sphi 0, %s185
      %s200 = sphi 0, %s186
      %s204 = sphi 0, %s204
      %s206 = sphi 0, %s204
      %s207 = sphi 0, %s206
      %s221 = sphi 0, %s207
      %s225 = sphi 0, %s225
      %s227 = sphi 0, %s225
      %s228 = sphi 0, %s227
      %s242 = sphi 0, %s228
      %s246 = sphi 0, %s246
      %s248 = sphi 0, %s246
      %s249 = sphi 0, %s248
      %s263 = sphi 0, %s249
      %s267 = sphi 0, %s267
      %s269 = sphi 0, %s267
      %s270 = sphi 0, %s269
      %s284 = sphi 0, %s270
      %s288 = sphi 0, %s288
      %s290 = sphi 0, %s288
      %s291 = sphi 0, %s290
      %s305 = sphi 0, %s291
      %s309 = sphi 0, %s309
      %s311 = sphi 0, %s309
      %s312 = sphi 0, %s311
      %s326 = sphi 0, %s312
      %s330 = sphi 0, %s330
      %s332 = sphi 0, %s330
      %s333 = sphi 0, %s332
      %s347 = sphi 0, %s333
      %s351 = sphi 0, %s351
      %s353 = sphi 0, %s351
      %s354 = sphi 0, %s353
      %s368 = sphi 0, %s354
      %s372 = sphi 0, %s372
      %s374 = sphi 0, %s372
      %s375 = sphi 0, %s374
      %s389 = sphi 0, %s375
      %s393 = sphi 0, %s393
      %s395 = sphi 0, %s393
      %s396 = sphi 0, %s395
      %s410 = sphi 0, %s396
      %s414 = sphi 0, %s414
      %s416 = sphi 0, %s414
      %s417 = sphi 0, %s416
      %s431 = sphi 0, %s417
      %s435 = sphi 0, %s435
      %s437 = sphi 0, %s435
      %s438 = sphi 0, %s437
      %s452 = sphi 0, %s438
      %s456 = sphi 0, %s456
      %s458 = sphi 0, %s456
      %s459 = sphi 0, %s458
      %s473 = sphi 0, %s459
      %s479 = sphi 0, %s481
      %s482 = sphi 0, %s479
      %s483 = sphi 0, %s482
      %s499 = sphi 0, %s483
    $region4: #{tpu_custom_call.1} parent=1 // loop_header_branch
      %42 = sbr.rel (%p40) target = $region8
    $region5: #{tpu_custom_call.1} parent=1 // loop_body
      %s44 = ssub.s32 %s39, 1
      %s45 = ssub.s32 %s39, 2
      %s46 = sadd.s32 %s39, 1
      %s47 = ssub.s32 %s39, %s46
      %p48 = scmp.eq.s32.totalorder %s47, 0
      %s50 = sadd.s32 %s49, 1
      %s51 = scalar_select %p48, %s49, %s50
      %p54 = pneg %p48
      %p55 = scmp.eq.s32.totalorder %s39, 1
      %p56 = por %p54, %p55
      %p57 = scmp.ne.s32.totalorder %s49, %s52
      %p58 = scmp.eq.s32.totalorder %s39, 0
      %p59 = por %p57, %p58
      %p60 = scmp.ne.s32.totalorder %s49, %s52
      %p61 = scmp.eq.s32.totalorder %s44, 1
      %p62 = por %p60, %p61
      %p63 = scmp.ne.s32.totalorder %s52, %s53
      %p64 = scmp.eq.s32.totalorder %s44, 0
      %p65 = por %p63, %p64
      %p66 = scmp.ne.s32.totalorder %s52, %s53
      %p67 = scmp.eq.s32.totalorder %s45, 1
      %p68 = por %p66, %p67
      %p70 = scmp.ne.s32.totalorder %s53, %s69
      %p71 = scmp.eq.s32.totalorder %s45, 0
      %p72 = por %p70, %p71
      %s73 = ssub.s32 %s39, %s46
      %p74 = scmp.eq.s32.totalorder %s73, 0
      %s76 = sadd.s32 %s75, 1
      %s77 = scalar_select %p74, %s75, %s76
      %p80 = pneg %p74
      %p81 = scmp.eq.s32.totalorder %s39, 1
      %p82 = por %p80, %p81
      %p83 = scmp.ne.s32.totalorder %s75, %s78
      %p84 = scmp.eq.s32.totalorder %s39, 0
      %p85 = por %p83, %p84
      %p86 = scmp.ne.s32.totalorder %s75, %s78
      %p87 = scmp.eq.s32.totalorder %s44, 1
      %p88 = por %p86, %p87
      %p89 = scmp.ne.s32.totalorder %s78, %s79
      %p90 = scmp.eq.s32.totalorder %s44, 0
      %p91 = por %p89, %p90
      %p92 = scmp.ne.s32.totalorder %s78, %s79
      %p93 = scmp.eq.s32.totalorder %s45, 1
      %p94 = por %p92, %p93
      %p96 = scmp.ne.s32.totalorder %s79, %s95
      %p97 = scmp.eq.s32.totalorder %s45, 0
      %p98 = por %p96, %p97
      %s100 = sadd.s32 %s99, 1
      %p103 = scmp.eq.s32.totalorder %s39, 1
      %p104 = scmp.ne.s32.totalorder %s99, %s101
      %p105 = scmp.eq.s32.totalorder %s39, 0
      %p106 = por %p104, %p105
      %p107 = scmp.ne.s32.totalorder %s99, %s101
      %p108 = scmp.eq.s32.totalorder %s44, 1
      %p109 = por %p107, %p108
      %p110 = scmp.ne.s32.totalorder %s101, %s102
      %p111 = scmp.eq.s32.totalorder %s44, 0
      %p112 = por %p110, %p111
      %p113 = scmp.ne.s32.totalorder %s101, %s102
      %p114 = scmp.eq.s32.totalorder %s45, 1
      %p115 = por %p113, %p114
      %p117 = scmp.ne.s32.totalorder %s102, %s116
      %p118 = scmp.eq.s32.totalorder %s45, 0
      %p119 = por %p117, %p118
      %s121 = sadd.s32 %s120, 1
      %p124 = scmp.eq.s32.totalorder %s39, 1
      %p125 = scmp.ne.s32.totalorder %s120, %s122
      %p126 = scmp.eq.s32.totalorder %s39, 0
      %p127 = por %p125, %p126
      %p128 = scmp.ne.s32.totalorder %s120, %s122
      %p129 = scmp.eq.s32.totalorder %s44, 1
      %p130 = por %p128, %p129
      %p131 = scmp.ne.s32.totalorder %s122, %s123
      %p132 = scmp.eq.s32.totalorder %s44, 0
      %p133 = por %p131, %p132
      %p134 = scmp.ne.s32.totalorder %s122, %s123
      %p135 = scmp.eq.s32.totalorder %s45, 1
      %p136 = por %p134, %p135
      %p138 = scmp.ne.s32.totalorder %s123, %s137
      %p139 = scmp.eq.s32.totalorder %s45, 0
      %p140 = por %p138, %p139
      %s142 = sadd.s32 %s141, 1
      %p145 = scmp.eq.s32.totalorder %s39, 1
      %p146 = scmp.ne.s32.totalorder %s141, %s143
      %p147 = scmp.eq.s32.totalorder %s39, 0
      %p148 = por %p146, %p147
      %p149 = scmp.ne.s32.totalorder %s141, %s143
      %p150 = scmp.eq.s32.totalorder %s44, 1
      %p151 = por %p149, %p150
      %p152 = scmp.ne.s32.totalorder %s143, %s144
      %p153 = scmp.eq.s32.totalorder %s44, 0
      %p154 = por %p152, %p153
      %p155 = scmp.ne.s32.totalorder %s143, %s144
      %p156 = scmp.eq.s32.totalorder %s45, 1
      %p157 = por %p155, %p156
      %p159 = scmp.ne.s32.totalorder %s144, %s158
      %p160 = scmp.eq.s32.totalorder %s45, 0
      %p161 = por %p159, %p160
      %s163 = sadd.s32 %s162, 1
      %p166 = scmp.eq.s32.totalorder %s39, 1
      %p167 = scmp.ne.s32.totalorder %s162, %s164
      %p168 = scmp.eq.s32.totalorder %s39, 0
      %p169 = por %p167, %p168
      %p170 = scmp.ne.s32.totalorder %s162, %s164
      %p171 = scmp.eq.s32.totalorder %s44, 1
      %p172 = por %p170, %p171
      %p173 = scmp.ne.s32.totalorder %s164, %s165
      %p174 = scmp.eq.s32.totalorder %s44, 0
      %p175 = por %p173, %p174
      %p176 = scmp.ne.s32.totalorder %s164, %s165
      %p177 = scmp.eq.s32.totalorder %s45, 1
      %p178 = por %p176, %p177
      %p180 = scmp.ne.s32.totalorder %s165, %s179
      %p181 = scmp.eq.s32.totalorder %s45, 0
      %p182 = por %p180, %p181
      %s184 = sadd.s32 %s183, 1
      %p187 = scmp.eq.s32.totalorder %s39, 1
      %p188 = scmp.ne.s32.totalorder %s183, %s185
      %p189 = scmp.eq.s32.totalorder %s39, 0
      %p190 = por %p188, %p189
      %p191 = scmp.ne.s32.totalorder %s183, %s185
      %p192 = scmp.eq.s32.totalorder %s44, 1
      %p193 = por %p191, %p192
      %p194 = scmp.ne.s32.totalorder %s185, %s186
      %p195 = scmp.eq.s32.totalorder %s44, 0
      %p196 = por %p194, %p195
      %p197 = scmp.ne.s32.totalorder %s185, %s186
      %p198 = scmp.eq.s32.totalorder %s45, 1
      %p199 = por %p197, %p198
      %p201 = scmp.ne.s32.totalorder %s186, %s200
      %p202 = scmp.eq.s32.totalorder %s45, 0
      %p203 = por %p201, %p202
      %s205 = sadd.s32 %s204, 1
      %p208 = scmp.eq.s32.totalorder %s39, 1
      %p209 = scmp.ne.s32.totalorder %s204, %s206
      %p210 = scmp.eq.s32.totalorder %s39, 0
      %p211 = por %p209, %p210
      %p212 = scmp.ne.s32.totalorder %s204, %s206
      %p213 = scmp.eq.s32.totalorder %s44, 1
      %p214 = por %p212, %p213
      %p215 = scmp.ne.s32.totalorder %s206, %s207
      %p216 = scmp.eq.s32.totalorder %s44, 0
      %p217 = por %p215, %p216
      %p218 = scmp.ne.s32.totalorder %s206, %s207
      %p219 = scmp.eq.s32.totalorder %s45, 1
      %p220 = por %p218, %p219
      %p222 = scmp.ne.s32.totalorder %s207, %s221
      %p223 = scmp.eq.s32.totalorder %s45, 0
      %p224 = por %p222, %p223
      %s226 = sadd.s32 %s225, 1
      %p229 = scmp.eq.s32.totalorder %s39, 1
      %p230 = scmp.ne.s32.totalorder %s225, %s227
      %p231 = scmp.eq.s32.totalorder %s39, 0
      %p232 = por %p230, %p231
      %p233 = scmp.ne.s32.totalorder %s225, %s227
      %p234 = scmp.eq.s32.totalorder %s44, 1
      %p235 = por %p233, %p234
      %p236 = scmp.ne.s32.totalorder %s227, %s228
      %p237 = scmp.eq.s32.totalorder %s44, 0
      %p238 = por %p236, %p237
      %p239 = scmp.ne.s32.totalorder %s227, %s228
      %p240 = scmp.eq.s32.totalorder %s45, 1
      %p241 = por %p239, %p240
      %p243 = scmp.ne.s32.totalorder %s228, %s242
      %p244 = scmp.eq.s32.totalorder %s45, 0
      %p245 = por %p243, %p244
      %s247 = sadd.s32 %s246, 1
      %p250 = scmp.eq.s32.totalorder %s39, 1
      %p251 = scmp.ne.s32.totalorder %s246, %s248
      %p252 = scmp.eq.s32.totalorder %s39, 0
      %p253 = por %p251, %p252
      %p254 = scmp.ne.s32.totalorder %s246, %s248
      %p255 = scmp.eq.s32.totalorder %s44, 1
      %p256 = por %p254, %p255
      %p257 = scmp.ne.s32.totalorder %s248, %s249
      %p258 = scmp.eq.s32.totalorder %s44, 0
      %p259 = por %p257, %p258
      %p260 = scmp.ne.s32.totalorder %s248, %s249
      %p261 = scmp.eq.s32.totalorder %s45, 1
      %p262 = por %p260, %p261
      %p264 = scmp.ne.s32.totalorder %s249, %s263
      %p265 = scmp.eq.s32.totalorder %s45, 0
      %p266 = por %p264, %p265
      %s268 = sadd.s32 %s267, 1
      %p271 = scmp.eq.s32.totalorder %s39, 1
      %p272 = scmp.ne.s32.totalorder %s267, %s269
      %p273 = scmp.eq.s32.totalorder %s39, 0
      %p274 = por %p272, %p273
      %p275 = scmp.ne.s32.totalorder %s267, %s269
      %p276 = scmp.eq.s32.totalorder %s44, 1
      %p277 = por %p275, %p276
      %p278 = scmp.ne.s32.totalorder %s269, %s270
      %p279 = scmp.eq.s32.totalorder %s44, 0
      %p280 = por %p278, %p279
      %p281 = scmp.ne.s32.totalorder %s269, %s270
      %p282 = scmp.eq.s32.totalorder %s45, 1
      %p283 = por %p281, %p282
      %p285 = scmp.ne.s32.totalorder %s270, %s284
      %p286 = scmp.eq.s32.totalorder %s45, 0
      %p287 = por %p285, %p286
      %s289 = sadd.s32 %s288, 1
      %p292 = scmp.eq.s32.totalorder %s39, 1
      %p293 = scmp.ne.s32.totalorder %s288, %s290
      %p294 = scmp.eq.s32.totalorder %s39, 0
      %p295 = por %p293, %p294
      %p296 = scmp.ne.s32.totalorder %s288, %s290
      %p297 = scmp.eq.s32.totalorder %s44, 1
      %p298 = por %p296, %p297
      %p299 = scmp.ne.s32.totalorder %s290, %s291
      %p300 = scmp.eq.s32.totalorder %s44, 0
      %p301 = por %p299, %p300
      %p302 = scmp.ne.s32.totalorder %s290, %s291
      %p303 = scmp.eq.s32.totalorder %s45, 1
      %p304 = por %p302, %p303
      %p306 = scmp.ne.s32.totalorder %s291, %s305
      %p307 = scmp.eq.s32.totalorder %s45, 0
      %p308 = por %p306, %p307
      %s310 = sadd.s32 %s309, 1
      %p313 = scmp.eq.s32.totalorder %s39, 1
      %p314 = scmp.ne.s32.totalorder %s309, %s311
      %p315 = scmp.eq.s32.totalorder %s39, 0
      %p316 = por %p314, %p315
      %p317 = scmp.ne.s32.totalorder %s309, %s311
      %p318 = scmp.eq.s32.totalorder %s44, 1
      %p319 = por %p317, %p318
      %p320 = scmp.ne.s32.totalorder %s311, %s312
      %p321 = scmp.eq.s32.totalorder %s44, 0
      %p322 = por %p320, %p321
      %p323 = scmp.ne.s32.totalorder %s311, %s312
      %p324 = scmp.eq.s32.totalorder %s45, 1
      %p325 = por %p323, %p324
      %p327 = scmp.ne.s32.totalorder %s312, %s326
      %p328 = scmp.eq.s32.totalorder %s45, 0
      %p329 = por %p327, %p328
      %s331 = sadd.s32 %s330, 1
      %p334 = scmp.eq.s32.totalorder %s39, 1
      %p335 = scmp.ne.s32.totalorder %s330, %s332
      %p336 = scmp.eq.s32.totalorder %s39, 0
      %p337 = por %p335, %p336
      %p338 = scmp.ne.s32.totalorder %s330, %s332
      %p339 = scmp.eq.s32.totalorder %s44, 1
      %p340 = por %p338, %p339
      %p341 = scmp.ne.s32.totalorder %s332, %s333
      %p342 = scmp.eq.s32.totalorder %s44, 0
      %p343 = por %p341, %p342
      %p344 = scmp.ne.s32.totalorder %s332, %s333
      %p345 = scmp.eq.s32.totalorder %s45, 1
      %p346 = por %p344, %p345
      %p348 = scmp.ne.s32.totalorder %s333, %s347
      %p349 = scmp.eq.s32.totalorder %s45, 0
      %p350 = por %p348, %p349
      %s352 = sadd.s32 %s351, 1
      %p355 = scmp.eq.s32.totalorder %s39, 1
      %p356 = scmp.ne.s32.totalorder %s351, %s353
      %p357 = scmp.eq.s32.totalorder %s39, 0
      %p358 = por %p356, %p357
      %p359 = scmp.ne.s32.totalorder %s351, %s353
      %p360 = scmp.eq.s32.totalorder %s44, 1
      %p361 = por %p359, %p360
      %p362 = scmp.ne.s32.totalorder %s353, %s354
      %p363 = scmp.eq.s32.totalorder %s44, 0
      %p364 = por %p362, %p363
      %p365 = scmp.ne.s32.totalorder %s353, %s354
      %p366 = scmp.eq.s32.totalorder %s45, 1
      %p367 = por %p365, %p366
      %p369 = scmp.ne.s32.totalorder %s354, %s368
      %p370 = scmp.eq.s32.totalorder %s45, 0
      %p371 = por %p369, %p370
      %s373 = sadd.s32 %s372, 1
      %p376 = scmp.eq.s32.totalorder %s39, 1
      %p377 = scmp.ne.s32.totalorder %s372, %s374
      %p378 = scmp.eq.s32.totalorder %s39, 0
      %p379 = por %p377, %p378
      %p380 = scmp.ne.s32.totalorder %s372, %s374
      %p381 = scmp.eq.s32.totalorder %s44, 1
      %p382 = por %p380, %p381
      %p383 = scmp.ne.s32.totalorder %s374, %s375
      %p384 = scmp.eq.s32.totalorder %s44, 0
      %p385 = por %p383, %p384
      %p386 = scmp.ne.s32.totalorder %s374, %s375
      %p387 = scmp.eq.s32.totalorder %s45, 1
      %p388 = por %p386, %p387
      %p390 = scmp.ne.s32.totalorder %s375, %s389
      %p391 = scmp.eq.s32.totalorder %s45, 0
      %p392 = por %p390, %p391
      %s394 = sadd.s32 %s393, 1
      %p397 = scmp.eq.s32.totalorder %s39, 1
      %p398 = scmp.ne.s32.totalorder %s393, %s395
      %p399 = scmp.eq.s32.totalorder %s39, 0
      %p400 = por %p398, %p399
      %p401 = scmp.ne.s32.totalorder %s393, %s395
      %p402 = scmp.eq.s32.totalorder %s44, 1
      %p403 = por %p401, %p402
      %p404 = scmp.ne.s32.totalorder %s395, %s396
      %p405 = scmp.eq.s32.totalorder %s44, 0
      %p406 = por %p404, %p405
      %p407 = scmp.ne.s32.totalorder %s395, %s396
      %p408 = scmp.eq.s32.totalorder %s45, 1
      %p409 = por %p407, %p408
      %p411 = scmp.ne.s32.totalorder %s396, %s410
      %p412 = scmp.eq.s32.totalorder %s45, 0
      %p413 = por %p411, %p412
      %s415 = sadd.s32 %s414, 1
      %p418 = scmp.eq.s32.totalorder %s39, 1
      %p419 = scmp.ne.s32.totalorder %s414, %s416
      %p420 = scmp.eq.s32.totalorder %s39, 0
      %p421 = por %p419, %p420
      %p422 = scmp.ne.s32.totalorder %s414, %s416
      %p423 = scmp.eq.s32.totalorder %s44, 1
      %p424 = por %p422, %p423
      %p425 = scmp.ne.s32.totalorder %s416, %s417
      %p426 = scmp.eq.s32.totalorder %s44, 0
      %p427 = por %p425, %p426
      %p428 = scmp.ne.s32.totalorder %s416, %s417
      %p429 = scmp.eq.s32.totalorder %s45, 1
      %p430 = por %p428, %p429
      %p432 = scmp.ne.s32.totalorder %s417, %s431
      %p433 = scmp.eq.s32.totalorder %s45, 0
      %p434 = por %p432, %p433
      %s436 = sadd.s32 %s435, 1
      %p439 = scmp.eq.s32.totalorder %s39, 1
      %p440 = scmp.ne.s32.totalorder %s435, %s437
      %p441 = scmp.eq.s32.totalorder %s39, 0
      %p442 = por %p440, %p441
      %p443 = scmp.ne.s32.totalorder %s435, %s437
      %p444 = scmp.eq.s32.totalorder %s44, 1
      %p445 = por %p443, %p444
      %p446 = scmp.ne.s32.totalorder %s437, %s438
      %p447 = scmp.eq.s32.totalorder %s44, 0
      %p448 = por %p446, %p447
      %p449 = scmp.ne.s32.totalorder %s437, %s438
      %p450 = scmp.eq.s32.totalorder %s45, 1
      %p451 = por %p449, %p450
      %p453 = scmp.ne.s32.totalorder %s438, %s452
      %p454 = scmp.eq.s32.totalorder %s45, 0
      %p455 = por %p453, %p454
      %s457 = sadd.s32 %s456, 1
      %p460 = scmp.eq.s32.totalorder %s39, 1
      %p461 = scmp.ne.s32.totalorder %s456, %s458
      %p462 = scmp.eq.s32.totalorder %s39, 0
      %p463 = por %p461, %p462
      %p464 = scmp.ne.s32.totalorder %s456, %s458
      %p465 = scmp.eq.s32.totalorder %s44, 1
      %p466 = por %p464, %p465
      %p467 = scmp.ne.s32.totalorder %s458, %s459
      %p468 = scmp.eq.s32.totalorder %s44, 0
      %p469 = por %p467, %p468
      %p470 = scmp.ne.s32.totalorder %s458, %s459
      %p471 = scmp.eq.s32.totalorder %s45, 1
      %p472 = por %p470, %p471
      %p474 = scmp.ne.s32.totalorder %s459, %s473
      %p475 = scmp.eq.s32.totalorder %s45, 0
      %p476 = por %p474, %p475
      %s477 = ssub.s32 %s39, %s46
      %p478 = scmp.eq.s32.totalorder %s477, 0
      %s480 = sadd.s32 %s479, 1
      %s481 = scalar_select %p478, %s479, %s480
      %p484 = pneg %p478
      %p485 = scmp.eq.s32.totalorder %s39, 1
      %p486 = por %p484, %p485
      %p487 = scmp.ne.s32.totalorder %s479, %s482
      %p488 = scmp.eq.s32.totalorder %s39, 0
      %p489 = por %p487, %p488
      %p490 = scmp.ne.s32.totalorder %s479, %s482
      %p491 = scmp.eq.s32.totalorder %s44, 1
      %p492 = por %p490, %p491
      %p493 = scmp.ne.s32.totalorder %s482, %s483
      %p494 = scmp.eq.s32.totalorder %s44, 0
      %p495 = por %p493, %p494
      %p496 = scmp.ne.s32.totalorder %s482, %s483
      %p497 = scmp.eq.s32.totalorder %s45, 1
      %p498 = por %p496, %p497
      %p500 = scmp.ne.s32.totalorder %s483, %s499
      %p501 = scmp.eq.s32.totalorder %s45, 0
      %p502 = por %p500, %p501
      %p503 = scmp.le.s32.totalorder 1, %s39
      %p504 = scmp.lt.s32.totalorder %s39, 3
      %p505 = pnand %p503, %p504
      %p506 = pneg %p505
      // Predicated region
      $region9: #{tpu_custom_call.1} parent=5 // pred_check
        _
      $region10: #{tpu_custom_call.1} parent=5 // pred_check_branch
        %508 = sbr.rel (%p505) target = $region12
      $region11: #{tpu_custom_call.1} parent=5 // pred_region
        %s509 = ssub.s32 %s39, 1
        // Predicated region
        $region13: #{tpu_custom_call.1} parent=11 // pred_check
          %p510 = pneg %p112
        $region14: #{tpu_custom_call.1} parent=11 // pred_check_branch
          %512 = sbr.rel (%p510) target = $region16
        $region15: #{tpu_custom_call.1} parent=11 // pred_region
          _
        $region16: #{tpu_custom_call.1} parent=11 // pred_fallthru
          _
        // Predicated region
        $region17: #{tpu_custom_call.1} parent=11 // pred_check
          %p513 = pneg %p133
        $region18: #{tpu_custom_call.1} parent=11 // pred_check_branch
          %515 = sbr.rel (%p513) target = $region20
        $region19: #{tpu_custom_call.1} parent=11 // pred_region
          %s517 = ssub.s32 32, 32
          %518 = vsyncadd [#allocation8], %s517
          %s519 = sshll.u32 [#allocation9], 4
          %s520 = int_to_ptr.vmem [resolvable:$true] %s519
          %525 = dma.hbm_to_vmem [thread:$0]  %s3, 32, %s520, [#allocation8], 16, 16, 1
        $region20: #{tpu_custom_call.1} parent=11 // pred_fallthru
          _
        // Predicated region
        $region21: #{tpu_custom_call.1} parent=11 // pred_check
          %p526 = pneg %p154
        $region22: #{tpu_custom_call.1} parent=11 // pred_check_branch
          %528 = sbr.rel (%p526) target = $region24
        $region23: #{tpu_custom_call.1} parent=11 // pred_region
          %s530 = ssub.s32 32, 32
          %531 = vsyncadd [#allocation11], %s530
          %s532 = sshll.u32 [#allocation10], 4
          %s533 = int_to_ptr.vmem [resolvable:$true] %s532
          %538 = dma.hbm_to_vmem [thread:$0]  %s4, 32, %s533, [#allocation11], 16, 16, 1
        $region24: #{tpu_custom_call.1} parent=11 // pred_fallthru
          _
        // Predicated region
        $region25: #{tpu_custom_call.1} parent=11 // pred_check
          %p539 = pneg %p175
        $region26: #{tpu_custom_call.1} parent=11 // pred_check_branch
          %541 = sbr.rel (%p539) target = $region28
        $region27: #{tpu_custom_call.1} parent=11 // pred_region
          _
        $region28: #{tpu_custom_call.1} parent=11 // pred_fallthru
          _
        // Predicated region
        $region29: #{tpu_custom_call.1} parent=11 // pred_check
          %p542 = pneg %p196
        $region30: #{tpu_custom_call.1} parent=11 // pred_check_branch
          %544 = sbr.rel (%p542) target = $region32
        $region31: #{tpu_custom_call.1} parent=11 // pred_region
          _
        $region32: #{tpu_custom_call.1} parent=11 // pred_fallthru
          _
        // Predicated region
        $region33: #{tpu_custom_call.1} parent=11 // pred_check
          %p545 = pneg %p217
        $region34: #{tpu_custom_call.1} parent=11 // pred_check_branch
          %547 = sbr.rel (%p545) target = $region36
        $region35: #{tpu_custom_call.1} parent=11 // pred_region
          %s549 = ssub.s32 32, 32
          %550 = vsyncadd [#allocation11], %s549
          %s551 = sshll.u32 [#allocation12], 4
          %s552 = int_to_ptr.vmem [resolvable:$true] %s551
          %557 = dma.hbm_to_vmem [thread:$0]  %s7, 32, %s552, [#allocation11], 16, 16, 1
        $region36: #{tpu_custom_call.1} parent=11 // pred_fallthru
          _
        // Predicated region
        $region37: #{tpu_custom_call.1} parent=11 // pred_check
          %p558 = pneg %p238
        $region38: #{tpu_custom_call.1} parent=11 // pred_check_branch
          %560 = sbr.rel (%p558) target = $region40
        $region39: #{tpu_custom_call.1} parent=11 // pred_region
          %s562 = ssub.s32 16, 16
          %563 = vsyncadd [#allocation14], %s562
          %s565 = sshll.u32 [#allocation13], 4
          %s566 = int_to_ptr.vmem [resolvable:$true] %s565
          %568 = dma.hbm_to_vmem [thread:$0]  %s8, 16, %s566, [#allocation14]
        $region40: #{tpu_custom_call.1} parent=11 // pred_fallthru
          _
        // Predicated region
        $region41: #{tpu_custom_call.1} parent=11 // pred_check
          %p569 = pneg %p259
        $region42: #{tpu_custom_call.1} parent=11 // pred_check_branch
          %571 = sbr.rel (%p569) target = $region44
        $region43: #{tpu_custom_call.1} parent=11 // pred_region
          %s573 = ssub.s32 16, 16
          %574 = vsyncadd [#allocation14], %s573
          %s576 = sshll.u32 [#allocation15], 4
          %s577 = int_to_ptr.vmem [resolvable:$true] %s576
          %579 = dma.hbm_to_vmem [thread:$0]  %s9, 16, %s577, [#allocation14]
        $region44: #{tpu_custom_call.1} parent=11 // pred_fallthru
          _
        // Predicated region
        $region45: #{tpu_custom_call.1} parent=11 // pred_check
          %p580 = pneg %p280
        $region46: #{tpu_custom_call.1} parent=11 // pred_check_branch
          %582 = sbr.rel (%p580) target = $region48
        $region47: #{tpu_custom_call.1} parent=11 // pred_region
          _
        $region48: #{tpu_custom_call.1} parent=11 // pred_fallthru
          _
        // Predicated region
        $region49: #{tpu_custom_call.1} parent=11 // pred_check
          %p583 = pneg %p301
        $region50: #{tpu_custom_call.1} parent=11 // pred_check_branch
          %585 = sbr.rel (%p583) target = $region52
        $region51: #{tpu_custom_call.1} parent=11 // pred_region
          _
        $region52: #{tpu_custom_call.1} parent=11 // pred_fallthru
          _
        // Predicated region
        $region53: #{tpu_custom_call.1} parent=11 // pred_check
          %p586 = pneg %p322
        $region54: #{tpu_custom_call.1} parent=11 // pred_check_branch
          %588 = sbr.rel (%p586) target = $region56
        $region55: #{tpu_custom_call.1} parent=11 // pred_region
          %s590 = ssub.s32 256, 256
          %591 = vsyncadd [#allocation17], %s590
          %s592 = sshll.u32 [#allocation16], 4
          %s593 = int_to_ptr.vmem [resolvable:$true] %s592
          %598 = dma.hbm_to_vmem [thread:$0]  %s12, 256, %s593, [#allocation17], 64, 64, 4
        $region56: #{tpu_custom_call.1} parent=11 // pred_fallthru
          _
        // Predicated region
        $region57: #{tpu_custom_call.1} parent=11 // pred_check
          %p599 = pneg %p343
        $region58: #{tpu_custom_call.1} parent=11 // pred_check_branch
          %601 = sbr.rel (%p599) target = $region60
        $region59: #{tpu_custom_call.1} parent=11 // pred_region
          _
        $region60: #{tpu_custom_call.1} parent=11 // pred_fallthru
          _
        // Predicated region
        $region61: #{tpu_custom_call.1} parent=11 // pred_check
          %p602 = pneg %p364
        $region62: #{tpu_custom_call.1} parent=11 // pred_check_branch
          %604 = sbr.rel (%p602) target = $region64
        $region63: #{tpu_custom_call.1} parent=11 // pred_region
          %s606 = ssub.s32 16, 16
          %607 = vsyncadd [#allocation17], %s606
          %s609 = sshll.u32 [#allocation18], 4
          %s610 = int_to_ptr.vmem [resolvable:$true] %s609
          %612 = dma.hbm_to_vmem [thread:$0]  %s14, 16, %s610, [#allocation17]
        $region64: #{tpu_custom_call.1} parent=11 // pred_fallthru
          _
        // Predicated region
        $region65: #{tpu_custom_call.1} parent=11 // pred_check
          %p613 = pneg %p385
        $region66: #{tpu_custom_call.1} parent=11 // pred_check_branch
          %615 = sbr.rel (%p613) target = $region68
        $region67: #{tpu_custom_call.1} parent=11 // pred_region
          %s617 = ssub.s32 16, 16
          %618 = vsyncadd [#allocation20], %s617
          %s620 = sshll.u32 [#allocation19], 4
          %s621 = int_to_ptr.vmem [resolvable:$true] %s620
          %623 = dma.hbm_to_vmem [thread:$0]  %s15, 16, %s621, [#allocation20]
        $region68: #{tpu_custom_call.1} parent=11 // pred_fallthru
          _
        // Predicated region
        $region69: #{tpu_custom_call.1} parent=11 // pred_check
          %p624 = pneg %p406
        $region70: #{tpu_custom_call.1} parent=11 // pred_check_branch
          %626 = sbr.rel (%p624) target = $region72
        $region71: #{tpu_custom_call.1} parent=11 // pred_region
          _
        $region72: #{tpu_custom_call.1} parent=11 // pred_fallthru
          _
        // Predicated region
        $region73: #{tpu_custom_call.1} parent=11 // pred_check
          %p627 = pneg %p427
        $region74: #{tpu_custom_call.1} parent=11 // pred_check_branch
          %629 = sbr.rel (%p627) target = $region76
        $region75: #{tpu_custom_call.1} parent=11 // pred_region
          %s631 = ssub.s32 16, 16
          %632 = vsyncadd [#allocation20], %s631
          %s634 = sshll.u32 [#allocation21], 4
          %s635 = int_to_ptr.vmem [resolvable:$true] %s634
          %637 = dma.hbm_to_vmem [thread:$0]  %s17, 16, %s635, [#allocation20]
        $region76: #{tpu_custom_call.1} parent=11 // pred_fallthru
          _
        // Predicated region
        $region77: #{tpu_custom_call.1} parent=11 // pred_check
          %p638 = pneg %p448
        $region78: #{tpu_custom_call.1} parent=11 // pred_check_branch
          %640 = sbr.rel (%p638) target = $region80
        $region79: #{tpu_custom_call.1} parent=11 // pred_region
          _
        $region80: #{tpu_custom_call.1} parent=11 // pred_fallthru
          _
        // Predicated region
        $region81: #{tpu_custom_call.1} parent=11 // pred_check
          %p641 = pneg %p469
        $region82: #{tpu_custom_call.1} parent=11 // pred_check_branch
          %643 = sbr.rel (%p641) target = $region84
        $region83: #{tpu_custom_call.1} parent=11 // pred_region
          _
        $region84: #{tpu_custom_call.1} parent=11 // pred_fallthru
          _
      $region12: #{tpu_custom_call.1} parent=5 // pred_fallthru
        _
      %p644 = scmp.lt.s32.totalorder %s39, 2
      // Predicated region
      $region85: #{tpu_custom_call.1} parent=5 // pred_check
        %p645 = pneg %p644
      $region86: #{tpu_custom_call.1} parent=5 // pred_check_branch
        %647 = sbr.rel (%p645) target = $region88
      $region87: #{tpu_custom_call.1} parent=5 // pred_region
        // Predicated region
        $region89: #{tpu_custom_call.1} parent=87 // pred_check
          %p648 = pneg %p59
        $region90: #{tpu_custom_call.1} parent=87 // pred_check_branch
          %650 = sbr.rel (%p648) target = $region92
        $region91: #{tpu_custom_call.1} parent=87 // pred_region
          %s651 = sand.u32 %s49, 1
          %s652 = scalar_lea.sflag [#allocation5], %s651
          %s653 = sand.u32 %s49, 1
          %s654 = smul.addr %s653, 16
          %s655 = scalar_lea.vmem [#allocation4], %s654
          %s657 = ssub.s32 256, 256
          %658 = vsyncadd %s652, %s657
          %s659 = smul.addr %s39, 2
          %s660 = smul.addr %s659, 128
          %s661 = scalar_lea.hbm %s0, %s660
          %s662 = sshll.u32 %s655, 4
          %s663 = int_to_ptr.vmem [resolvable:$true] %s662
          %668 = dma.hbm_to_vmem [thread:$0]  %s661, 256, %s663, %s652, 128, 128, 8
        $region92: #{tpu_custom_call.1} parent=87 // pred_fallthru
          _
        // Predicated region
        $region93: #{tpu_custom_call.1} parent=87 // pred_check
          %p669 = pneg %p85
        $region94: #{tpu_custom_call.1} parent=87 // pred_check_branch
          %671 = sbr.rel (%p669) target = $region96
        $region95: #{tpu_custom_call.1} parent=87 // pred_region
          %s672 = sand.u32 %s39, 1
          %s673 = scalar_lea.sflag [#allocation8], %s672
          %s674 = sand.u32 %s75, 1
          %s675 = scalar_lea.vmem [#allocation7], %s674
          %s677 = ssub.s32 16, 16
          %678 = vsyncadd %s673, %s677
          %s679 = smul.addr %s39, 16
          %s680 = scalar_lea.hbm %s1, %s679
          %s682 = sshll.u32 %s675, 4
          %s683 = int_to_ptr.vmem [resolvable:$true] %s682
          %685 = dma.hbm_to_vmem [thread:$0]  %s680, 16, %s683, %s673
        $region96: #{tpu_custom_call.1} parent=87 // pred_fallthru
          _
      $region88: #{tpu_custom_call.1} parent=5 // pred_fallthru
        _
      %p686 = scmp.le.s32.totalorder 1, %s39
      %p687 = scmp.lt.s32.totalorder %s39, 3
      %p688 = pnand %p686, %p687
      %p689 = pneg %p688
      // Predicated region
      $region97: #{tpu_custom_call.1} parent=5 // pred_check
        _
      $region98: #{tpu_custom_call.1} parent=5 // pred_check_branch
        %691 = sbr.rel (%p688) target = $region100
      $region99: #{tpu_custom_call.1} parent=5 // pred_region
        %s692 = ssub.s32 %s39, 1
        %s693 = sand.u32 %s52, 1
        %s694 = scalar_lea.sflag [#allocation5], %s693
        %s695 = sand.u32 %s52, 1
        %s696 = smul.addr %s695, 16
        %s697 = scalar_lea.vmem [#allocation4], %s696
        // Predicated region
        $region101: #{tpu_custom_call.1} parent=99 // pred_check
          %p698 = pneg %p65
        $region102: #{tpu_custom_call.1} parent=99 // pred_check_branch
          %700 = sbr.rel (%p698) target = $region104
        $region103: #{tpu_custom_call.1} parent=99 // pred_region
          %701 = dma.done %s694, 256
        $region104: #{tpu_custom_call.1} parent=99 // pred_fallthru
          _
        %s702 = sand.u32 %s44, 1
        %s703 = scalar_lea.sflag [#allocation8], %s702
        %s704 = sand.u32 %s78, 1
        %s705 = scalar_lea.vmem [#allocation7], %s704
        // Predicated region
        $region105: #{tpu_custom_call.1} parent=99 // pred_check
          %p706 = pneg %p91
        $region106: #{tpu_custom_call.1} parent=99 // pred_check_branch
          %708 = sbr.rel (%p706) target = $region108
        $region107: #{tpu_custom_call.1} parent=99 // pred_region
          %709 = dma.done %s703, 16
        $region108: #{tpu_custom_call.1} parent=99 // pred_fallthru
          _
        // Predicated region
        $region109: #{tpu_custom_call.1} parent=99 // pred_check
          %p710 = pneg %p133
        $region110: #{tpu_custom_call.1} parent=99 // pred_check_branch
          %712 = sbr.rel (%p710) target = $region112
        $region111: #{tpu_custom_call.1} parent=99 // pred_region
          %713 = dma.done [#allocation8], 32
        $region112: #{tpu_custom_call.1} parent=99 // pred_fallthru
          _
        // Predicated region
        $region113: #{tpu_custom_call.1} parent=99 // pred_check
          %p714 = pneg %p154
        $region114: #{tpu_custom_call.1} parent=99 // pred_check_branch
          %716 = sbr.rel (%p714) target = $region116
        $region115: #{tpu_custom_call.1} parent=99 // pred_region
          %717 = dma.done [#allocation11], 32
        $region116: #{tpu_custom_call.1} parent=99 // pred_fallthru
          _
        // Predicated region
        $region117: #{tpu_custom_call.1} parent=99 // pred_check
          %p718 = pneg %p217
        $region118: #{tpu_custom_call.1} parent=99 // pred_check_branch
          %720 = sbr.rel (%p718) target = $region120
        $region119: #{tpu_custom_call.1} parent=99 // pred_region
          %721 = dma.done [#allocation11], 32
        $region120: #{tpu_custom_call.1} parent=99 // pred_fallthru
          _
        // Predicated region
        $region121: #{tpu_custom_call.1} parent=99 // pred_check
          %p722 = pneg %p238
        $region122: #{tpu_custom_call.1} parent=99 // pred_check_branch
          %724 = sbr.rel (%p722) target = $region124
        $region123: #{tpu_custom_call.1} parent=99 // pred_region
          %725 = dma.done [#allocation14], 16
        $region124: #{tpu_custom_call.1} parent=99 // pred_fallthru
          _
        // Predicated region
        $region125: #{tpu_custom_call.1} parent=99 // pred_check
          %p726 = pneg %p259
        $region126: #{tpu_custom_call.1} parent=99 // pred_check_branch
          %728 = sbr.rel (%p726) target = $region128
        $region127: #{tpu_custom_call.1} parent=99 // pred_region
          %729 = dma.done [#allocation14], 16
        $region128: #{tpu_custom_call.1} parent=99 // pred_fallthru
          _
        // Predicated region
        $region129: #{tpu_custom_call.1} parent=99 // pred_check
          %p730 = pneg %p322
        $region130: #{tpu_custom_call.1} parent=99 // pred_check_branch
          %732 = sbr.rel (%p730) target = $region132
        $region131: #{tpu_custom_call.1} parent=99 // pred_region
          %733 = dma.done [#allocation17], 256
        $region132: #{tpu_custom_call.1} parent=99 // pred_fallthru
          _
        // Predicated region
        $region133: #{tpu_custom_call.1} parent=99 // pred_check
          %p734 = pneg %p364
        $region134: #{tpu_custom_call.1} parent=99 // pred_check_branch
          %736 = sbr.rel (%p734) target = $region136
        $region135: #{tpu_custom_call.1} parent=99 // pred_region
          %737 = dma.done [#allocation17], 16
        $region136: #{tpu_custom_call.1} parent=99 // pred_fallthru
          _
        // Predicated region
        $region137: #{tpu_custom_call.1} parent=99 // pred_check
          %p738 = pneg %p385
        $region138: #{tpu_custom_call.1} parent=99 // pred_check_branch
          %740 = sbr.rel (%p738) target = $region140
        $region139: #{tpu_custom_call.1} parent=99 // pred_region
          %741 = dma.done [#allocation20], 16
        $region140: #{tpu_custom_call.1} parent=99 // pred_fallthru
          _
        // Predicated region
        $region141: #{tpu_custom_call.1} parent=99 // pred_check
          %p742 = pneg %p427
        $region142: #{tpu_custom_call.1} parent=99 // pred_check_branch
          %744 = sbr.rel (%p742) target = $region144
        $region143: #{tpu_custom_call.1} parent=99 // pred_region
          %745 = dma.done [#allocation20], 16
        $region144: #{tpu_custom_call.1} parent=99 // pred_fallthru
          _
        %s746 = sand.u32 %s52, 1
        %s747 = scalar_lea.sflag [#allocation5], %s746
        %s748 = sand.u32 %s52, 1
        %s749 = smul.addr %s748, 16
        %s750 = scalar_lea.vmem [#allocation4], %s749
        %p751 = pneg %p65
        %p752 = pneg %p62
        %s753 = sand.u32 %s44, 1
        %s754 = scalar_lea.sflag [#allocation8], %s753
        %s755 = sand.u32 %s78, 1
        %s756 = scalar_lea.vmem [#allocation7], %s755
        %p757 = pneg %p91
        %p758 = pneg %p88
        %p759 = pneg %p112
        %p760 = pneg %p109
        %p761 = pneg %p133
        %p762 = pneg %p130
        %p763 = pneg %p154
        %p764 = pneg %p151
        %p765 = pneg %p175
        %p766 = pneg %p172
        %p767 = pneg %p196
        %p768 = pneg %p193
        %p769 = pneg %p217
        %p770 = pneg %p214
        %p771 = pneg %p238
        %p772 = pneg %p235
        %p773 = pneg %p259
        %p774 = pneg %p256
        %p775 = pneg %p280
        %p776 = pneg %p277
        %p777 = pneg %p301
        %p778 = pneg %p298
        %p779 = pneg %p322
        %p780 = pneg %p319
        %p781 = pneg %p343
        %p782 = pneg %p340
        %p783 = pneg %p364
        %p784 = pneg %p361
        %p785 = pneg %p385
        %p786 = pneg %p382
        %p787 = pneg %p406
        %p788 = pneg %p403
        %p789 = pneg %p427
        %p790 = pneg %p424
        %p791 = pneg %p448
        %p792 = pneg %p445
        %p793 = pneg %p469
        %p794 = pneg %p466
        %p795 = pneg %p495
        %p796 = pneg %p492
        %s797 = sand.u32 %s482, 1
        %s798 = scalar_lea.sflag [#allocation6], %s797
        %s799 = sand.u32 %s482, 1
        %s800 = smul.addr %s799, 16
        %s801 = scalar_lea.vmem [#allocation22], %s800
        %v803 = vld [vmem:[%s697] sm:$0xff]
        %v804 = vld [vmem:[%s697 + $0x8] sm:$0xff]
        %v805 = vld [vmem:[%s2] sm:$0xff]
        %v806 = vld [vmem:[%s2 + $0x8] sm:$0xff]
        %v807 = vadd.f32 %v803, %v805
        %v808 = vadd.f32 %v804, %v806
        %vm809 = vcmask 256000
        %810 = vst.msk [vmem:[#allocation2] sm:$0x7] %vm809, 0.0
        %811 = vst.msk [vmem:[#allocation2 + $0x13] sm:$0x7] %vm809, 0.0
        %v812 = vld [vmem:[#allocation9] sm:$0x1]
        %v813 = vld [vmem:[#allocation10] sm:$0x1]
        %vm814 = vcmask 261120
        %v815 = vsel %vm814, %v807, 0.0
        %816 = vadd.xlane.f32.xlu0 %v815
        %v817 = vpop.xlane.xlu0 %816
        %v818 = vsel %vm814, %v808, 0.0
        %819 = vadd.xlane.f32.xlu0 %v818
        %v820 = vpop.xlane.xlu0 %819
        %v821 = vrcp.pop 32.0
        %v822 = vmul.f32 %v817, %v821
        %v823 = vmul.f32 %v820, %v821
        %v824 = vsub.f32 %v807, %v822
        %v825 = vsub.f32 %v808, %v823
        %v826 = vmul.f32 %v824, %v824
        %v827 = vmul.f32 %v825, %v825
        %v828 = vsel %vm814, %v826, 0.0
        %829 = vadd.xlane.f32.xlu0 %v828
        %v830 = vpop.xlane.xlu0 %829
        %v831 = vsel %vm814, %v827, 0.0
        %832 = vadd.xlane.f32.xlu0 %v831
        %v833 = vpop.xlane.xlu0 %832
        %v834 = vmul.f32 %v830, %v821
        %v835 = vmul.f32 %v833, %v821
        %v836 = vadd.f32 %v834, 1e-05
        %v837 = vadd.f32 %v835, 1e-05
        %v838 = vrsqrt.pop %v836
        %v839 = vrsqrt.pop %v837
        %v840 = vmul.f32 %v824, %v838
        %v841 = vmul.f32 %v825, %v839
        %v843 = vlaneseq
        %v844 = vshrl.u32 %v843, 7
        %v845 = vsub.s32 0, %v844
        %v846 = vrot.slane %v812, %v845
        %v848 = vmul.f32 %v840, %v846
        %v849 = vmul.f32 %v841, %v846
        %v851 = vlaneseq
        %v852 = vshrl.u32 %v851, 7
        %v853 = vsub.s32 0, %v852
        %v854 = vrot.slane %v813, %v853
        %v856 = vadd.f32 %v848, %v854
        %v857 = vadd.f32 %v849, %v854
        %858 = vst.msk [vmem:[#allocation2 + $0x3] sm:$0xff] %vm814, %v856
        %859 = vst.msk [vmem:[#allocation2 + $0xb] sm:$0xff] %vm814, %v857
        %v860 = vld [vmem:[%s5] sm:$0x7f]
        %v861 = vld [vmem:[#allocation2] sm:$0xff]
        %v862 = vld [vmem:[#allocation2 + $0x8] sm:$0xff]
        %v863 = vlaneseq
        %v864 = vshrl.u32 %v863, 7
        %v865 = vsub.s32 0, %v864
        %v866 = vrot.slane %v860, %v865
        %v867 = vmul.f32 %v861, %v866
        %v868 = vmul.f32 %v862, %v866
        %v869 = vadd.f32 %v867, 0.0
        %v870 = vadd.f32 %v868, 0.0
        %v871 = vld [vmem:[#allocation2 + $0x1] sm:$0xff]
        %v872 = vld [vmem:[#allocation2 + $0x9] sm:$0xff]
        %v873 = vlaneseq
        %v874 = vshrl.u32 %v873, 7
        %v875 = vsub.s32 1, %v874
        %v876 = vrot.slane %v860, %v875
        %v877 = vmul.f32 %v871, %v876
        %v878 = vmul.f32 %v872, %v876
        %v879 = vadd.f32 %v869, %v877
        %v880 = vadd.f32 %v870, %v878
        %v881 = vld [vmem:[#allocation2 + $0x2] sm:$0xff]
        %v882 = vld [vmem:[#allocation2 + $0xa] sm:$0xff]
        %v883 = vlaneseq
        %v884 = vshrl.u32 %v883, 7
        %v885 = vsub.s32 2, %v884
        %v886 = vrot.slane %v860, %v885
        %v887 = vmul.f32 %v881, %v886
        %v888 = vmul.f32 %v882, %v886
        %v889 = vadd.f32 %v879, %v887
        %v890 = vadd.f32 %v880, %v888
        %v891 = vld [vmem:[#allocation2 + $0x3] sm:$0xff]
        %v892 = vld [vmem:[#allocation2 + $0xb] sm:$0xff]
        %v893 = vlaneseq
        %v894 = vshrl.u32 %v893, 7
        %v895 = vsub.s32 3, %v894
        %v896 = vrot.slane %v860, %v895
        %v897 = vmul.f32 %v891, %v896
        %v898 = vmul.f32 %v892, %v896
        %v899 = vadd.f32 %v889, %v897
        %v900 = vadd.f32 %v890, %v898
        %v901 = vld [vmem:[#allocation2 + $0x4] sm:$0xff]
        %v902 = vld [vmem:[#allocation2 + $0xc] sm:$0xff]
        %v903 = vlaneseq
        %v904 = vshrl.u32 %v903, 7
        %v905 = vsub.s32 4, %v904
        %v906 = vrot.slane %v860, %v905
        %v907 = vmul.f32 %v901, %v906
        %v908 = vmul.f32 %v902, %v906
        %v909 = vadd.f32 %v899, %v907
        %v910 = vadd.f32 %v900, %v908
        %v911 = vld [vmem:[#allocation2 + $0x5] sm:$0xff]
        %v912 = vld [vmem:[#allocation2 + $0xd] sm:$0xff]
        %v913 = vlaneseq
        %v914 = vshrl.u32 %v913, 7
        %v915 = vsub.s32 5, %v914
        %v916 = vrot.slane %v860, %v915
        %v917 = vmul.f32 %v911, %v916
        %v918 = vmul.f32 %v912, %v916
        %v919 = vadd.f32 %v909, %v917
        %v920 = vadd.f32 %v910, %v918
        %v921 = vld [vmem:[#allocation2 + $0x6] sm:$0xff]
        %v922 = vld [vmem:[#allocation2 + $0xe] sm:$0xff]
        %v923 = vlaneseq
        %v924 = vshrl.u32 %v923, 7
        %v925 = vsub.s32 6, %v924
        %v926 = vrot.slane %v860, %v925
        %v927 = vmul.f32 %v921, %v926
        %v928 = vmul.f32 %v922, %v926
        %v929 = vadd.f32 %v919, %v927
        %v930 = vadd.f32 %v920, %v928
        %v931 = vpack.c.bf16 %v930, %v929
        %v932 = vld [vmem:[%s6] sm:$0xf]
        %v933 = vld [vmem:[%s6 + $0x4] sm:$0xf]
        %v934 = vld [vmem:[%s6 + $0x8] sm:$0xf]
        %v935 = vld [vmem:[%s6 + $0xc] sm:$0xf]
        %v936 = vld [vmem:[#allocation12] sm:$0x1]
        %v938 = vlaneseq
        %v939 = vshrl.u32 %v938, 7
        %v940 = vsub.s32 0, %v939
        %v941 = vrot.slane %v936, %v940
        %v947 = vunpack.c.l.b16 %v932
        %v948 = vunpack.c.l.b16 %v933
        %v949 = vunpack.c.l.b16 %v934
        %v950 = vunpack.c.l.b16 %v935
        %v951 = vpack.c.b16 %v948, %v947
        %v952 = vpack.c.b16 %v950, %v949
        %v956 = vsel %vm814, %v931, 0
        %958 = vmatprep.subr.bf16.mxu0 0
        %959 = vmatpush1.bf16.msra.mxu0 %v951
        %960 = vmatprep.subr.bf16.mxu0 0
        %961 = vmatpush1.bf16.msra.mxu0 %v952
        %962 = vmatprep.subr.bf16.mxu0 0
        %963 = vmatpush1.bf16.msra.mxu0 0
        %964 = vmatprep.subr.bf16.mxu0 0
        %965 = vmatpush1.bf16.msra.mxu0 0
        %966 = vmatprep.subr.bf16.mxu0 0
        %967 = vmatpush1.bf16.msra.mxu0 0
        %968 = vmatprep.subr.bf16.mxu0 0
        %969 = vmatpush1.bf16.msra.mxu0 0
        %970 = vmatprep.subr.bf16.mxu0 0
        %971 = vmatpush1.bf16.msra.mxu0 0
        %972 = vmatprep.subr.bf16.mxu0 0
        %973 = vmatpush1.bf16.msra.mxu0 0
        %974 = vmatprep.subr.bf16.mxu0 0
        %975 = vmatpush1.bf16.msra.mxu0 0
        %976 = vmatprep.subr.bf16.mxu0 0
        %977 = vmatpush1.bf16.msra.mxu0 0
        %978 = vmatprep.subr.bf16.mxu0 0
        %979 = vmatpush1.bf16.msra.mxu0 0
        %980 = vmatprep.subr.bf16.mxu0 0
        %981 = vmatpush1.bf16.msra.mxu0 0
        %982 = vmatprep.subr.bf16.mxu0 0
        %983 = vmatpush1.bf16.msra.mxu0 0
        %984 = vmatprep.subr.bf16.mxu0 0
        %985 = vmatpush1.bf16.msra.mxu0 0
        %986 = vmatprep.subr.bf16.mxu0 0
        %987 = vmatpush1.bf16.msra.mxu0 0
        %988 = vmatprep.subr.bf16.mxu0 0
        %989 = vmatpush1.bf16.msra.mxu0 0
        %990 = vmatprep.mubr.bf16.mxu0 0
        %991 = vmatmul.mubr.bf16.gmra.mrb[0].mxu0 %v956
        %v992 = vpop.f32.mrb[0].mxu0
        %v993 = vadd.f32 %v941, %v992
        %v994 = vpop.f32.mrb[0].mxu0
        %v995 = vpop.f32.mrb[0].mxu0
        %v996 = vadd.f32 %v941, %v995
        %v997 = vpop.f32.mrb[0].mxu0
        %998 = vdwg.mxu0
        %v999 = vmax.f32 %v993, 0.0
        %v1000 = vmax.f32 %v996, 0.0
        %v1001 = vadd.f32 %v999, %v807
        %v1002 = vadd.f32 %v1000, %v808
        %s1003 = scalar_lea.vmem [#allocation9], 1
        %v1004 = vld [vmem:[%s1003] sm:$0x1]
        %s1005 = scalar_lea.vmem [#allocation10], 1
        %v1006 = vld [vmem:[%s1005] sm:$0x1]
        %v1007 = vsel %vm814, %v1001, 0.0
        %1008 = vadd.xlane.f32.xlu0 %v1007
        %v1009 = vpop.xlane.xlu0 %1008
        %v1010 = vsel %vm814, %v1002, 0.0
        %1011 = vadd.xlane.f32.xlu0 %v1010
        %v1012 = vpop.xlane.xlu0 %1011
        %v1013 = vmul.f32 %v1009, %v821
        %v1014 = vmul.f32 %v1012, %v821
        %v1015 = vsub.f32 %v1001, %v1013
        %v1016 = vsub.f32 %v1002, %v1014
        %v1017 = vmul.f32 %v1015, %v1015
        %v1018 = vmul.f32 %v1016, %v1016
        %v1019 = vsel %vm814, %v1017, 0.0
        %1020 = vadd.xlane.f32.xlu0 %v1019
        %v1021 = vpop.xlane.xlu0 %1020
        %v1022 = vsel %vm814, %v1018, 0.0
        %1023 = vadd.xlane.f32.xlu0 %v1022
        %v1024 = vpop.xlane.xlu0 %1023
        %v1025 = vmul.f32 %v1021, %v821
        %v1026 = vmul.f32 %v1024, %v821
        %v1027 = vadd.f32 %v1025, 1e-05
        %v1028 = vadd.f32 %v1026, 1e-05
        %v1029 = vrsqrt.pop %v1027
        %v1030 = vrsqrt.pop %v1028
        %v1031 = vmul.f32 %v1015, %v1029
        %v1032 = vmul.f32 %v1016, %v1030
        %v1034 = vlaneseq
        %v1035 = vshrl.u32 %v1034, 7
        %v1036 = vsub.s32 0, %v1035
        %v1037 = vrot.slane %v1004, %v1036
        %v1039 = vmul.f32 %v1031, %v1037
        %v1040 = vmul.f32 %v1032, %v1037
        %v1042 = vlaneseq
        %v1043 = vshrl.u32 %v1042, 7
        %v1044 = vsub.s32 0, %v1043
        %v1045 = vrot.slane %v1006, %v1044
        %v1047 = vadd.f32 %v1039, %v1045
        %v1048 = vadd.f32 %v1040, %v1045
        %1049 = vst.msk [vmem:[#allocation2 + $0x3] sm:$0xff] %vm814, %v1047
        %1050 = vst.msk [vmem:[#allocation2 + $0xb] sm:$0xff] %vm814, %v1048
        %s1051 = scalar_lea.vmem %s5, 8
        %v1052 = vld [vmem:[%s1051] sm:$0x7f]
        %v1053 = vld [vmem:[#allocation2] sm:$0xff]
        %v1054 = vld [vmem:[#allocation2 + $0x8] sm:$0xff]
        %v1055 = vlaneseq
        %v1056 = vshrl.u32 %v1055, 7
        %v1057 = vsub.s32 0, %v1056
        %v1058 = vrot.slane %v1052, %v1057
        %v1059 = vmul.f32 %v1053, %v1058
        %v1060 = vmul.f32 %v1054, %v1058
        %v1061 = vadd.f32 %v1059, 0.0
        %v1062 = vadd.f32 %v1060, 0.0
        %v1063 = vld [vmem:[#allocation2 + $0x1] sm:$0xff]
        %v1064 = vld [vmem:[#allocation2 + $0x9] sm:$0xff]
        %v1065 = vlaneseq
        %v1066 = vshrl.u32 %v1065, 7
        %v1067 = vsub.s32 1, %v1066
        %v1068 = vrot.slane %v1052, %v1067
        %v1069 = vmul.f32 %v1063, %v1068
        %v1070 = vmul.f32 %v1064, %v1068
        %v1071 = vadd.f32 %v1061, %v1069
        %v1072 = vadd.f32 %v1062, %v1070
        %v1073 = vld [vmem:[#allocation2 + $0x2] sm:$0xff]
        %v1074 = vld [vmem:[#allocation2 + $0xa] sm:$0xff]
        %v1075 = vlaneseq
        %v1076 = vshrl.u32 %v1075, 7
        %v1077 = vsub.s32 2, %v1076
        %v1078 = vrot.slane %v1052, %v1077
        %v1079 = vmul.f32 %v1073, %v1078
        %v1080 = vmul.f32 %v1074, %v1078
        %v1081 = vadd.f32 %v1071, %v1079
        %v1082 = vadd.f32 %v1072, %v1080
        %v1083 = vld [vmem:[#allocation2 + $0x3] sm:$0xff]
        %v1084 = vld [vmem:[#allocation2 + $0xb] sm:$0xff]
        %v1085 = vlaneseq
        %v1086 = vshrl.u32 %v1085, 7
        %v1087 = vsub.s32 3, %v1086
        %v1088 = vrot.slane %v1052, %v1087
        %v1089 = vmul.f32 %v1083, %v1088
        %v1090 = vmul.f32 %v1084, %v1088
        %v1091 = vadd.f32 %v1081, %v1089
        %v1092 = vadd.f32 %v1082, %v1090
        %v1093 = vld [vmem:[#allocation2 + $0x4] sm:$0xff]
        %v1094 = vld [vmem:[#allocation2 + $0xc] sm:$0xff]
        %v1095 = vlaneseq
        %v1096 = vshrl.u32 %v1095, 7
        %v1097 = vsub.s32 4, %v1096
        %v1098 = vrot.slane %v1052, %v1097
        %v1099 = vmul.f32 %v1093, %v1098
        %v1100 = vmul.f32 %v1094, %v1098
        %v1101 = vadd.f32 %v1091, %v1099
        %v1102 = vadd.f32 %v1092, %v1100
        %v1103 = vld [vmem:[#allocation2 + $0x5] sm:$0xff]
        %v1104 = vld [vmem:[#allocation2 + $0xd] sm:$0xff]
        %v1105 = vlaneseq
        %v1106 = vshrl.u32 %v1105, 7
        %v1107 = vsub.s32 5, %v1106
        %v1108 = vrot.slane %v1052, %v1107
        %v1109 = vmul.f32 %v1103, %v1108
        %v1110 = vmul.f32 %v1104, %v1108
        %v1111 = vadd.f32 %v1101, %v1109
        %v1112 = vadd.f32 %v1102, %v1110
        %v1113 = vld [vmem:[#allocation2 + $0x6] sm:$0xff]
        %v1114 = vld [vmem:[#allocation2 + $0xe] sm:$0xff]
        %v1115 = vlaneseq
        %v1116 = vshrl.u32 %v1115, 7
        %v1117 = vsub.s32 6, %v1116
        %v1118 = vrot.slane %v1052, %v1117
        %v1119 = vmul.f32 %v1113, %v1118
        %v1120 = vmul.f32 %v1114, %v1118
        %v1121 = vadd.f32 %v1111, %v1119
        %v1122 = vadd.f32 %v1112, %v1120
        %v1123 = vpack.c.bf16 %v1122, %v1121
        %s1124 = scalar_lea.vmem %s6, 16
        %v1125 = vld [vmem:[%s1124] sm:$0xf]
        %v1126 = vld [vmem:[%s1124 + $0x4] sm:$0xf]
        %v1127 = vld [vmem:[%s1124 + $0x8] sm:$0xf]
        %v1128 = vld [vmem:[%s1124 + $0xc] sm:$0xf]
        %s1129 = scalar_lea.vmem [#allocation12], 1
        %v1130 = vld [vmem:[%s1129] sm:$0x1]
        %v1132 = vlaneseq
        %v1133 = vshrl.u32 %v1132, 7
        %v1134 = vsub.s32 0, %v1133
        %v1135 = vrot.slane %v1130, %v1134
        %v1141 = vunpack.c.l.b16 %v1125
        %v1142 = vunpack.c.l.b16 %v1126
        %v1143 = vunpack.c.l.b16 %v1127
        %v1144 = vunpack.c.l.b16 %v1128
        %v1145 = vpack.c.b16 %v1142, %v1141
        %v1146 = vpack.c.b16 %v1144, %v1143
        %v1150 = vsel %vm814, %v1123, 0
        %1152 = vmatprep.subr.bf16.mxu0 0
        %1153 = vmatpush1.bf16.msra.mxu0 %v1145
        %1154 = vmatprep.subr.bf16.mxu0 0
        %1155 = vmatpush1.bf16.msra.mxu0 %v1146
        %1156 = vmatprep.subr.bf16.mxu0 0
        %1157 = vmatpush1.bf16.msra.mxu0 0
        %1158 = vmatprep.subr.bf16.mxu0 0
        %1159 = vmatpush1.bf16.msra.mxu0 0
        %1160 = vmatprep.subr.bf16.mxu0 0
        %1161 = vmatpush1.bf16.msra.mxu0 0
        %1162 = vmatprep.subr.bf16.mxu0 0
        %1163 = vmatpush1.bf16.msra.mxu0 0
        %1164 = vmatprep.subr.bf16.mxu0 0
        %1165 = vmatpush1.bf16.msra.mxu0 0
        %1166 = vmatprep.subr.bf16.mxu0 0
        %1167 = vmatpush1.bf16.msra.mxu0 0
        %1168 = vmatprep.subr.bf16.mxu0 0
        %1169 = vmatpush1.bf16.msra.mxu0 0
        %1170 = vmatprep.subr.bf16.mxu0 0
        %1171 = vmatpush1.bf16.msra.mxu0 0
        %1172 = vmatprep.subr.bf16.mxu0 0
        %1173 = vmatpush1.bf16.msra.mxu0 0
        %1174 = vmatprep.subr.bf16.mxu0 0
        %1175 = vmatpush1.bf16.msra.mxu0 0
        %1176 = vmatprep.subr.bf16.mxu0 0
        %1177 = vmatpush1.bf16.msra.mxu0 0
        %1178 = vmatprep.subr.bf16.mxu0 0
        %1179 = vmatpush1.bf16.msra.mxu0 0
        %1180 = vmatprep.subr.bf16.mxu0 0
        %1181 = vmatpush1.bf16.msra.mxu0 0
        %1182 = vmatprep.subr.bf16.mxu0 0
        %1183 = vmatpush1.bf16.msra.mxu0 0
        %1184 = vmatprep.mubr.bf16.mxu0 0
        %1185 = vmatmul.mubr.bf16.gmra.mrb[0].mxu0 %v1150
        %v1186 = vpop.f32.mrb[0].mxu0
        %v1187 = vadd.f32 %v1135, %v1186
        %v1188 = vpop.f32.mrb[0].mxu0
        %v1189 = vpop.f32.mrb[0].mxu0
        %v1190 = vadd.f32 %v1135, %v1189
        %v1191 = vpop.f32.mrb[0].mxu0
        %1192 = vdwg.mxu0
        %v1193 = vmax.f32 %v1187, 0.0
        %v1194 = vmax.f32 %v1190, 0.0
        %v1195 = vadd.f32 %v1193, %v1001
        %v1196 = vadd.f32 %v1194, %v1002
        %v1197 = vld [vmem:[#allocation13] sm:$0x1]
        %v1198 = vld [vmem:[#allocation15] sm:$0x1]
        %v1199 = vsel %vm814, %v1195, 0.0
        %1200 = vadd.xlane.f32.xlu0 %v1199
        %v1201 = vpop.xlane.xlu0 %1200
        %v1202 = vsel %vm814, %v1196, 0.0
        %1203 = vadd.xlane.f32.xlu0 %v1202
        %v1204 = vpop.xlane.xlu0 %1203
        %v1205 = vmul.f32 %v1201, %v821
        %v1206 = vmul.f32 %v1204, %v821
        %v1207 = vsub.f32 %v1195, %v1205
        %v1208 = vsub.f32 %v1196, %v1206
        %v1209 = vmul.f32 %v1207, %v1207
        %v1210 = vmul.f32 %v1208, %v1208
        %v1211 = vsel %vm814, %v1209, 0.0
        %1212 = vadd.xlane.f32.xlu0 %v1211
        %v1213 = vpop.xlane.xlu0 %1212
        %v1214 = vsel %vm814, %v1210, 0.0
        %1215 = vadd.xlane.f32.xlu0 %v1214
        %v1216 = vpop.xlane.xlu0 %1215
        %v1217 = vmul.f32 %v1213, %v821
        %v1218 = vmul.f32 %v1216, %v821
        %v1219 = vadd.f32 %v1217, 1e-05
        %v1220 = vadd.f32 %v1218, 1e-05
        %v1221 = vrsqrt.pop %v1219
        %v1222 = vrsqrt.pop %v1220
        %v1223 = vmul.f32 %v1207, %v1221
        %v1224 = vmul.f32 %v1208, %v1222
        %v1226 = vlaneseq
        %v1227 = vshrl.u32 %v1226, 7
        %v1228 = vsub.s32 0, %v1227
        %v1229 = vrot.slane %v1197, %v1228
        %v1231 = vmul.f32 %v1223, %v1229
        %v1232 = vmul.f32 %v1224, %v1229
        %v1234 = vlaneseq
        %v1235 = vshrl.u32 %v1234, 7
        %v1236 = vsub.s32 0, %v1235
        %v1237 = vrot.slane %v1198, %v1236
        %v1239 = vadd.f32 %v1231, %v1237
        %v1240 = vadd.f32 %v1232, %v1237
        %v1241 = vpack.c.bf16 %v1240, %v1239
        %v1242 = vld [vmem:[%s10] sm:$0xf]
        %v1243 = vld [vmem:[%s10 + $0x4] sm:$0xf]
        %v1244 = vld [vmem:[%s10 + $0x8] sm:$0xf]
        %v1245 = vld [vmem:[%s10 + $0xc] sm:$0xf]
        %v1246 = vld [vmem:[%s11] sm:$0x1]
        %v1248 = vlaneseq
        %v1249 = vshrl.u32 %v1248, 7
        %v1250 = vsub.s32 0, %v1249
        %v1251 = vrot.slane %v1246, %v1250
        %v1257 = vunpack.c.l.b16 %v1242
        %v1258 = vunpack.c.l.b16 %v1243
        %v1259 = vunpack.c.l.b16 %v1244
        %v1260 = vunpack.c.l.b16 %v1245
        %v1261 = vpack.c.b16 %v1258, %v1257
        %v1262 = vpack.c.b16 %v1260, %v1259
        %v1266 = vsel %vm814, %v1241, 0
        %1268 = vmatprep.subr.bf16.mxu0 0
        %1269 = vmatpush1.bf16.msra.mxu0 %v1261
        %1270 = vmatprep.subr.bf16.mxu0 0
        %1271 = vmatpush1.bf16.msra.mxu0 %v1262
        %1272 = vmatprep.subr.bf16.mxu0 0
        %1273 = vmatpush1.bf16.msra.mxu0 0
        %1274 = vmatprep.subr.bf16.mxu0 0
        %1275 = vmatpush1.bf16.msra.mxu0 0
        %1276 = vmatprep.subr.bf16.mxu0 0
        %1277 = vmatpush1.bf16.msra.mxu0 0
        %1278 = vmatprep.subr.bf16.mxu0 0
        %1279 = vmatpush1.bf16.msra.mxu0 0
        %1280 = vmatprep.subr.bf16.mxu0 0
        %1281 = vmatpush1.bf16.msra.mxu0 0
        %1282 = vmatprep.subr.bf16.mxu0 0
        %1283 = vmatpush1.bf16.msra.mxu0 0
        %1284 = vmatprep.subr.bf16.mxu0 0
        %1285 = vmatpush1.bf16.msra.mxu0 0
        %1286 = vmatprep.subr.bf16.mxu0 0
        %1287 = vmatpush1.bf16.msra.mxu0 0
        %1288 = vmatprep.subr.bf16.mxu0 0
        %1289 = vmatpush1.bf16.msra.mxu0 0
        %1290 = vmatprep.subr.bf16.mxu0 0
        %1291 = vmatpush1.bf16.msra.mxu0 0
        %1292 = vmatprep.subr.bf16.mxu0 0
        %1293 = vmatpush1.bf16.msra.mxu0 0
        %1294 = vmatprep.subr.bf16.mxu0 0
        %1295 = vmatpush1.bf16.msra.mxu0 0
        %1296 = vmatprep.subr.bf16.mxu0 0
        %1297 = vmatpush1.bf16.msra.mxu0 0
        %1298 = vmatprep.subr.bf16.mxu0 0
        %1299 = vmatpush1.bf16.msra.mxu0 0
        %1300 = vmatprep.mubr.bf16.mxu0 0
        %1301 = vmatmul.mubr.bf16.gmra.mrb[0].mxu0 %v1266
        %v1302 = vpop.f32.mrb[0].mxu0
        %v1303 = vadd.f32 %v1251, %v1302
        %v1304 = vpop.f32.mrb[0].mxu0
        %v1305 = vpop.f32.mrb[0].mxu0
        %v1306 = vadd.f32 %v1251, %v1305
        %v1307 = vpop.f32.mrb[0].mxu0
        %1308 = vdwg.mxu0
        %v1309 = vld [vmem:[%s705] sm:$0x1]
        %vm1310 = vcmp.ne.f32.partialorder %v1309, 0.0
        %v1311 = vsel %vm1310, 0.0, -1e+09
        %v1312 = vpack.c.bf16 %v1306, %v1303
        %v1314 = vlaneseq
        %v1315 = vshrl.u32 %v1314, 7
        %v1316 = vsub.s32 0, %v1315
        %v1317 = vrot.slane %v1311, %v1316
        %1320 = vrot.lane.b32.xlu0 %v1312, 96
        %v1321 = vpop.permute.xlu0 %1320
        %vm1322 = vcmask 31744
        %v1324 = vsel %vm1322, %v1312, 0
        %v1327 = vsel %vm1322, %v1321, 0
        %1329 = vmatprep.subr.bf16.mxu0 0
        %1330 = vmatpush1.bf16.xpose.msra.mxu0 %v1327
        %1331 = vmatprep.subr.bf16.mxu0 0
        %1332 = vmatpush1.bf16.xpose.msra.mxu0 0
        %1333 = vmatprep.subr.bf16.mxu0 0
        %1334 = vmatpush1.bf16.xpose.msra.mxu0 0
        %1335 = vmatprep.subr.bf16.mxu0 0
        %1336 = vmatpush1.bf16.xpose.msra.mxu0 0
        %1337 = vmatprep.subr.bf16.mxu0 0
        %1338 = vmatpush1.bf16.xpose.msra.mxu0 0
        %1339 = vmatprep.subr.bf16.mxu0 0
        %1340 = vmatpush1.bf16.xpose.msra.mxu0 0
        %1341 = vmatprep.subr.bf16.mxu0 0
        %1342 = vmatpush1.bf16.xpose.msra.mxu0 0
        %1343 = vmatprep.subr.bf16.mxu0 0
        %1344 = vmatpush1.bf16.xpose.msra.mxu0 0
        %1345 = vmatprep.subr.bf16.mxu0 0
        %1346 = vmatpush1.bf16.xpose.msra.mxu0 0
        %1347 = vmatprep.subr.bf16.mxu0 0
        %1348 = vmatpush1.bf16.xpose.msra.mxu0 0
        %1349 = vmatprep.subr.bf16.mxu0 0
        %1350 = vmatpush1.bf16.xpose.msra.mxu0 0
        %1351 = vmatprep.subr.bf16.mxu0 0
        %1352 = vmatpush1.bf16.xpose.msra.mxu0 0
        %1353 = vmatprep.subr.bf16.mxu0 0
        %1354 = vmatpush1.bf16.xpose.msra.mxu0 0
        %1355 = vmatprep.subr.bf16.mxu0 0
        %1356 = vmatpush1.bf16.xpose.msra.mxu0 0
        %1357 = vmatprep.subr.bf16.mxu0 0
        %1358 = vmatpush1.bf16.xpose.msra.mxu0 0
        %1359 = vmatprep.subr.bf16.mxu0 0
        %1360 = vmatpush1.bf16.xpose.msra.mxu0 0
        %1361 = vmatprep.mubr.bf16.mxu0 0
        %1362 = vmatmul.mubr.bf16.gmra.mrb[0].mxu0 %v1324
        %v1363 = vpop.f32.mrb[0].mxu0
        %v1364 = vadd.f32 %v1317, %v1363
        %v1365 = vpop.f32.mrb[0].mxu0
        %v1366 = vpop.f32.mrb[0].mxu0
        %v1367 = vadd.f32 %v1317, %v1366
        %v1368 = vpop.f32.mrb[0].mxu0
        %1369 = vdwg.mxu0
        %vm1370 = vcmask 130048
        %v1371 = vsel %vm1370, %v1364, -inf
        %1372 = vmax.xlane.f32.xlu0 %v1371
        %v1373 = vpop.xlane.xlu0 %1372
        %v1374 = vsel %vm1370, %v1367, -inf
        %1375 = vmax.xlane.f32.xlu0 %v1374
        %v1376 = vpop.xlane.xlu0 %1375
        %v1377 = vsub.f32 %v1364, %v1373
        %v1378 = vsub.f32 %v1367, %v1376
        %v1379 = vmul.f32 %v1377, 1.442695
        %v1380 = vpow.pop %v1379
        %v1381 = vmul.f32 %v1378, 1.442695
        %v1382 = vpow.pop %v1381
        %v1383 = vsel %vm1370, %v1380, 0.0
        %1384 = vadd.xlane.f32.xlu0 %v1383
        %v1385 = vpop.xlane.xlu0 %1384
        %v1386 = vsel %vm1370, %v1382, 0.0
        %1387 = vadd.xlane.f32.xlu0 %v1386
        %v1388 = vpop.xlane.xlu0 %1387
        %v1389 = vrcp.pop %v1385
        %v1390 = vrcp.pop %v1388
        %v1391 = vmul.f32 %v1380, %v1389
        %v1392 = vmul.f32 %v1382, %v1390
        %v1393 = vpack.c.bf16 %v1392, %v1391
        %1394 = vrot.lane.b32.xlu0 %v1312, 64
        %v1395 = vpop.permute.xlu0 %1394
        %v1398 = vsel %vm1370, %v1393, 0
        %1400 = vmatprep.subr.bf16.mxu0 0
        %1401 = vmatpush1.bf16.msra.mxu0 %v1395
        %1402 = vmatprep.subr.bf16.mxu0 0
        %1403 = vmatpush1.bf16.msra.mxu0 0
        %1404 = vmatprep.subr.bf16.mxu0 0
        %1405 = vmatpush1.bf16.msra.mxu0 0
        %1406 = vmatprep.subr.bf16.mxu0 0
        %1407 = vmatpush1.bf16.msra.mxu0 0
        %1408 = vmatprep.subr.bf16.mxu0 0
        %1409 = vmatpush1.bf16.msra.mxu0 0
        %1410 = vmatprep.subr.bf16.mxu0 0
        %1411 = vmatpush1.bf16.msra.mxu0 0
        %1412 = vmatprep.subr.bf16.mxu0 0
        %1413 = vmatpush1.bf16.msra.mxu0 0
        %1414 = vmatprep.subr.bf16.mxu0 0
        %1415 = vmatpush1.bf16.msra.mxu0 0
        %1416 = vmatprep.subr.bf16.mxu0 0
        %1417 = vmatpush1.bf16.msra.mxu0 0
        %1418 = vmatprep.subr.bf16.mxu0 0
        %1419 = vmatpush1.bf16.msra.mxu0 0
        %1420 = vmatprep.subr.bf16.mxu0 0
        %1421 = vmatpush1.bf16.msra.mxu0 0
        %1422 = vmatprep.subr.bf16.mxu0 0
        %1423 = vmatpush1.bf16.msra.mxu0 0
        %1424 = vmatprep.subr.bf16.mxu0 0
        %1425 = vmatpush1.bf16.msra.mxu0 0
        %1426 = vmatprep.subr.bf16.mxu0 0
        %1427 = vmatpush1.bf16.msra.mxu0 0
        %1428 = vmatprep.subr.bf16.mxu0 0
        %1429 = vmatpush1.bf16.msra.mxu0 0
        %1430 = vmatprep.subr.bf16.mxu0 0
        %1431 = vmatpush1.bf16.msra.mxu0 0
        %1432 = vmatprep.mubr.bf16.mxu0 0
        %1433 = vmatmul.mubr.bf16.gmra.mrb[0].mxu0 %v1398
        %v1434 = vpop.f32.mrb[0].mxu0
        %v1435 = vadd.f32 0.0, %v1434
        %v1436 = vpop.f32.mrb[0].mxu0
        %v1437 = vpop.f32.mrb[0].mxu0
        %v1438 = vadd.f32 0.0, %v1437
        %v1439 = vpop.f32.mrb[0].mxu0
        %1440 = vdwg.mxu0
        %1441 = vst.msk [vmem:[#allocation3] sm:$0xff] %vm1322, %v1435
        %1442 = vst.msk [vmem:[#allocation3 + $0x8] sm:$0xff] %vm1322, %v1438
        %1443 = vrot.lane.b32.xlu0 %v1312, 124
        %v1444 = vpop.permute.xlu0 %1443
        %1445 = vrot.lane.b32.xlu0 %v1312, 92
        %v1446 = vpop.permute.xlu0 %1445
        %v1448 = vsel %vm1322, %v1444, 0
        %v1451 = vsel %vm1322, %v1446, 0
        %1453 = vmatprep.subr.bf16.mxu0 0
        %1454 = vmatpush1.bf16.xpose.msra.mxu0 %v1451
        %1455 = vmatprep.subr.bf16.mxu0 0
        %1456 = vmatpush1.bf16.xpose.msra.mxu0 0
        %1457 = vmatprep.subr.bf16.mxu0 0
        %1458 = vmatpush1.bf16.xpose.msra.mxu0 0
        %1459 = vmatprep.subr.bf16.mxu0 0
        %1460 = vmatpush1.bf16.xpose.msra.mxu0 0
        %1461 = vmatprep.subr.bf16.mxu0 0
        %1462 = vmatpush1.bf16.xpose.msra.mxu0 0
        %1463 = vmatprep.subr.bf16.mxu0 0
        %1464 = vmatpush1.bf16.xpose.msra.mxu0 0
        %1465 = vmatprep.subr.bf16.mxu0 0
        %1466 = vmatpush1.bf16.xpose.msra.mxu0 0
        %1467 = vmatprep.subr.bf16.mxu0 0
        %1468 = vmatpush1.bf16.xpose.msra.mxu0 0
        %1469 = vmatprep.subr.bf16.mxu0 0
        %1470 = vmatpush1.bf16.xpose.msra.mxu0 0
        %1471 = vmatprep.subr.bf16.mxu0 0
        %1472 = vmatpush1.bf16.xpose.msra.mxu0 0
        %1473 = vmatprep.subr.bf16.mxu0 0
        %1474 = vmatpush1.bf16.xpose.msra.mxu0 0
        %1475 = vmatprep.subr.bf16.mxu0 0
        %1476 = vmatpush1.bf16.xpose.msra.mxu0 0
        %1477 = vmatprep.subr.bf16.mxu0 0
        %1478 = vmatpush1.bf16.xpose.msra.mxu0 0
        %1479 = vmatprep.subr.bf16.mxu0 0
        %1480 = vmatpush1.bf16.xpose.msra.mxu0 0
        %1481 = vmatprep.subr.bf16.mxu0 0
        %1482 = vmatpush1.bf16.xpose.msra.mxu0 0
        %1483 = vmatprep.subr.bf16.mxu0 0
        %1484 = vmatpush1.bf16.xpose.msra.mxu0 0
        %1485 = vmatprep.mubr.bf16.mxu0 0
        %1486 = vmatmul.mubr.bf16.gmra.mrb[0].mxu0 %v1448
        %v1487 = vpop.f32.mrb[0].mxu0
        %v1488 = vadd.f32 %v1317, %v1487
        %v1489 = vpop.f32.mrb[0].mxu0
        %v1490 = vpop.f32.mrb[0].mxu0
        %v1491 = vadd.f32 %v1317, %v1490
        %v1492 = vpop.f32.mrb[0].mxu0
        %1493 = vdwg.mxu0
        %v1494 = vsel %vm1370, %v1488, -inf
        %1495 = vmax.xlane.f32.xlu0 %v1494
        %v1496 = vpop.xlane.xlu0 %1495
        %v1497 = vsel %vm1370, %v1491, -inf
        %1498 = vmax.xlane.f32.xlu0 %v1497
        %v1499 = vpop.xlane.xlu0 %1498
        %v1500 = vsub.f32 %v1488, %v1496
        %v1501 = vsub.f32 %v1491, %v1499
        %v1502 = vmul.f32 %v1500, 1.442695
        %v1503 = vpow.pop %v1502
        %v1504 = vmul.f32 %v1501, 1.442695
        %v1505 = vpow.pop %v1504
        %v1506 = vsel %vm1370, %v1503, 0.0
        %1507 = vadd.xlane.f32.xlu0 %v1506
        %v1508 = vpop.xlane.xlu0 %1507
        %v1509 = vsel %vm1370, %v1505, 0.0
        %1510 = vadd.xlane.f32.xlu0 %v1509
        %v1511 = vpop.xlane.xlu0 %1510
        %v1512 = vrcp.pop %v1508
        %v1513 = vrcp.pop %v1511
        %v1514 = vmul.f32 %v1503, %v1512
        %v1515 = vmul.f32 %v1505, %v1513
        %v1516 = vpack.c.bf16 %v1515, %v1514
        %1517 = vrot.lane.b32.xlu0 %v1312, 60
        %v1518 = vpop.permute.xlu0 %1517
        %v1521 = vsel %vm1370, %v1516, 0
        %1523 = vmatprep.subr.bf16.mxu0 0
        %1524 = vmatpush1.bf16.msra.mxu0 %v1518
        %1525 = vmatprep.subr.bf16.mxu0 0
        %1526 = vmatpush1.bf16.msra.mxu0 0
        %1527 = vmatprep.subr.bf16.mxu0 0
        %1528 = vmatpush1.bf16.msra.mxu0 0
        %1529 = vmatprep.subr.bf16.mxu0 0
        %1530 = vmatpush1.bf16.msra.mxu0 0
        %1531 = vmatprep.subr.bf16.mxu0 0
        %1532 = vmatpush1.bf16.msra.mxu0 0
        %1533 = vmatprep.subr.bf16.mxu0 0
        %1534 = vmatpush1.bf16.msra.mxu0 0
        %1535 = vmatprep.subr.bf16.mxu0 0
        %1536 = vmatpush1.bf16.msra.mxu0 0
        %1537 = vmatprep.subr.bf16.mxu0 0
        %1538 = vmatpush1.bf16.msra.mxu0 0
        %1539 = vmatprep.subr.bf16.mxu0 0
        %1540 = vmatpush1.bf16.msra.mxu0 0
        %1541 = vmatprep.subr.bf16.mxu0 0
        %1542 = vmatpush1.bf16.msra.mxu0 0
        %1543 = vmatprep.subr.bf16.mxu0 0
        %1544 = vmatpush1.bf16.msra.mxu0 0
        %1545 = vmatprep.subr.bf16.mxu0 0
        %1546 = vmatpush1.bf16.msra.mxu0 0
        %1547 = vmatprep.subr.bf16.mxu0 0
        %1548 = vmatpush1.bf16.msra.mxu0 0
        %1549 = vmatprep.subr.bf16.mxu0 0
        %1550 = vmatpush1.bf16.msra.mxu0 0
        %1551 = vmatprep.subr.bf16.mxu0 0
        %1552 = vmatpush1.bf16.msra.mxu0 0
        %1553 = vmatprep.subr.bf16.mxu0 0
        %1554 = vmatpush1.bf16.msra.mxu0 0
        %1555 = vmatprep.mubr.bf16.mxu0 0
        %1556 = vmatmul.mubr.bf16.gmra.mrb[0].mxu0 %v1521
        %v1557 = vpop.f32.mrb[0].mxu0
        %v1558 = vadd.f32 0.0, %v1557
        %v1559 = vpop.f32.mrb[0].mxu0
        %v1560 = vpop.f32.mrb[0].mxu0
        %v1561 = vadd.f32 0.0, %v1560
        %v1562 = vpop.f32.mrb[0].mxu0
        %1563 = vdwg.mxu0
        %1566 = vrot.lane.b32.xlu0 %v1558, 4
        %v1567 = vpop.permute.xlu0 %1566
        %1568 = vrot.lane.b32.xlu0 %v1561, 4
        %v1569 = vpop.permute.xlu0 %1568
        %vm1572 = vcmask 64544
        %1573 = vst.msk [vmem:[#allocation3] sm:$0xff] %vm1572, %v1567
        %1574 = vst.msk [vmem:[#allocation3 + $0x8] sm:$0xff] %vm1572, %v1569
        %1575 = vrot.lane.b32.xlu0 %v1312, 120
        %v1576 = vpop.permute.xlu0 %1575
        %1577 = vrot.lane.b32.xlu0 %v1312, 88
        %v1578 = vpop.permute.xlu0 %1577
        %v1580 = vsel %vm1322, %v1576, 0
        %v1583 = vsel %vm1322, %v1578, 0
        %1585 = vmatprep.subr.bf16.mxu0 0
        %1586 = vmatpush1.bf16.xpose.msra.mxu0 %v1583
        %1587 = vmatprep.subr.bf16.mxu0 0
        %1588 = vmatpush1.bf16.xpose.msra.mxu0 0
        %1589 = vmatprep.subr.bf16.mxu0 0
        %1590 = vmatpush1.bf16.xpose.msra.mxu0 0
        %1591 = vmatprep.subr.bf16.mxu0 0
        %1592 = vmatpush1.bf16.xpose.msra.mxu0 0
        %1593 = vmatprep.subr.bf16.mxu0 0
        %1594 = vmatpush1.bf16.xpose.msra.mxu0 0
        %1595 = vmatprep.subr.bf16.mxu0 0
        %1596 = vmatpush1.bf16.xpose.msra.mxu0 0
        %1597 = vmatprep.subr.bf16.mxu0 0
        %1598 = vmatpush1.bf16.xpose.msra.mxu0 0
        %1599 = vmatprep.subr.bf16.mxu0 0
        %1600 = vmatpush1.bf16.xpose.msra.mxu0 0
        %1601 = vmatprep.subr.bf16.mxu0 0
        %1602 = vmatpush1.bf16.xpose.msra.mxu0 0
        %1603 = vmatprep.subr.bf16.mxu0 0
        %1604 = vmatpush1.bf16.xpose.msra.mxu0 0
        %1605 = vmatprep.subr.bf16.mxu0 0
        %1606 = vmatpush1.bf16.xpose.msra.mxu0 0
        %1607 = vmatprep.subr.bf16.mxu0 0
        %1608 = vmatpush1.bf16.xpose.msra.mxu0 0
        %1609 = vmatprep.subr.bf16.mxu0 0
        %1610 = vmatpush1.bf16.xpose.msra.mxu0 0
        %1611 = vmatprep.subr.bf16.mxu0 0
        %1612 = vmatpush1.bf16.xpose.msra.mxu0 0
        %1613 = vmatprep.subr.bf16.mxu0 0
        %1614 = vmatpush1.bf16.xpose.msra.mxu0 0
        %1615 = vmatprep.subr.bf16.mxu0 0
        %1616 = vmatpush1.bf16.xpose.msra.mxu0 0
        %1617 = vmatprep.mubr.bf16.mxu0 0
        %1618 = vmatmul.mubr.bf16.gmra.mrb[0].mxu0 %v1580
        %v1619 = vpop.f32.mrb[0].mxu0
        %v1620 = vadd.f32 %v1317, %v1619
        %v1621 = vpop.f32.mrb[0].mxu0
        %v1622 = vpop.f32.mrb[0].mxu0
        %v1623 = vadd.f32 %v1317, %v1622
        %v1624 = vpop.f32.mrb[0].mxu0
        %1625 = vdwg.mxu0
        %v1626 = vsel %vm1370, %v1620, -inf
        %1627 = vmax.xlane.f32.xlu0 %v1626
        %v1628 = vpop.xlane.xlu0 %1627
        %v1629 = vsel %vm1370, %v1623, -inf
        %1630 = vmax.xlane.f32.xlu0 %v1629
        %v1631 = vpop.xlane.xlu0 %1630
        %v1632 = vsub.f32 %v1620, %v1628
        %v1633 = vsub.f32 %v1623, %v1631
        %v1634 = vmul.f32 %v1632, 1.442695
        %v1635 = vpow.pop %v1634
        %v1636 = vmul.f32 %v1633, 1.442695
        %v1637 = vpow.pop %v1636
        %v1638 = vsel %vm1370, %v1635, 0.0
        %1639 = vadd.xlane.f32.xlu0 %v1638
        %v1640 = vpop.xlane.xlu0 %1639
        %v1641 = vsel %vm1370, %v1637, 0.0
        %1642 = vadd.xlane.f32.xlu0 %v1641
        %v1643 = vpop.xlane.xlu0 %1642
        %v1644 = vrcp.pop %v1640
        %v1645 = vrcp.pop %v1643
        %v1646 = vmul.f32 %v1635, %v1644
        %v1647 = vmul.f32 %v1637, %v1645
        %v1648 = vpack.c.bf16 %v1647, %v1646
        %1649 = vrot.lane.b32.xlu0 %v1312, 56
        %v1650 = vpop.permute.xlu0 %1649
        %v1653 = vsel %vm1370, %v1648, 0
        %1655 = vmatprep.subr.bf16.mxu0 0
        %1656 = vmatpush1.bf16.msra.mxu0 %v1650
        %1657 = vmatprep.subr.bf16.mxu0 0
        %1658 = vmatpush1.bf16.msra.mxu0 0
        %1659 = vmatprep.subr.bf16.mxu0 0
        %1660 = vmatpush1.bf16.msra.mxu0 0
        %1661 = vmatprep.subr.bf16.mxu0 0
        %1662 = vmatpush1.bf16.msra.mxu0 0
        %1663 = vmatprep.subr.bf16.mxu0 0
        %1664 = vmatpush1.bf16.msra.mxu0 0
        %1665 = vmatprep.subr.bf16.mxu0 0
        %1666 = vmatpush1.bf16.msra.mxu0 0
        %1667 = vmatprep.subr.bf16.mxu0 0
        %1668 = vmatpush1.bf16.msra.mxu0 0
        %1669 = vmatprep.subr.bf16.mxu0 0
        %1670 = vmatpush1.bf16.msra.mxu0 0
        %1671 = vmatprep.subr.bf16.mxu0 0
        %1672 = vmatpush1.bf16.msra.mxu0 0
        %1673 = vmatprep.subr.bf16.mxu0 0
        %1674 = vmatpush1.bf16.msra.mxu0 0
        %1675 = vmatprep.subr.bf16.mxu0 0
        %1676 = vmatpush1.bf16.msra.mxu0 0
        %1677 = vmatprep.subr.bf16.mxu0 0
        %1678 = vmatpush1.bf16.msra.mxu0 0
        %1679 = vmatprep.subr.bf16.mxu0 0
        %1680 = vmatpush1.bf16.msra.mxu0 0
        %1681 = vmatprep.subr.bf16.mxu0 0
        %1682 = vmatpush1.bf16.msra.mxu0 0
        %1683 = vmatprep.subr.bf16.mxu0 0
        %1684 = vmatpush1.bf16.msra.mxu0 0
        %1685 = vmatprep.subr.bf16.mxu0 0
        %1686 = vmatpush1.bf16.msra.mxu0 0
        %1687 = vmatprep.mubr.bf16.mxu0 0
        %1688 = vmatmul.mubr.bf16.gmra.mrb[0].mxu0 %v1653
        %v1689 = vpop.f32.mrb[0].mxu0
        %v1690 = vadd.f32 0.0, %v1689
        %v1691 = vpop.f32.mrb[0].mxu0
        %v1692 = vpop.f32.mrb[0].mxu0
        %v1693 = vadd.f32 0.0, %v1692
        %v1694 = vpop.f32.mrb[0].mxu0
        %1695 = vdwg.mxu0
        %1698 = vrot.lane.b32.xlu0 %v1690, 8
        %v1699 = vpop.permute.xlu0 %1698
        %1700 = vrot.lane.b32.xlu0 %v1693, 8
        %v1701 = vpop.permute.xlu0 %1700
        %vm1704 = vcmask 97344
        %1705 = vst.msk [vmem:[#allocation3] sm:$0xff] %vm1704, %v1699
        %1706 = vst.msk [vmem:[#allocation3 + $0x8] sm:$0xff] %vm1704, %v1701
        %1707 = vrot.lane.b32.xlu0 %v1312, 116
        %v1708 = vpop.permute.xlu0 %1707
        %1709 = vrot.lane.b32.xlu0 %v1312, 84
        %v1710 = vpop.permute.xlu0 %1709
        %v1712 = vsel %vm1322, %v1708, 0
        %v1715 = vsel %vm1322, %v1710, 0
        %1717 = vmatprep.subr.bf16.mxu0 0
        %1718 = vmatpush1.bf16.xpose.msra.mxu0 %v1715
        %1719 = vmatprep.subr.bf16.mxu0 0
        %1720 = vmatpush1.bf16.xpose.msra.mxu0 0
        %1721 = vmatprep.subr.bf16.mxu0 0
        %1722 = vmatpush1.bf16.xpose.msra.mxu0 0
        %1723 = vmatprep.subr.bf16.mxu0 0
        %1724 = vmatpush1.bf16.xpose.msra.mxu0 0
        %1725 = vmatprep.subr.bf16.mxu0 0
        %1726 = vmatpush1.bf16.xpose.msra.mxu0 0
        %1727 = vmatprep.subr.bf16.mxu0 0
        %1728 = vmatpush1.bf16.xpose.msra.mxu0 0
        %1729 = vmatprep.subr.bf16.mxu0 0
        %1730 = vmatpush1.bf16.xpose.msra.mxu0 0
        %1731 = vmatprep.subr.bf16.mxu0 0
        %1732 = vmatpush1.bf16.xpose.msra.mxu0 0
        %1733 = vmatprep.subr.bf16.mxu0 0
        %1734 = vmatpush1.bf16.xpose.msra.mxu0 0
        %1735 = vmatprep.subr.bf16.mxu0 0
        %1736 = vmatpush1.bf16.xpose.msra.mxu0 0
        %1737 = vmatprep.subr.bf16.mxu0 0
        %1738 = vmatpush1.bf16.xpose.msra.mxu0 0
        %1739 = vmatprep.subr.bf16.mxu0 0
        %1740 = vmatpush1.bf16.xpose.msra.mxu0 0
        %1741 = vmatprep.subr.bf16.mxu0 0
        %1742 = vmatpush1.bf16.xpose.msra.mxu0 0
        %1743 = vmatprep.subr.bf16.mxu0 0
        %1744 = vmatpush1.bf16.xpose.msra.mxu0 0
        %1745 = vmatprep.subr.bf16.mxu0 0
        %1746 = vmatpush1.bf16.xpose.msra.mxu0 0
        %1747 = vmatprep.subr.bf16.mxu0 0
        %1748 = vmatpush1.bf16.xpose.msra.mxu0 0
        %1749 = vmatprep.mubr.bf16.mxu0 0
        %1750 = vmatmul.mubr.bf16.gmra.mrb[0].mxu0 %v1712
        %v1751 = vpop.f32.mrb[0].mxu0
        %v1752 = vadd.f32 %v1317, %v1751
        %v1753 = vpop.f32.mrb[0].mxu0
        %v1754 = vpop.f32.mrb[0].mxu0
        %v1755 = vadd.f32 %v1317, %v1754
        %v1756 = vpop.f32.mrb[0].mxu0
        %1757 = vdwg.mxu0
        %v1758 = vsel %vm1370, %v1752, -inf
        %1759 = vmax.xlane.f32.xlu0 %v1758
        %v1760 = vpop.xlane.xlu0 %1759
        %v1761 = vsel %vm1370, %v1755, -inf
        %1762 = vmax.xlane.f32.xlu0 %v1761
        %v1763 = vpop.xlane.xlu0 %1762
        %v1764 = vsub.f32 %v1752, %v1760
        %v1765 = vsub.f32 %v1755, %v1763
        %v1766 = vmul.f32 %v1764, 1.442695
        %v1767 = vpow.pop %v1766
        %v1768 = vmul.f32 %v1765, 1.442695
        %v1769 = vpow.pop %v1768
        %v1770 = vsel %vm1370, %v1767, 0.0
        %1771 = vadd.xlane.f32.xlu0 %v1770
        %v1772 = vpop.xlane.xlu0 %1771
        %v1773 = vsel %vm1370, %v1769, 0.0
        %1774 = vadd.xlane.f32.xlu0 %v1773
        %v1775 = vpop.xlane.xlu0 %1774
        %v1776 = vrcp.pop %v1772
        %v1777 = vrcp.pop %v1775
        %v1778 = vmul.f32 %v1767, %v1776
        %v1779 = vmul.f32 %v1769, %v1777
        %v1780 = vpack.c.bf16 %v1779, %v1778
        %1781 = vrot.lane.b32.xlu0 %v1312, 52
        %v1782 = vpop.permute.xlu0 %1781
        %v1785 = vsel %vm1370, %v1780, 0
        %1787 = vmatprep.subr.bf16.mxu0 0
        %1788 = vmatpush1.bf16.msra.mxu0 %v1782
        %1789 = vmatprep.subr.bf16.mxu0 0
        %1790 = vmatpush1.bf16.msra.mxu0 0
        %1791 = vmatprep.subr.bf16.mxu0 0
        %1792 = vmatpush1.bf16.msra.mxu0 0
        %1793 = vmatprep.subr.bf16.mxu0 0
        %1794 = vmatpush1.bf16.msra.mxu0 0
        %1795 = vmatprep.subr.bf16.mxu0 0
        %1796 = vmatpush1.bf16.msra.mxu0 0
        %1797 = vmatprep.subr.bf16.mxu0 0
        %1798 = vmatpush1.bf16.msra.mxu0 0
        %1799 = vmatprep.subr.bf16.mxu0 0
        %1800 = vmatpush1.bf16.msra.mxu0 0
        %1801 = vmatprep.subr.bf16.mxu0 0
        %1802 = vmatpush1.bf16.msra.mxu0 0
        %1803 = vmatprep.subr.bf16.mxu0 0
        %1804 = vmatpush1.bf16.msra.mxu0 0
        %1805 = vmatprep.subr.bf16.mxu0 0
        %1806 = vmatpush1.bf16.msra.mxu0 0
        %1807 = vmatprep.subr.bf16.mxu0 0
        %1808 = vmatpush1.bf16.msra.mxu0 0
        %1809 = vmatprep.subr.bf16.mxu0 0
        %1810 = vmatpush1.bf16.msra.mxu0 0
        %1811 = vmatprep.subr.bf16.mxu0 0
        %1812 = vmatpush1.bf16.msra.mxu0 0
        %1813 = vmatprep.subr.bf16.mxu0 0
        %1814 = vmatpush1.bf16.msra.mxu0 0
        %1815 = vmatprep.subr.bf16.mxu0 0
        %1816 = vmatpush1.bf16.msra.mxu0 0
        %1817 = vmatprep.subr.bf16.mxu0 0
        %1818 = vmatpush1.bf16.msra.mxu0 0
        %1819 = vmatprep.mubr.bf16.mxu0 0
        %1820 = vmatmul.mubr.bf16.gmra.mrb[0].mxu0 %v1785
        %v1821 = vpop.f32.mrb[0].mxu0
        %v1822 = vadd.f32 0.0, %v1821
        %v1823 = vpop.f32.mrb[0].mxu0
        %v1824 = vpop.f32.mrb[0].mxu0
        %v1825 = vadd.f32 0.0, %v1824
        %v1826 = vpop.f32.mrb[0].mxu0
        %1827 = vdwg.mxu0
        %1830 = vrot.lane.b32.xlu0 %v1822, 12
        %v1831 = vpop.permute.xlu0 %1830
        %1832 = vrot.lane.b32.xlu0 %v1825, 12
        %v1833 = vpop.permute.xlu0 %1832
        %vm1836 = vcmask 130144
        %1837 = vst.msk [vmem:[#allocation3] sm:$0xff] %vm1836, %v1831
        %1838 = vst.msk [vmem:[#allocation3 + $0x8] sm:$0xff] %vm1836, %v1833
        %1839 = vrot.lane.b32.xlu0 %v1312, 112
        %v1840 = vpop.permute.xlu0 %1839
        %1841 = vrot.lane.b32.xlu0 %v1312, 80
        %v1842 = vpop.permute.xlu0 %1841
        %v1844 = vsel %vm1322, %v1840, 0
        %v1847 = vsel %vm1322, %v1842, 0
        %1849 = vmatprep.subr.bf16.mxu0 0
        %1850 = vmatpush1.bf16.xpose.msra.mxu0 %v1847
        %1851 = vmatprep.subr.bf16.mxu0 0
        %1852 = vmatpush1.bf16.xpose.msra.mxu0 0
        %1853 = vmatprep.subr.bf16.mxu0 0
        %1854 = vmatpush1.bf16.xpose.msra.mxu0 0
        %1855 = vmatprep.subr.bf16.mxu0 0
        %1856 = vmatpush1.bf16.xpose.msra.mxu0 0
        %1857 = vmatprep.subr.bf16.mxu0 0
        %1858 = vmatpush1.bf16.xpose.msra.mxu0 0
        %1859 = vmatprep.subr.bf16.mxu0 0
        %1860 = vmatpush1.bf16.xpose.msra.mxu0 0
        %1861 = vmatprep.subr.bf16.mxu0 0
        %1862 = vmatpush1.bf16.xpose.msra.mxu0 0
        %1863 = vmatprep.subr.bf16.mxu0 0
        %1864 = vmatpush1.bf16.xpose.msra.mxu0 0
        %1865 = vmatprep.subr.bf16.mxu0 0
        %1866 = vmatpush1.bf16.xpose.msra.mxu0 0
        %1867 = vmatprep.subr.bf16.mxu0 0
        %1868 = vmatpush1.bf16.xpose.msra.mxu0 0
        %1869 = vmatprep.subr.bf16.mxu0 0
        %1870 = vmatpush1.bf16.xpose.msra.mxu0 0
        %1871 = vmatprep.subr.bf16.mxu0 0
        %1872 = vmatpush1.bf16.xpose.msra.mxu0 0
        %1873 = vmatprep.subr.bf16.mxu0 0
        %1874 = vmatpush1.bf16.xpose.msra.mxu0 0
        %1875 = vmatprep.subr.bf16.mxu0 0
        %1876 = vmatpush1.bf16.xpose.msra.mxu0 0
        %1877 = vmatprep.subr.bf16.mxu0 0
        %1878 = vmatpush1.bf16.xpose.msra.mxu0 0
        %1879 = vmatprep.subr.bf16.mxu0 0
        %1880 = vmatpush1.bf16.xpose.msra.mxu0 0
        %1881 = vmatprep.mubr.bf16.mxu0 0
        %1882 = vmatmul.mubr.bf16.gmra.mrb[0].mxu0 %v1844
        %v1883 = vpop.f32.mrb[0].mxu0
        %v1884 = vadd.f32 %v1317, %v1883
        %v1885 = vpop.f32.mrb[0].mxu0
        %v1886 = vpop.f32.mrb[0].mxu0
        %v1887 = vadd.f32 %v1317, %v1886
        %v1888 = vpop.f32.mrb[0].mxu0
        %1889 = vdwg.mxu0
        %v1890 = vsel %vm1370, %v1884, -inf
        %1891 = vmax.xlane.f32.xlu0 %v1890
        %v1892 = vpop.xlane.xlu0 %1891
        %v1893 = vsel %vm1370, %v1887, -inf
        %1894 = vmax.xlane.f32.xlu0 %v1893
        %v1895 = vpop.xlane.xlu0 %1894
        %v1896 = vsub.f32 %v1884, %v1892
        %v1897 = vsub.f32 %v1887, %v1895
        %v1898 = vmul.f32 %v1896, 1.442695
        %v1899 = vpow.pop %v1898
        %v1900 = vmul.f32 %v1897, 1.442695
        %v1901 = vpow.pop %v1900
        %v1902 = vsel %vm1370, %v1899, 0.0
        %1903 = vadd.xlane.f32.xlu0 %v1902
        %v1904 = vpop.xlane.xlu0 %1903
        %v1905 = vsel %vm1370, %v1901, 0.0
        %1906 = vadd.xlane.f32.xlu0 %v1905
        %v1907 = vpop.xlane.xlu0 %1906
        %v1908 = vrcp.pop %v1904
        %v1909 = vrcp.pop %v1907
        %v1910 = vmul.f32 %v1899, %v1908
        %v1911 = vmul.f32 %v1901, %v1909
        %v1912 = vpack.c.bf16 %v1911, %v1910
        %1913 = vrot.lane.b32.xlu0 %v1312, 48
        %v1914 = vpop.permute.xlu0 %1913
        %v1917 = vsel %vm1370, %v1912, 0
        %1919 = vmatprep.subr.bf16.mxu0 0
        %1920 = vmatpush1.bf16.msra.mxu0 %v1914
        %1921 = vmatprep.subr.bf16.mxu0 0
        %1922 = vmatpush1.bf16.msra.mxu0 0
        %1923 = vmatprep.subr.bf16.mxu0 0
        %1924 = vmatpush1.bf16.msra.mxu0 0
        %1925 = vmatprep.subr.bf16.mxu0 0
        %1926 = vmatpush1.bf16.msra.mxu0 0
        %1927 = vmatprep.subr.bf16.mxu0 0
        %1928 = vmatpush1.bf16.msra.mxu0 0
        %1929 = vmatprep.subr.bf16.mxu0 0
        %1930 = vmatpush1.bf16.msra.mxu0 0
        %1931 = vmatprep.subr.bf16.mxu0 0
        %1932 = vmatpush1.bf16.msra.mxu0 0
        %1933 = vmatprep.subr.bf16.mxu0 0
        %1934 = vmatpush1.bf16.msra.mxu0 0
        %1935 = vmatprep.subr.bf16.mxu0 0
        %1936 = vmatpush1.bf16.msra.mxu0 0
        %1937 = vmatprep.subr.bf16.mxu0 0
        %1938 = vmatpush1.bf16.msra.mxu0 0
        %1939 = vmatprep.subr.bf16.mxu0 0
        %1940 = vmatpush1.bf16.msra.mxu0 0
        %1941 = vmatprep.subr.bf16.mxu0 0
        %1942 = vmatpush1.bf16.msra.mxu0 0
        %1943 = vmatprep.subr.bf16.mxu0 0
        %1944 = vmatpush1.bf16.msra.mxu0 0
        %1945 = vmatprep.subr.bf16.mxu0 0
        %1946 = vmatpush1.bf16.msra.mxu0 0
        %1947 = vmatprep.subr.bf16.mxu0 0
        %1948 = vmatpush1.bf16.msra.mxu0 0
        %1949 = vmatprep.subr.bf16.mxu0 0
        %1950 = vmatpush1.bf16.msra.mxu0 0
        %1951 = vmatprep.mubr.bf16.mxu0 0
        %1952 = vmatmul.mubr.bf16.gmra.mrb[0].mxu0 %v1917
        %v1953 = vpop.f32.mrb[0].mxu0
        %v1954 = vadd.f32 0.0, %v1953
        %v1955 = vpop.f32.mrb[0].mxu0
        %v1956 = vpop.f32.mrb[0].mxu0
        %v1957 = vadd.f32 0.0, %v1956
        %v1958 = vpop.f32.mrb[0].mxu0
        %1959 = vdwg.mxu0
        %1962 = vrot.lane.b32.xlu0 %v1954, 16
        %v1963 = vpop.permute.xlu0 %1962
        %1964 = vrot.lane.b32.xlu0 %v1957, 16
        %v1965 = vpop.permute.xlu0 %1964
        %vm1968 = vcmask 162944
        %1969 = vst.msk [vmem:[#allocation3] sm:$0xff] %vm1968, %v1963
        %1970 = vst.msk [vmem:[#allocation3 + $0x8] sm:$0xff] %vm1968, %v1965
        %1971 = vrot.lane.b32.xlu0 %v1312, 108
        %v1972 = vpop.permute.xlu0 %1971
        %1973 = vrot.lane.b32.xlu0 %v1312, 76
        %v1974 = vpop.permute.xlu0 %1973
        %v1976 = vsel %vm1322, %v1972, 0
        %v1979 = vsel %vm1322, %v1974, 0
        %1981 = vmatprep.subr.bf16.mxu0 0
        %1982 = vmatpush1.bf16.xpose.msra.mxu0 %v1979
        %1983 = vmatprep.subr.bf16.mxu0 0
        %1984 = vmatpush1.bf16.xpose.msra.mxu0 0
        %1985 = vmatprep.subr.bf16.mxu0 0
        %1986 = vmatpush1.bf16.xpose.msra.mxu0 0
        %1987 = vmatprep.subr.bf16.mxu0 0
        %1988 = vmatpush1.bf16.xpose.msra.mxu0 0
        %1989 = vmatprep.subr.bf16.mxu0 0
        %1990 = vmatpush1.bf16.xpose.msra.mxu0 0
        %1991 = vmatprep.subr.bf16.mxu0 0
        %1992 = vmatpush1.bf16.xpose.msra.mxu0 0
        %1993 = vmatprep.subr.bf16.mxu0 0
        %1994 = vmatpush1.bf16.xpose.msra.mxu0 0
        %1995 = vmatprep.subr.bf16.mxu0 0
        %1996 = vmatpush1.bf16.xpose.msra.mxu0 0
        %1997 = vmatprep.subr.bf16.mxu0 0
        %1998 = vmatpush1.bf16.xpose.msra.mxu0 0
        %1999 = vmatprep.subr.bf16.mxu0 0
        %2000 = vmatpush1.bf16.xpose.msra.mxu0 0
        %2001 = vmatprep.subr.bf16.mxu0 0
        %2002 = vmatpush1.bf16.xpose.msra.mxu0 0
        %2003 = vmatprep.subr.bf16.mxu0 0
        %2004 = vmatpush1.bf16.xpose.msra.mxu0 0
        %2005 = vmatprep.subr.bf16.mxu0 0
        %2006 = vmatpush1.bf16.xpose.msra.mxu0 0
        %2007 = vmatprep.subr.bf16.mxu0 0
        %2008 = vmatpush1.bf16.xpose.msra.mxu0 0
        %2009 = vmatprep.subr.bf16.mxu0 0
        %2010 = vmatpush1.bf16.xpose.msra.mxu0 0
        %2011 = vmatprep.subr.bf16.mxu0 0
        %2012 = vmatpush1.bf16.xpose.msra.mxu0 0
        %2013 = vmatprep.mubr.bf16.mxu0 0
        %2014 = vmatmul.mubr.bf16.gmra.mrb[0].mxu0 %v1976
        %v2015 = vpop.f32.mrb[0].mxu0
        %v2016 = vadd.f32 %v1317, %v2015
        %v2017 = vpop.f32.mrb[0].mxu0
        %v2018 = vpop.f32.mrb[0].mxu0
        %v2019 = vadd.f32 %v1317, %v2018
        %v2020 = vpop.f32.mrb[0].mxu0
        %2021 = vdwg.mxu0
        %v2022 = vsel %vm1370, %v2016, -inf
        %2023 = vmax.xlane.f32.xlu0 %v2022
        %v2024 = vpop.xlane.xlu0 %2023
        %v2025 = vsel %vm1370, %v2019, -inf
        %2026 = vmax.xlane.f32.xlu0 %v2025
        %v2027 = vpop.xlane.xlu0 %2026
        %v2028 = vsub.f32 %v2016, %v2024
        %v2029 = vsub.f32 %v2019, %v2027
        %v2030 = vmul.f32 %v2028, 1.442695
        %v2031 = vpow.pop %v2030
        %v2032 = vmul.f32 %v2029, 1.442695
        %v2033 = vpow.pop %v2032
        %v2034 = vsel %vm1370, %v2031, 0.0
        %2035 = vadd.xlane.f32.xlu0 %v2034
        %v2036 = vpop.xlane.xlu0 %2035
        %v2037 = vsel %vm1370, %v2033, 0.0
        %2038 = vadd.xlane.f32.xlu0 %v2037
        %v2039 = vpop.xlane.xlu0 %2038
        %v2040 = vrcp.pop %v2036
        %v2041 = vrcp.pop %v2039
        %v2042 = vmul.f32 %v2031, %v2040
        %v2043 = vmul.f32 %v2033, %v2041
        %v2044 = vpack.c.bf16 %v2043, %v2042
        %2045 = vrot.lane.b32.xlu0 %v1312, 44
        %v2046 = vpop.permute.xlu0 %2045
        %v2049 = vsel %vm1370, %v2044, 0
        %2051 = vmatprep.subr.bf16.mxu0 0
        %2052 = vmatpush1.bf16.msra.mxu0 %v2046
        %2053 = vmatprep.subr.bf16.mxu0 0
        %2054 = vmatpush1.bf16.msra.mxu0 0
        %2055 = vmatprep.subr.bf16.mxu0 0
        %2056 = vmatpush1.bf16.msra.mxu0 0
        %2057 = vmatprep.subr.bf16.mxu0 0
        %2058 = vmatpush1.bf16.msra.mxu0 0
        %2059 = vmatprep.subr.bf16.mxu0 0
        %2060 = vmatpush1.bf16.msra.mxu0 0
        %2061 = vmatprep.subr.bf16.mxu0 0
        %2062 = vmatpush1.bf16.msra.mxu0 0
        %2063 = vmatprep.subr.bf16.mxu0 0
        %2064 = vmatpush1.bf16.msra.mxu0 0
        %2065 = vmatprep.subr.bf16.mxu0 0
        %2066 = vmatpush1.bf16.msra.mxu0 0
        %2067 = vmatprep.subr.bf16.mxu0 0
        %2068 = vmatpush1.bf16.msra.mxu0 0
        %2069 = vmatprep.subr.bf16.mxu0 0
        %2070 = vmatpush1.bf16.msra.mxu0 0
        %2071 = vmatprep.subr.bf16.mxu0 0
        %2072 = vmatpush1.bf16.msra.mxu0 0
        %2073 = vmatprep.subr.bf16.mxu0 0
        %2074 = vmatpush1.bf16.msra.mxu0 0
        %2075 = vmatprep.subr.bf16.mxu0 0
        %2076 = vmatpush1.bf16.msra.mxu0 0
        %2077 = vmatprep.subr.bf16.mxu0 0
        %2078 = vmatpush1.bf16.msra.mxu0 0
        %2079 = vmatprep.subr.bf16.mxu0 0
        %2080 = vmatpush1.bf16.msra.mxu0 0
        %2081 = vmatprep.subr.bf16.mxu0 0
        %2082 = vmatpush1.bf16.msra.mxu0 0
        %2083 = vmatprep.mubr.bf16.mxu0 0
        %2084 = vmatmul.mubr.bf16.gmra.mrb[0].mxu0 %v2049
        %v2085 = vpop.f32.mrb[0].mxu0
        %v2086 = vadd.f32 0.0, %v2085
        %v2087 = vpop.f32.mrb[0].mxu0
        %v2088 = vpop.f32.mrb[0].mxu0
        %v2089 = vadd.f32 0.0, %v2088
        %v2090 = vpop.f32.mrb[0].mxu0
        %2091 = vdwg.mxu0
        %2094 = vrot.lane.b32.xlu0 %v2086, 20
        %v2095 = vpop.permute.xlu0 %2094
        %2096 = vrot.lane.b32.xlu0 %v2089, 20
        %v2097 = vpop.permute.xlu0 %2096
        %vm2100 = vcmask 195744
        %2101 = vst.msk [vmem:[#allocation3] sm:$0xff] %vm2100, %v2095
        %2102 = vst.msk [vmem:[#allocation3 + $0x8] sm:$0xff] %vm2100, %v2097
        %2103 = vrot.lane.b32.xlu0 %v1312, 104
        %v2104 = vpop.permute.xlu0 %2103
        %2105 = vrot.lane.b32.xlu0 %v1312, 72
        %v2106 = vpop.permute.xlu0 %2105
        %v2108 = vsel %vm1322, %v2104, 0
        %v2111 = vsel %vm1322, %v2106, 0
        %2113 = vmatprep.subr.bf16.mxu0 0
        %2114 = vmatpush1.bf16.xpose.msra.mxu0 %v2111
        %2115 = vmatprep.subr.bf16.mxu0 0
        %2116 = vmatpush1.bf16.xpose.msra.mxu0 0
        %2117 = vmatprep.subr.bf16.mxu0 0
        %2118 = vmatpush1.bf16.xpose.msra.mxu0 0
        %2119 = vmatprep.subr.bf16.mxu0 0
        %2120 = vmatpush1.bf16.xpose.msra.mxu0 0
        %2121 = vmatprep.subr.bf16.mxu0 0
        %2122 = vmatpush1.bf16.xpose.msra.mxu0 0
        %2123 = vmatprep.subr.bf16.mxu0 0
        %2124 = vmatpush1.bf16.xpose.msra.mxu0 0
        %2125 = vmatprep.subr.bf16.mxu0 0
        %2126 = vmatpush1.bf16.xpose.msra.mxu0 0
        %2127 = vmatprep.subr.bf16.mxu0 0
        %2128 = vmatpush1.bf16.xpose.msra.mxu0 0
        %2129 = vmatprep.subr.bf16.mxu0 0
        %2130 = vmatpush1.bf16.xpose.msra.mxu0 0
        %2131 = vmatprep.subr.bf16.mxu0 0
        %2132 = vmatpush1.bf16.xpose.msra.mxu0 0
        %2133 = vmatprep.subr.bf16.mxu0 0
        %2134 = vmatpush1.bf16.xpose.msra.mxu0 0
        %2135 = vmatprep.subr.bf16.mxu0 0
        %2136 = vmatpush1.bf16.xpose.msra.mxu0 0
        %2137 = vmatprep.subr.bf16.mxu0 0
        %2138 = vmatpush1.bf16.xpose.msra.mxu0 0
        %2139 = vmatprep.subr.bf16.mxu0 0
        %2140 = vmatpush1.bf16.xpose.msra.mxu0 0
        %2141 = vmatprep.subr.bf16.mxu0 0
        %2142 = vmatpush1.bf16.xpose.msra.mxu0 0
        %2143 = vmatprep.subr.bf16.mxu0 0
        %2144 = vmatpush1.bf16.xpose.msra.mxu0 0
        %2145 = vmatprep.mubr.bf16.mxu0 0
        %2146 = vmatmul.mubr.bf16.gmra.mrb[0].mxu0 %v2108
        %v2147 = vpop.f32.mrb[0].mxu0
        %v2148 = vadd.f32 %v1317, %v2147
        %v2149 = vpop.f32.mrb[0].mxu0
        %v2150 = vpop.f32.mrb[0].mxu0
        %v2151 = vadd.f32 %v1317, %v2150
        %v2152 = vpop.f32.mrb[0].mxu0
        %2153 = vdwg.mxu0
        %v2154 = vsel %vm1370, %v2148, -inf
        %2155 = vmax.xlane.f32.xlu0 %v2154
        %v2156 = vpop.xlane.xlu0 %2155
        %v2157 = vsel %vm1370, %v2151, -inf
        %2158 = vmax.xlane.f32.xlu0 %v2157
        %v2159 = vpop.xlane.xlu0 %2158
        %v2160 = vsub.f32 %v2148, %v2156
        %v2161 = vsub.f32 %v2151, %v2159
        %v2162 = vmul.f32 %v2160, 1.442695
        %v2163 = vpow.pop %v2162
        %v2164 = vmul.f32 %v2161, 1.442695
        %v2165 = vpow.pop %v2164
        %v2166 = vsel %vm1370, %v2163, 0.0
        %2167 = vadd.xlane.f32.xlu0 %v2166
        %v2168 = vpop.xlane.xlu0 %2167
        %v2169 = vsel %vm1370, %v2165, 0.0
        %2170 = vadd.xlane.f32.xlu0 %v2169
        %v2171 = vpop.xlane.xlu0 %2170
        %v2172 = vrcp.pop %v2168
        %v2173 = vrcp.pop %v2171
        %v2174 = vmul.f32 %v2163, %v2172
        %v2175 = vmul.f32 %v2165, %v2173
        %v2176 = vpack.c.bf16 %v2175, %v2174
        %2177 = vrot.lane.b32.xlu0 %v1312, 40
        %v2178 = vpop.permute.xlu0 %2177
        %v2181 = vsel %vm1370, %v2176, 0
        %2183 = vmatprep.subr.bf16.mxu0 0
        %2184 = vmatpush1.bf16.msra.mxu0 %v2178
        %2185 = vmatprep.subr.bf16.mxu0 0
        %2186 = vmatpush1.bf16.msra.mxu0 0
        %2187 = vmatprep.subr.bf16.mxu0 0
        %2188 = vmatpush1.bf16.msra.mxu0 0
        %2189 = vmatprep.subr.bf16.mxu0 0
        %2190 = vmatpush1.bf16.msra.mxu0 0
        %2191 = vmatprep.subr.bf16.mxu0 0
        %2192 = vmatpush1.bf16.msra.mxu0 0
        %2193 = vmatprep.subr.bf16.mxu0 0
        %2194 = vmatpush1.bf16.msra.mxu0 0
        %2195 = vmatprep.subr.bf16.mxu0 0
        %2196 = vmatpush1.bf16.msra.mxu0 0
        %2197 = vmatprep.subr.bf16.mxu0 0
        %2198 = vmatpush1.bf16.msra.mxu0 0
        %2199 = vmatprep.subr.bf16.mxu0 0
        %2200 = vmatpush1.bf16.msra.mxu0 0
        %2201 = vmatprep.subr.bf16.mxu0 0
        %2202 = vmatpush1.bf16.msra.mxu0 0
        %2203 = vmatprep.subr.bf16.mxu0 0
        %2204 = vmatpush1.bf16.msra.mxu0 0
        %2205 = vmatprep.subr.bf16.mxu0 0
        %2206 = vmatpush1.bf16.msra.mxu0 0
        %2207 = vmatprep.subr.bf16.mxu0 0
        %2208 = vmatpush1.bf16.msra.mxu0 0
        %2209 = vmatprep.subr.bf16.mxu0 0
        %2210 = vmatpush1.bf16.msra.mxu0 0
        %2211 = vmatprep.subr.bf16.mxu0 0
        %2212 = vmatpush1.bf16.msra.mxu0 0
        %2213 = vmatprep.subr.bf16.mxu0 0
        %2214 = vmatpush1.bf16.msra.mxu0 0
        %2215 = vmatprep.mubr.bf16.mxu0 0
        %2216 = vmatmul.mubr.bf16.gmra.mrb[0].mxu0 %v2181
        %v2217 = vpop.f32.mrb[0].mxu0
        %v2218 = vadd.f32 0.0, %v2217
        %v2219 = vpop.f32.mrb[0].mxu0
        %v2220 = vpop.f32.mrb[0].mxu0
        %v2221 = vadd.f32 0.0, %v2220
        %v2222 = vpop.f32.mrb[0].mxu0
        %2223 = vdwg.mxu0
        %2226 = vrot.lane.b32.xlu0 %v2218, 24
        %v2227 = vpop.permute.xlu0 %2226
        %2228 = vrot.lane.b32.xlu0 %v2221, 24
        %v2229 = vpop.permute.xlu0 %2228
        %vm2232 = vcmask 228544
        %2233 = vst.msk [vmem:[#allocation3] sm:$0xff] %vm2232, %v2227
        %2234 = vst.msk [vmem:[#allocation3 + $0x8] sm:$0xff] %vm2232, %v2229
        %2235 = vrot.lane.b32.xlu0 %v1312, 100
        %v2236 = vpop.permute.xlu0 %2235
        %2237 = vrot.lane.b32.xlu0 %v1312, 68
        %v2238 = vpop.permute.xlu0 %2237
        %v2240 = vsel %vm1322, %v2236, 0
        %v2243 = vsel %vm1322, %v2238, 0
        %2245 = vmatprep.subr.bf16.mxu0 0
        %2246 = vmatpush1.bf16.xpose.msra.mxu0 %v2243
        %2247 = vmatprep.subr.bf16.mxu0 0
        %2248 = vmatpush1.bf16.xpose.msra.mxu0 0
        %2249 = vmatprep.subr.bf16.mxu0 0
        %2250 = vmatpush1.bf16.xpose.msra.mxu0 0
        %2251 = vmatprep.subr.bf16.mxu0 0
        %2252 = vmatpush1.bf16.xpose.msra.mxu0 0
        %2253 = vmatprep.subr.bf16.mxu0 0
        %2254 = vmatpush1.bf16.xpose.msra.mxu0 0
        %2255 = vmatprep.subr.bf16.mxu0 0
        %2256 = vmatpush1.bf16.xpose.msra.mxu0 0
        %2257 = vmatprep.subr.bf16.mxu0 0
        %2258 = vmatpush1.bf16.xpose.msra.mxu0 0
        %2259 = vmatprep.subr.bf16.mxu0 0
        %2260 = vmatpush1.bf16.xpose.msra.mxu0 0
        %2261 = vmatprep.subr.bf16.mxu0 0
        %2262 = vmatpush1.bf16.xpose.msra.mxu0 0
        %2263 = vmatprep.subr.bf16.mxu0 0
        %2264 = vmatpush1.bf16.xpose.msra.mxu0 0
        %2265 = vmatprep.subr.bf16.mxu0 0
        %2266 = vmatpush1.bf16.xpose.msra.mxu0 0
        %2267 = vmatprep.subr.bf16.mxu0 0
        %2268 = vmatpush1.bf16.xpose.msra.mxu0 0
        %2269 = vmatprep.subr.bf16.mxu0 0
        %2270 = vmatpush1.bf16.xpose.msra.mxu0 0
        %2271 = vmatprep.subr.bf16.mxu0 0
        %2272 = vmatpush1.bf16.xpose.msra.mxu0 0
        %2273 = vmatprep.subr.bf16.mxu0 0
        %2274 = vmatpush1.bf16.xpose.msra.mxu0 0
        %2275 = vmatprep.subr.bf16.mxu0 0
        %2276 = vmatpush1.bf16.xpose.msra.mxu0 0
        %2277 = vmatprep.mubr.bf16.mxu0 0
        %2278 = vmatmul.mubr.bf16.gmra.mrb[0].mxu0 %v2240
        %v2279 = vpop.f32.mrb[0].mxu0
        %v2280 = vadd.f32 %v1317, %v2279
        %v2281 = vpop.f32.mrb[0].mxu0
        %v2282 = vpop.f32.mrb[0].mxu0
        %v2283 = vadd.f32 %v1317, %v2282
        %v2284 = vpop.f32.mrb[0].mxu0
        %2285 = vdwg.mxu0
        %v2286 = vsel %vm1370, %v2280, -inf
        %2287 = vmax.xlane.f32.xlu0 %v2286
        %v2288 = vpop.xlane.xlu0 %2287
        %v2289 = vsel %vm1370, %v2283, -inf
        %2290 = vmax.xlane.f32.xlu0 %v2289
        %v2291 = vpop.xlane.xlu0 %2290
        %v2292 = vsub.f32 %v2280, %v2288
        %v2293 = vsub.f32 %v2283, %v2291
        %v2294 = vmul.f32 %v2292, 1.442695
        %v2295 = vpow.pop %v2294
        %v2296 = vmul.f32 %v2293, 1.442695
        %v2297 = vpow.pop %v2296
        %v2298 = vsel %vm1370, %v2295, 0.0
        %2299 = vadd.xlane.f32.xlu0 %v2298
        %v2300 = vpop.xlane.xlu0 %2299
        %v2301 = vsel %vm1370, %v2297, 0.0
        %2302 = vadd.xlane.f32.xlu0 %v2301
        %v2303 = vpop.xlane.xlu0 %2302
        %v2304 = vrcp.pop %v2300
        %v2305 = vrcp.pop %v2303
        %v2306 = vmul.f32 %v2295, %v2304
        %v2307 = vmul.f32 %v2297, %v2305
        %v2308 = vpack.c.bf16 %v2307, %v2306
        %2309 = vrot.lane.b32.xlu0 %v1312, 36
        %v2310 = vpop.permute.xlu0 %2309
        %v2313 = vsel %vm1370, %v2308, 0
        %2315 = vmatprep.subr.bf16.mxu0 0
        %2316 = vmatpush1.bf16.msra.mxu0 %v2310
        %2317 = vmatprep.subr.bf16.mxu0 0
        %2318 = vmatpush1.bf16.msra.mxu0 0
        %2319 = vmatprep.subr.bf16.mxu0 0
        %2320 = vmatpush1.bf16.msra.mxu0 0
        %2321 = vmatprep.subr.bf16.mxu0 0
        %2322 = vmatpush1.bf16.msra.mxu0 0
        %2323 = vmatprep.subr.bf16.mxu0 0
        %2324 = vmatpush1.bf16.msra.mxu0 0
        %2325 = vmatprep.subr.bf16.mxu0 0
        %2326 = vmatpush1.bf16.msra.mxu0 0
        %2327 = vmatprep.subr.bf16.mxu0 0
        %2328 = vmatpush1.bf16.msra.mxu0 0
        %2329 = vmatprep.subr.bf16.mxu0 0
        %2330 = vmatpush1.bf16.msra.mxu0 0
        %2331 = vmatprep.subr.bf16.mxu0 0
        %2332 = vmatpush1.bf16.msra.mxu0 0
        %2333 = vmatprep.subr.bf16.mxu0 0
        %2334 = vmatpush1.bf16.msra.mxu0 0
        %2335 = vmatprep.subr.bf16.mxu0 0
        %2336 = vmatpush1.bf16.msra.mxu0 0
        %2337 = vmatprep.subr.bf16.mxu0 0
        %2338 = vmatpush1.bf16.msra.mxu0 0
        %2339 = vmatprep.subr.bf16.mxu0 0
        %2340 = vmatpush1.bf16.msra.mxu0 0
        %2341 = vmatprep.subr.bf16.mxu0 0
        %2342 = vmatpush1.bf16.msra.mxu0 0
        %2343 = vmatprep.subr.bf16.mxu0 0
        %2344 = vmatpush1.bf16.msra.mxu0 0
        %2345 = vmatprep.subr.bf16.mxu0 0
        %2346 = vmatpush1.bf16.msra.mxu0 0
        %2347 = vmatprep.mubr.bf16.mxu0 0
        %2348 = vmatmul.mubr.bf16.gmra.mrb[0].mxu0 %v2313
        %v2349 = vpop.f32.mrb[0].mxu0
        %v2350 = vadd.f32 0.0, %v2349
        %v2351 = vpop.f32.mrb[0].mxu0
        %v2352 = vpop.f32.mrb[0].mxu0
        %v2353 = vadd.f32 0.0, %v2352
        %v2354 = vpop.f32.mrb[0].mxu0
        %2355 = vdwg.mxu0
        %2358 = vrot.lane.b32.xlu0 %v2350, 28
        %v2359 = vpop.permute.xlu0 %2358
        %2360 = vrot.lane.b32.xlu0 %v2353, 28
        %v2361 = vpop.permute.xlu0 %2360
        %vm2364 = vcmask 261344
        %2365 = vst.msk [vmem:[#allocation3] sm:$0xff] %vm2364, %v2359
        %2366 = vst.msk [vmem:[#allocation3 + $0x8] sm:$0xff] %vm2364, %v2361
        %v2367 = vld [vmem:[#allocation3] sm:$0xff]
        %v2368 = vld [vmem:[#allocation3 + $0x8] sm:$0xff]
        %v2369 = vpack.c.bf16 %v2368, %v2367
        %v2370 = vld [vmem:[#allocation16] sm:$0xf]
        %v2371 = vld [vmem:[#allocation16 + $0x4] sm:$0xf]
        %v2372 = vld [vmem:[#allocation16 + $0x8] sm:$0xf]
        %v2373 = vld [vmem:[#allocation16 + $0xc] sm:$0xf]
        %v2374 = vld [vmem:[%s13] sm:$0x1]
        %v2376 = vlaneseq
        %v2377 = vshrl.u32 %v2376, 7
        %v2378 = vsub.s32 0, %v2377
        %v2379 = vrot.slane %v2374, %v2378
        %v2385 = vunpack.c.l.b16 %v2370
        %v2386 = vunpack.c.l.b16 %v2371
        %v2387 = vunpack.c.l.b16 %v2372
        %v2388 = vunpack.c.l.b16 %v2373
        %v2389 = vpack.c.b16 %v2386, %v2385
        %v2390 = vpack.c.b16 %v2388, %v2387
        %v2394 = vsel %vm814, %v2369, 0
        %2396 = vmatprep.subr.bf16.mxu0 0
        %2397 = vmatpush1.bf16.msra.mxu0 %v2389
        %2398 = vmatprep.subr.bf16.mxu0 0
        %2399 = vmatpush1.bf16.msra.mxu0 %v2390
        %2400 = vmatprep.subr.bf16.mxu0 0
        %2401 = vmatpush1.bf16.msra.mxu0 0
        %2402 = vmatprep.subr.bf16.mxu0 0
        %2403 = vmatpush1.bf16.msra.mxu0 0
        %2404 = vmatprep.subr.bf16.mxu0 0
        %2405 = vmatpush1.bf16.msra.mxu0 0
        %2406 = vmatprep.subr.bf16.mxu0 0
        %2407 = vmatpush1.bf16.msra.mxu0 0
        %2408 = vmatprep.subr.bf16.mxu0 0
        %2409 = vmatpush1.bf16.msra.mxu0 0
        %2410 = vmatprep.subr.bf16.mxu0 0
        %2411 = vmatpush1.bf16.msra.mxu0 0
        %2412 = vmatprep.subr.bf16.mxu0 0
        %2413 = vmatpush1.bf16.msra.mxu0 0
        %2414 = vmatprep.subr.bf16.mxu0 0
        %2415 = vmatpush1.bf16.msra.mxu0 0
        %2416 = vmatprep.subr.bf16.mxu0 0
        %2417 = vmatpush1.bf16.msra.mxu0 0
        %2418 = vmatprep.subr.bf16.mxu0 0
        %2419 = vmatpush1.bf16.msra.mxu0 0
        %2420 = vmatprep.subr.bf16.mxu0 0
        %2421 = vmatpush1.bf16.msra.mxu0 0
        %2422 = vmatprep.subr.bf16.mxu0 0
        %2423 = vmatpush1.bf16.msra.mxu0 0
        %2424 = vmatprep.subr.bf16.mxu0 0
        %2425 = vmatpush1.bf16.msra.mxu0 0
        %2426 = vmatprep.subr.bf16.mxu0 0
        %2427 = vmatpush1.bf16.msra.mxu0 0
        %2428 = vmatprep.mubr.bf16.mxu0 0
        %2429 = vmatmul.mubr.bf16.gmra.mrb[0].mxu0 %v2394
        %v2430 = vpop.f32.mrb[0].mxu0
        %v2431 = vadd.f32 %v2379, %v2430
        %v2432 = vpop.f32.mrb[0].mxu0
        %v2433 = vpop.f32.mrb[0].mxu0
        %v2434 = vadd.f32 %v2379, %v2433
        %v2435 = vpop.f32.mrb[0].mxu0
        %2436 = vdwg.mxu0
        %v2437 = vadd.f32 %v2431, %v1195
        %v2438 = vadd.f32 %v2434, %v1196
        %v2439 = vld [vmem:[#allocation18] sm:$0x1]
        %v2440 = vld [vmem:[#allocation19] sm:$0x1]
        %v2441 = vsel %vm814, %v2437, 0.0
        %2442 = vadd.xlane.f32.xlu0 %v2441
        %v2443 = vpop.xlane.xlu0 %2442
        %v2444 = vsel %vm814, %v2438, 0.0
        %2445 = vadd.xlane.f32.xlu0 %v2444
        %v2446 = vpop.xlane.xlu0 %2445
        %v2447 = vmul.f32 %v2443, %v821
        %v2448 = vmul.f32 %v2446, %v821
        %v2449 = vsub.f32 %v2437, %v2447
        %v2450 = vsub.f32 %v2438, %v2448
        %v2451 = vmul.f32 %v2449, %v2449
        %v2452 = vmul.f32 %v2450, %v2450
        %v2453 = vsel %vm814, %v2451, 0.0
        %2454 = vadd.xlane.f32.xlu0 %v2453
        %v2455 = vpop.xlane.xlu0 %2454
        %v2456 = vsel %vm814, %v2452, 0.0
        %2457 = vadd.xlane.f32.xlu0 %v2456
        %v2458 = vpop.xlane.xlu0 %2457
        %v2459 = vmul.f32 %v2455, %v821
        %v2460 = vmul.f32 %v2458, %v821
        %v2461 = vadd.f32 %v2459, 1e-05
        %v2462 = vadd.f32 %v2460, 1e-05
        %v2463 = vrsqrt.pop %v2461
        %v2464 = vrsqrt.pop %v2462
        %v2465 = vmul.f32 %v2449, %v2463
        %v2466 = vmul.f32 %v2450, %v2464
        %v2468 = vlaneseq
        %v2469 = vshrl.u32 %v2468, 7
        %v2470 = vsub.s32 0, %v2469
        %v2471 = vrot.slane %v2439, %v2470
        %v2473 = vmul.f32 %v2465, %v2471
        %v2474 = vmul.f32 %v2466, %v2471
        %v2476 = vlaneseq
        %v2477 = vshrl.u32 %v2476, 7
        %v2478 = vsub.s32 0, %v2477
        %v2479 = vrot.slane %v2440, %v2478
        %v2481 = vadd.f32 %v2473, %v2479
        %v2482 = vadd.f32 %v2474, %v2479
        %v2483 = vpack.c.bf16 %v2482, %v2481
        %v2484 = vld [vmem:[%s16] sm:$0xf]
        %v2485 = vld [vmem:[%s16 + $0x4] sm:$0xf]
        %v2486 = vld [vmem:[%s16 + $0x8] sm:$0xf]
        %v2487 = vld [vmem:[%s16 + $0xc] sm:$0xf]
        %v2488 = vld [vmem:[#allocation21] sm:$0x1]
        %v2490 = vlaneseq
        %v2491 = vshrl.u32 %v2490, 7
        %v2492 = vsub.s32 0, %v2491
        %v2493 = vrot.slane %v2488, %v2492
        %v2499 = vunpack.c.l.b16 %v2484
        %v2500 = vunpack.c.l.b16 %v2485
        %v2501 = vunpack.c.l.b16 %v2486
        %v2502 = vunpack.c.l.b16 %v2487
        %v2503 = vpack.c.b16 %v2500, %v2499
        %v2504 = vpack.c.b16 %v2502, %v2501
        %v2508 = vsel %vm814, %v2483, 0
        %2510 = vmatprep.subr.bf16.mxu0 0
        %2511 = vmatpush1.bf16.msra.mxu0 %v2503
        %2512 = vmatprep.subr.bf16.mxu0 0
        %2513 = vmatpush1.bf16.msra.mxu0 %v2504
        %2514 = vmatprep.subr.bf16.mxu0 0
        %2515 = vmatpush1.bf16.msra.mxu0 0
        %2516 = vmatprep.subr.bf16.mxu0 0
        %2517 = vmatpush1.bf16.msra.mxu0 0
        %2518 = vmatprep.subr.bf16.mxu0 0
        %2519 = vmatpush1.bf16.msra.mxu0 0
        %2520 = vmatprep.subr.bf16.mxu0 0
        %2521 = vmatpush1.bf16.msra.mxu0 0
        %2522 = vmatprep.subr.bf16.mxu0 0
        %2523 = vmatpush1.bf16.msra.mxu0 0
        %2524 = vmatprep.subr.bf16.mxu0 0
        %2525 = vmatpush1.bf16.msra.mxu0 0
        %2526 = vmatprep.subr.bf16.mxu0 0
        %2527 = vmatpush1.bf16.msra.mxu0 0
        %2528 = vmatprep.subr.bf16.mxu0 0
        %2529 = vmatpush1.bf16.msra.mxu0 0
        %2530 = vmatprep.subr.bf16.mxu0 0
        %2531 = vmatpush1.bf16.msra.mxu0 0
        %2532 = vmatprep.subr.bf16.mxu0 0
        %2533 = vmatpush1.bf16.msra.mxu0 0
        %2534 = vmatprep.subr.bf16.mxu0 0
        %2535 = vmatpush1.bf16.msra.mxu0 0
        %2536 = vmatprep.subr.bf16.mxu0 0
        %2537 = vmatpush1.bf16.msra.mxu0 0
        %2538 = vmatprep.subr.bf16.mxu0 0
        %2539 = vmatpush1.bf16.msra.mxu0 0
        %2540 = vmatprep.subr.bf16.mxu0 0
        %2541 = vmatpush1.bf16.msra.mxu0 0
        %2542 = vmatprep.mubr.bf16.mxu0 0
        %2543 = vmatmul.mubr.bf16.gmra.mrb[0].mxu0 %v2508
        %v2544 = vpop.f32.mrb[0].mxu0
        %v2545 = vadd.f32 %v2493, %v2544
        %v2546 = vpop.f32.mrb[0].mxu0
        %v2547 = vpop.f32.mrb[0].mxu0
        %v2548 = vadd.f32 %v2493, %v2547
        %v2549 = vpop.f32.mrb[0].mxu0
        %2550 = vdwg.mxu0
        %v2551 = vmax.f32 %v2545, 0.0
        %v2552 = vmax.f32 %v2548, 0.0
        %v2553 = vpack.c.bf16 %v2552, %v2551
        %v2554 = vld [vmem:[%s18] sm:$0xf]
        %v2555 = vld [vmem:[%s18 + $0x4] sm:$0xf]
        %v2556 = vld [vmem:[%s18 + $0x8] sm:$0xf]
        %v2557 = vld [vmem:[%s18 + $0xc] sm:$0xf]
        %v2558 = vld [vmem:[%s19] sm:$0x1]
        %v2560 = vlaneseq
        %v2561 = vshrl.u32 %v2560, 7
        %v2562 = vsub.s32 0, %v2561
        %v2563 = vrot.slane %v2558, %v2562
        %v2569 = vunpack.c.l.b16 %v2554
        %v2570 = vunpack.c.l.b16 %v2555
        %v2571 = vunpack.c.l.b16 %v2556
        %v2572 = vunpack.c.l.b16 %v2557
        %v2573 = vpack.c.b16 %v2570, %v2569
        %v2574 = vpack.c.b16 %v2572, %v2571
        %v2578 = vsel %vm814, %v2553, 0
        %2580 = vmatprep.subr.bf16.mxu0 0
        %2581 = vmatpush1.bf16.msra.mxu0 %v2573
        %2582 = vmatprep.subr.bf16.mxu0 0
        %2583 = vmatpush1.bf16.msra.mxu0 %v2574
        %2584 = vmatprep.subr.bf16.mxu0 0
        %2585 = vmatpush1.bf16.msra.mxu0 0
        %2586 = vmatprep.subr.bf16.mxu0 0
        %2587 = vmatpush1.bf16.msra.mxu0 0
        %2588 = vmatprep.subr.bf16.mxu0 0
        %2589 = vmatpush1.bf16.msra.mxu0 0
        %2590 = vmatprep.subr.bf16.mxu0 0
        %2591 = vmatpush1.bf16.msra.mxu0 0
        %2592 = vmatprep.subr.bf16.mxu0 0
        %2593 = vmatpush1.bf16.msra.mxu0 0
        %2594 = vmatprep.subr.bf16.mxu0 0
        %2595 = vmatpush1.bf16.msra.mxu0 0
        %2596 = vmatprep.subr.bf16.mxu0 0
        %2597 = vmatpush1.bf16.msra.mxu0 0
        %2598 = vmatprep.subr.bf16.mxu0 0
        %2599 = vmatpush1.bf16.msra.mxu0 0
        %2600 = vmatprep.subr.bf16.mxu0 0
        %2601 = vmatpush1.bf16.msra.mxu0 0
        %2602 = vmatprep.subr.bf16.mxu0 0
        %2603 = vmatpush1.bf16.msra.mxu0 0
        %2604 = vmatprep.subr.bf16.mxu0 0
        %2605 = vmatpush1.bf16.msra.mxu0 0
        %2606 = vmatprep.subr.bf16.mxu0 0
        %2607 = vmatpush1.bf16.msra.mxu0 0
        %2608 = vmatprep.subr.bf16.mxu0 0
        %2609 = vmatpush1.bf16.msra.mxu0 0
        %2610 = vmatprep.subr.bf16.mxu0 0
        %2611 = vmatpush1.bf16.msra.mxu0 0
        %2612 = vmatprep.mubr.bf16.mxu0 0
        %2613 = vmatmul.mubr.bf16.gmra.mrb[0].mxu0 %v2578
        %v2614 = vpop.f32.mrb[0].mxu0
        %v2615 = vadd.f32 %v2563, %v2614
        %v2616 = vpop.f32.mrb[0].mxu0
        %v2617 = vpop.f32.mrb[0].mxu0
        %v2618 = vadd.f32 %v2563, %v2617
        %v2619 = vpop.f32.mrb[0].mxu0
        %2620 = vdwg.mxu0
        %v2621 = vadd.f32 %v2615, %v2437
        %v2622 = vadd.f32 %v2618, %v2438
        %2623 = vst.msk [vmem:[%s801] sm:$0xff] %vm814, %v2621
        %2624 = vst.msk [vmem:[%s801 + $0x8] sm:$0xff] %vm814, %v2622
        %s2625 = sand.u32 %s482, 1
        %s2626 = scalar_lea.sflag [#allocation6], %s2625
        %s2627 = sand.u32 %s482, 1
        %s2628 = smul.addr %s2627, 16
        %s2629 = scalar_lea.vmem [#allocation22], %s2628
        // Predicated region
        $region145: #{tpu_custom_call.1} parent=99 // pred_check
          %p2630 = pneg %p492
        $region146: #{tpu_custom_call.1} parent=99 // pred_check_branch
          %2632 = sbr.rel (%p2630) target = $region148
        $region147: #{tpu_custom_call.1} parent=99 // pred_region
          %s2634 = ssub.s32 256, 256
          %2635 = vsyncadd %s2626, %s2634
          %s2636 = smul.addr %s44, 2
          %s2637 = smul.addr %s2636, 128
          %s2638 = scalar_lea.hbm %s20, %s2637
          %s2639 = sshll.u32 %s2629, 4
          %s2640 = int_to_ptr.vmem [resolvable:$true] %s2639
          %2645 = dma.vmem_to_hbm [thread:$0]  %s2640, 256, %s2638, %s2626, 128, 128, 8
        $region148: #{tpu_custom_call.1} parent=99 // pred_fallthru
          _
      $region100: #{tpu_custom_call.1} parent=5 // pred_fallthru
        _
      %p2646 = scmp.le.s32.totalorder 2, %s39
      // Predicated region
      $region149: #{tpu_custom_call.1} parent=5 // pred_check
        %p2647 = pneg %p2646
      $region150: #{tpu_custom_call.1} parent=5 // pred_check_branch
        %2649 = sbr.rel (%p2647) target = $region152
      $region151: #{tpu_custom_call.1} parent=5 // pred_region
        %s2650 = ssub.s32 %s39, 2
        // Predicated region
        $region153: #{tpu_custom_call.1} parent=151 // pred_check
          %p2651 = pneg %p498
        $region154: #{tpu_custom_call.1} parent=151 // pred_check_branch
          %2653 = sbr.rel (%p2651) target = $region156
        $region155: #{tpu_custom_call.1} parent=151 // pred_region
          %s2654 = sand.u32 %s483, 1
          %s2655 = scalar_lea.sflag [#allocation6], %s2654
          %s2656 = sand.u32 %s483, 1
          %s2657 = smul.addr %s2656, 16
          %s2658 = scalar_lea.vmem [#allocation22], %s2657
          %2659 = dma.done %s2655, 256
        $region156: #{tpu_custom_call.1} parent=151 // pred_fallthru
          _
      $region152: #{tpu_custom_call.1} parent=5 // pred_fallthru
        _
    $region6: #{tpu_custom_call.1} parent=1 // loop_footer
      %s43 = sadd.s32 1, %s39
    $region7: #{tpu_custom_call.1} parent=1 // loop_footer_branch
      %38 = sbr.rel target = $region3
    $region8: #{tpu_custom_call.1} parent=1 // loop_exit
      _
    %2660 = vsyncpa [#allocation5], 1
    %s2661 = scalar_lea.sflag [#allocation5], 1
    %2662 = vsyncpa %s2661, 1
    %2663 = vsyncpa [#allocation8], 1
    %s2664 = scalar_lea.sflag [#allocation8], 1
    %2665 = vsyncpa %s2664, 1
    %2666 = vsyncpa [#allocation11], 1
    %2667 = vsyncpa [#allocation14], 1
    %2668 = vsyncpa [#allocation17], 1
    %2669 = vsyncpa [#allocation20], 1
    %2670 = vsyncpa [#allocation6], 1
    %s2671 = scalar_lea.sflag [#allocation6], 1
    %2672 = vsyncpa %s2671, 1

</llo_original>
